<compile_context>
chip_gen: v7x
topology: tpu7x:2x2x1
jax: 0.10.0
libtpu: 0.0.40
codegen_flags: <defaults>
</compile_context>

<pallas_src>
import math

import jax
import jax.numpy as jnp
from jax.experimental import pallas as pl
from jax.experimental.pallas import tpu as pltpu

EPS = 1e-5  # PyTorch LayerNorm default

# Set to jnp.bfloat16 on v6e/v7x to feed the MXU bf16 inputs (accumulation,
# LayerNorm statistics and softmax stay in f32).  Kept f32 here for exact
# parity with the float32 PyTorch reference.
MXU_DTYPE = jnp.float32


# ----------------------------- glue (plain JAX) ------------------------------
def window_partition(x, ws):
    B, H, W, C = x.shape
    x = x.reshape(B, H // ws, ws, W // ws, ws, C)
    return jnp.transpose(x, (0, 1, 3, 2, 4, 5)).reshape(-1, ws, ws, C)


def window_reverse(windows, ws, H, W):
    B = windows.shape[0] // ((H // ws) * (W // ws))
    x = windows.reshape(B, H // ws, W // ws, ws, ws, -1)
    return jnp.transpose(x, (0, 1, 3, 2, 4, 5)).reshape(B, H, W, -1)


def relative_position_index(ws):
    coords = jnp.stack(jnp.meshgrid(jnp.arange(ws), jnp.arange(ws), indexing="ij"))
    cf = coords.reshape(2, -1)
    rel = cf[:, :, None] - cf[:, None, :]
    rel = jnp.transpose(rel, (1, 2, 0))
    return (rel[..., 0] + ws - 1) * (2 * ws - 1) + (rel[..., 1] + ws - 1)  # (N, N)


def rel_bias_from_table(table, idx, N, num_heads):
    bias = table[idx.reshape(-1)].reshape(N, N, num_heads)
    return jnp.transpose(bias, (2, 0, 1))  # (num_heads, N, N)


def _full_spec(shape):
    n = len(shape)
    return pl.BlockSpec(shape, lambda *_, n=n: (0,) * n)


def _pick_window_group(nW, N, target_rows=1024):
    """Largest divisor of nW with wg*N <= target_rows, keeping >=2 grid steps
    when possible so both v7x TensorCores get work."""
    best = 1
    for wg in range(1, nW + 1):
        if nW % wg:
            continue
        if wg * N > target_rows:
            break
        if nW // wg >= 2 or nW == 1:
            best = wg
    return best


# --------------------------- fused block kernel -------------------------------
def make_block_call(nW, N, C, num_heads, hidden, wg, mxu_dtype=MXU_DTYPE):
    """One MixMIMBlock (LN1 + window attention + proj + residual + LN2 + MLP +
    residual) fused into a single pallas_call.  Each grid step processes `wg`
    windows (wg*N token rows).  Dropout / drop_path are p=0 -> identity."""
    HD = C // num_heads
    scale = HD ** -0.5
    R = wg * N  # token rows per grid step
    inv_sqrt2 = 1.0 / math.sqrt(2.0)

    def kernel(x_ref, bias_ref, g1_ref, b1_ref, qkvw_ref, qkvb_ref,
               pw_ref, pb_ref, g2_ref, b2_ref, w1_ref, fb1_ref,
               w2_ref, fb2_ref, o_ref):
        x = x_ref[...].astype(jnp.float32)                          # (R, C)

        # ---------------- LayerNorm 1 (f32 stats) ----------------
        mu = jnp.mean(x, axis=-1, keepdims=True)
        var = jnp.mean((x - mu) ** 2, axis=-1, keepdims=True)
        xn = (x - mu) * jax.lax.rsqrt(var + EPS) * g1_ref[...] + b1_ref[...]

        # ---------------- QKV: one (R, C) @ (C, 3C) matmul ----------------
        qkv = jnp.dot(xn.astype(mxu_dtype), qkvw_ref[...].astype(mxu_dtype),
                      preferred_element_type=jnp.float32) + qkvb_ref[...]

        # ---------- window attention: heads accumulated into proj ----------
        proj_acc = jnp.zeros((R, C), jnp.float32)
        for h in range(num_heads):                                  # static unroll
            q = (qkv[:, h * HD:(h + 1) * HD] * scale).reshape(wg, N, HD)
            k = qkv[:, C + h * HD:C + (h + 1) * HD].reshape(wg, N, HD)
            v = qkv[:, 2 * C + h * HD:2 * C + (h + 1) * HD].reshape(wg, N, HD)
            # batched over windows, contraction on natural last dim (no k.T)
            s = jnp.einsum("wnd,wmd->wnm", q.astype(mxu_dtype), k.astype(mxu_dtype),
                           preferred_element_type=jnp.float32)      # (wg, N, N)
            s = s + bias_ref[h][None]
            s = s - jnp.max(s, axis=-1, keepdims=True)
            e = jnp.exp(s)
            p = e * pl.reciprocal(jnp.sum(e, axis=-1, keepdims=True), approx=True)
            o_h = jnp.einsum("wnm,wmd->wnd", p.astype(mxu_dtype), v.astype(mxu_dtype),
                             preferred_element_type=jnp.float32)    # (wg, N, HD)
            # accumulate this head's slice of the projection (no concatenate)
            proj_acc = proj_acc + jnp.dot(
                o_h.reshape(R, HD).astype(mxu_dtype),
                pw_ref[h * HD:(h + 1) * HD, :].astype(mxu_dtype),
                preferred_element_type=jnp.float32)
        x1 = x + proj_acc + pb_ref[...]                             # residual 1

        # ---------------- LayerNorm 2 + MLP + residual ----------------
        mu2 = jnp.mean(x1, axis=-1, keepdims=True)
        var2 = jnp.mean((x1 - mu2) ** 2, axis=-1, keepdims=True)
        xn2 = (x1 - mu2) * jax.lax.rsqrt(var2 + EPS) * g2_ref[...] + b2_ref[...]
        hdn = jnp.dot(xn2.astype(mxu_dtype), w1_ref[...].astype(mxu_dtype),
                      preferred_element_type=jnp.float32) + fb1_ref[...]
        hdn = 0.5 * hdn * (1.0 + jax.lax.erf(hdn * inv_sqrt2))      # exact GELU
        y = jnp.dot(hdn.astype(mxu_dtype), w2_ref[...].astype(mxu_dtype),
                    preferred_element_type=jnp.float32) + fb2_ref[...]
        # NOTE: at toy C=32 the output store is <128 lanes (masked vst);
        # production C (>=128) makes these stores lane-dense.
        o_ref[...] = (x1 + y).astype(o_ref.dtype)                   # residual 2

    grid_spec = pl.GridSpec(
        grid=(nW // wg,),
        in_specs=[
            pl.BlockSpec((R, C), lambda i: (i, 0)),                 # token rows
            _full_spec((num_heads, N, N)),                          # rel-pos bias
            _full_spec((1, C)), _full_spec((1, C)),                 # LN1 gamma/beta
            _full_spec((C, 3 * C)), _full_spec((1, 3 * C)),         # qkv W/b
            _full_spec((C, C)), _full_spec((1, C)),                 # proj W/b
            _full_spec((1, C)), _full_spec((1, C)),                 # LN2 gamma/beta
            _full_spec((C, hidden)), _full_spec((1, hidden)),       # fc1 W/b
            _full_spec((hidden, C)), _full_spec((1, C)),            # fc2 W/b
        ],
        out_specs=pl.BlockSpec((R, C), lambda i: (i, 0)),
    )
    # TODO(synk): for production dims (C>=512) on v7x (64 MiB VMEM), K-tile the
    # fc1/fc2 weights over a reduction grid axis instead of keeping them fully
    # resident, and set vmem_limit_bytes explicitly.
    return pl.pallas_call(
        kernel,
        grid_spec=grid_spec,
        out_shape=jax.ShapeDtypeStruct((nW * N, C), jnp.float32),
        compiler_params=pltpu.CompilerParams(dimension_semantics=("parallel",)),
    )


# ----------------------------- parameters ------------------------------------
def init_block_params(key, dim, num_heads, ws, mlp_ratio):
    hidden = int(dim * mlp_ratio)
    ks = jax.random.split(key, 5)
    # note: weights stored as (in, out); equivalent to PyTorch's x @ W.T
    return dict(
        g1=jnp.ones((1, dim), jnp.float32), b1=jnp.zeros((1, dim), jnp.float32),
        qkv_w=0.02 * jax.random.normal(ks[0], (dim, 3 * dim), jnp.float32),
        qkv_b=jnp.zeros((1, 3 * dim), jnp.float32),
        proj_w=0.02 * jax.random.normal(ks[1], (dim, dim), jnp.float32),
        proj_b=jnp.zeros((1, dim), jnp.float32),
        rpbt=0.02 * jax.random.normal(
            ks[2], ((2 * ws - 1) * (2 * ws - 1), num_heads), jnp.float32),
        g2=jnp.ones((1, dim), jnp.float32), b2=jnp.zeros((1, dim), jnp.float32),
        w1=0.02 * jax.random.normal(ks[3], (dim, hidden), jnp.float32),
        bb1=jnp.zeros((1, hidden), jnp.float32),
        w2=0.02 * jax.random.normal(ks[4], (hidden, dim), jnp.float32),
        bb2=jnp.zeros((1, dim), jnp.float32),
    )


# ----------------------------- layer forward ---------------------------------
def mixmim_layer_forward(x, block_params, input_resolution, window_size, num_heads,
                         mxu_dtype=MXU_DTYPE):
    B, L, C = x.shape
    H, W = input_resolution
    ws = min(window_size, min(input_resolution))  # MixMIMBlock clamp
    N = ws * ws
    nW = B * (H // ws) * (W // ws)
    hidden = block_params[0]["w1"].shape[1]
    wg = _pick_window_group(nW, N)

    block_call = make_block_call(nW, N, C, num_heads, hidden, wg, mxu_dtype)
    idx = relative_position_index(ws)

    # Window partition is a per-batch token permutation; it commutes with every
    # per-token op (LN / MLP / residual) and attention is window-local, so we
    # partition once, run ALL blocks in window layout, and reverse once.
    xw = window_partition(x.reshape(B, H, W, C), ws).reshape(nW * N, C)
    for p in block_params:
        bias = rel_bias_from_table(p["rpbt"], idx, N, num_heads)
        xw = block_call(xw, bias, p["g1"], p["b1"], p["qkv_w"], p["qkv_b"],
                        p["proj_w"], p["proj_b"], p["g2"], p["b2"],
                        p["w1"], p["bb1"], p["w2"], p["bb2"])
    x = window_reverse(xw.reshape(nW, ws, ws, C), ws, H, W).reshape(B, H * W, C)
    # downsample=None in this configuration.
    # TODO(synk): use_checkpoint / dropout / drop_path are training-only no-ops here.
    return x


# --------------------------------- main ---------------------------------------
if __name__ == "__main__":
    key = jax.random.PRNGKey(0)
    B, dim, res, window_size, num_heads, depth, mlp_ratio = 2, 32, 8, 4, 2, 2, 4.0
    L = res * res

    key, xk = jax.random.split(key)
    x = jax.random.normal(xk, (B, L, dim), jnp.float32)

    block_params = []
    for _ in range(depth):
        key, bk = jax.random.split(key)
        block_params.append(init_block_params(bk, dim, num_heads, window_size, mlp_ratio))

    out = mixmim_layer_forward(x, block_params, (res, res), window_size, num_heads)
    jax.block_until_ready(out)
    assert out.shape == (B, L, dim)
    print("KERNEL_OK")
</pallas_src>

<mosaic_0001>
module attributes {stable_mosaic.version = 11 : i64} {
  func.func @kernel(%arg0: i32, %arg1: memref<64x32xf32, #tpu.memory_space<vmem>>, %arg2: memref<2x16x16xf32, #tpu.memory_space<vmem>>, %arg3: memref<1x32xf32, #tpu.memory_space<vmem>>, %arg4: memref<1x32xf32, #tpu.memory_space<vmem>>, %arg5: memref<32x96xf32, #tpu.memory_space<vmem>>, %arg6: memref<1x96xf32, #tpu.memory_space<vmem>>, %arg7: memref<32x32xf32, #tpu.memory_space<vmem>>, %arg8: memref<1x32xf32, #tpu.memory_space<vmem>>, %arg9: memref<1x32xf32, #tpu.memory_space<vmem>>, %arg10: memref<1x32xf32, #tpu.memory_space<vmem>>, %arg11: memref<32x128xf32, #tpu.memory_space<vmem>>, %arg12: memref<1x128xf32, #tpu.memory_space<vmem>>, %arg13: memref<128x32xf32, #tpu.memory_space<vmem>>, %arg14: memref<1x32xf32, #tpu.memory_space<vmem>>, %arg15: memref<64x32xf32, #tpu.memory_space<vmem>>) attributes {dimension_semantics = [#tpu.dimension_semantics<parallel>], iteration_bounds = array<i64: 2>, scalar_prefetch = 0 : i64, scratch_operands = 0 : i64, tpu.core_type = #tpu.core_type<tc>, window_params = [{transform_indices = @transform_0, window_bounds = array<i64: 64, 32>}, {pipeline_mode = #tpu.pipeline_mode<synchronous>, transform_indices = @transform_1, window_bounds = array<i64: 2, 16, 16>}, {pipeline_mode = #tpu.pipeline_mode<synchronous>, transform_indices = @transform_2, window_bounds = array<i64: 1, 32>}, {pipeline_mode = #tpu.pipeline_mode<synchronous>, transform_indices = @transform_3, window_bounds = array<i64: 1, 32>}, {pipeline_mode = #tpu.pipeline_mode<synchronous>, transform_indices = @transform_4, window_bounds = array<i64: 32, 96>}, {pipeline_mode = #tpu.pipeline_mode<synchronous>, transform_indices = @transform_5, window_bounds = array<i64: 1, 96>}, {pipeline_mode = #tpu.pipeline_mode<synchronous>, transform_indices = @transform_6, window_bounds = array<i64: 32, 32>}, {pipeline_mode = #tpu.pipeline_mode<synchronous>, transform_indices = @transform_7, window_bounds = array<i64: 1, 32>}, {pipeline_mode = #tpu.pipeline_mode<synchronous>, transform_indices = @transform_8, window_bounds = array<i64: 1, 32>}, {pipeline_mode = #tpu.pipeline_mode<synchronous>, transform_indices = @transform_9, window_bounds = array<i64: 1, 32>}, {pipeline_mode = #tpu.pipeline_mode<synchronous>, transform_indices = @transform_10, window_bounds = array<i64: 32, 128>}, {pipeline_mode = #tpu.pipeline_mode<synchronous>, transform_indices = @transform_11, window_bounds = array<i64: 1, 128>}, {pipeline_mode = #tpu.pipeline_mode<synchronous>, transform_indices = @transform_12, window_bounds = array<i64: 128, 32>}, {pipeline_mode = #tpu.pipeline_mode<synchronous>, transform_indices = @transform_13, window_bounds = array<i64: 1, 32>}, {transform_indices = @transform_14, window_bounds = array<i64: 64, 32>}]} {
    %c0 = arith.constant 0 : index
    %c0_0 = arith.constant 0 : index
    %0 = vector.load %arg1[%c0, %c0_0] : memref<64x32xf32, #tpu.memory_space<vmem>>, vector<64x32xf32>
    %cst = arith.constant dense<0.000000e+00> : vector<64xf32>
    %1 = vector.multi_reduction <add>, %0, %cst [1] : vector<64x32xf32> to vector<64xf32>
    %2 = vector.shape_cast %1 : vector<64xf32> to vector<64x1xf32>
    %cst_1 = arith.constant 3.200000e+01 : f32
    %3 = vector.broadcast %cst_1 : f32 to vector<64x1xf32>
    %4 = arith.divf %2, %3 : vector<64x1xf32>
    %5 = vector.broadcast %4 : vector<64x1xf32> to vector<64x32xf32>
    %6 = arith.subf %0, %5 : vector<64x32xf32>
    %7 = arith.mulf %6, %6 : vector<64x32xf32>
    %cst_2 = arith.constant dense<0.000000e+00> : vector<64xf32>
    %8 = vector.multi_reduction <add>, %7, %cst_2 [1] : vector<64x32xf32> to vector<64xf32>
    %9 = vector.shape_cast %8 : vector<64xf32> to vector<64x1xf32>
    %cst_3 = arith.constant 3.200000e+01 : f32
    %10 = vector.broadcast %cst_3 : f32 to vector<64x1xf32>
    %11 = arith.divf %9, %10 : vector<64x1xf32>
    %12 = vector.broadcast %4 : vector<64x1xf32> to vector<64x32xf32>
    %13 = arith.subf %0, %12 : vector<64x32xf32>
    %cst_4 = arith.constant 9.99999974E-6 : f32
    %14 = vector.broadcast %cst_4 : f32 to vector<64x1xf32>
    %15 = arith.addf %11, %14 : vector<64x1xf32>
    %16 = math.rsqrt %15 : vector<64x1xf32>
    %17 = vector.broadcast %16 : vector<64x1xf32> to vector<64x32xf32>
    %18 = arith.mulf %13, %17 : vector<64x32xf32>
    %c0_5 = arith.constant 0 : index
    %c0_6 = arith.constant 0 : index
    %19 = vector.load %arg3[%c0_5, %c0_6] : memref<1x32xf32, #tpu.memory_space<vmem>>, vector<1x32xf32>
    %20 = vector.broadcast %19 : vector<1x32xf32> to vector<64x32xf32>
    %21 = arith.mulf %18, %20 : vector<64x32xf32>
    %c0_7 = arith.constant 0 : index
    %c0_8 = arith.constant 0 : index
    %22 = vector.load %arg4[%c0_7, %c0_8] : memref<1x32xf32, #tpu.memory_space<vmem>>, vector<1x32xf32>
    %23 = vector.broadcast %22 : vector<1x32xf32> to vector<64x32xf32>
    %24 = arith.addf %21, %23 : vector<64x32xf32>
    %c0_9 = arith.constant 0 : index
    %c0_10 = arith.constant 0 : index
    %25 = vector.load %arg5[%c0_9, %c0_10] : memref<32x96xf32, #tpu.memory_space<vmem>>, vector<32x96xf32>
    %cst_11 = arith.constant dense<0.000000e+00> : vector<64x96xf32>
    %26 = tpu.matmul %24, %25, %cst_11 {dimension_numbers = #tpu.dot_dimension_numbers<[1], [0], [0], [1], [0, 0, 1, 1], [], []>} : vector<64x32xf32>, vector<32x96xf32>, vector<64x96xf32> -> vector<64x96xf32>
    %c0_12 = arith.constant 0 : index
    %c0_13 = arith.constant 0 : index
    %27 = vector.load %arg6[%c0_12, %c0_13] : memref<1x96xf32, #tpu.memory_space<vmem>>, vector<1x96xf32>
    %28 = vector.broadcast %27 : vector<1x96xf32> to vector<64x96xf32>
    %29 = arith.addf %26, %28 : vector<64x96xf32>
    %cst_14 = arith.constant 0.000000e+00 : f32
    %30 = vector.broadcast %cst_14 : f32 to vector<64x32xf32>
    %31 = vector.extract_strided_slice %29 {offsets = [0, 0], sizes = [64, 16], strides = [1, 1]} : vector<64x96xf32> to vector<64x16xf32>
    %cst_15 = arith.constant 2.500000e-01 : f32
    %32 = vector.broadcast %cst_15 : f32 to vector<64x16xf32>
    %33 = arith.mulf %31, %32 : vector<64x16xf32>
    %34 = vector.shape_cast %33 : vector<64x16xf32> to vector<4x16x16xf32>
    %35 = vector.extract_strided_slice %29 {offsets = [0, 32], sizes = [64, 16], strides = [1, 1]} : vector<64x96xf32> to vector<64x16xf32>
    %36 = vector.shape_cast %35 : vector<64x16xf32> to vector<4x16x16xf32>
    %37 = vector.extract_strided_slice %29 {offsets = [0, 64], sizes = [64, 16], strides = [1, 1]} : vector<64x96xf32> to vector<64x16xf32>
    %38 = vector.shape_cast %37 : vector<64x16xf32> to vector<4x16x16xf32>
    "tpu.trace_start"() <{level = 10 : i32, message = "wnd,wmd->wnm"}> : () -> ()
    %cst_16 = arith.constant dense<0.000000e+00> : vector<4x16x16xf32>
    %39 = tpu.matmul %34, %36, %cst_16 {dimension_numbers = #tpu.dot_dimension_numbers<[2], [2], [1], [1], [0, 0, 0, 1, 1, 1], [0], [0]>} : vector<4x16x16xf32>, vector<4x16x16xf32>, vector<4x16x16xf32> -> vector<4x16x16xf32>
    "tpu.trace_stop"() : () -> ()
    %c0_17 = arith.constant 0 : index
    %c0_18 = arith.constant 0 : index
    %c0_19 = arith.constant 0 : index
    %40 = vector.load %arg2[%c0_17, %c0_18, %c0_19] : memref<2x16x16xf32, #tpu.memory_space<vmem>>, vector<1x16x16xf32>
    %41 = vector.shape_cast %40 : vector<1x16x16xf32> to vector<16x16xf32>
    %42 = vector.shape_cast %41 : vector<16x16xf32> to vector<1x16x16xf32>
    %43 = vector.broadcast %42 : vector<1x16x16xf32> to vector<4x16x16xf32>
    %44 = arith.addf %39, %43 : vector<4x16x16xf32>
    %cst_20 = arith.constant dense<0xFF800000> : vector<4x16xf32>
    %45 = vector.multi_reduction <maximumf>, %44, %cst_20 [2] : vector<4x16x16xf32> to vector<4x16xf32>
    %46 = vector.shape_cast %45 : vector<4x16xf32> to vector<4x16x1xf32>
    %47 = vector.broadcast %46 : vector<4x16x1xf32> to vector<4x16x16xf32>
    %48 = arith.subf %44, %47 : vector<4x16x16xf32>
    %49 = math.exp %48 : vector<4x16x16xf32>
    %cst_21 = arith.constant dense<0.000000e+00> : vector<4x16xf32>
    %50 = vector.multi_reduction <add>, %49, %cst_21 [2] : vector<4x16x16xf32> to vector<4x16xf32>
    %51 = vector.shape_cast %50 : vector<4x16xf32> to vector<4x16x1xf32>
    %52 = tpu.reciprocal %51 {approx = true} : vector<4x16x1xf32> -> vector<4x16x1xf32>
    %53 = vector.broadcast %52 : vector<4x16x1xf32> to vector<4x16x16xf32>
    %54 = arith.mulf %49, %53 : vector<4x16x16xf32>
    "tpu.trace_start"() <{level = 10 : i32, message = "wnm,wmd->wnd"}> : () -> ()
    %cst_22 = arith.constant dense<0.000000e+00> : vector<4x16x16xf32>
    %55 = tpu.matmul %54, %38, %cst_22 {dimension_numbers = #tpu.dot_dimension_numbers<[2], [1], [1], [2], [0, 0, 0, 1, 1, 2], [0], [0]>} : vector<4x16x16xf32>, vector<4x16x16xf32>, vector<4x16x16xf32> -> vector<4x16x16xf32>
    "tpu.trace_stop"() : () -> ()
    %56 = vector.shape_cast %55 : vector<4x16x16xf32> to vector<64x16xf32>
    %c0_23 = arith.constant 0 : index
    %c0_24 = arith.constant 0 : index
    %57 = vector.load %arg7[%c0_23, %c0_24] : memref<32x32xf32, #tpu.memory_space<vmem>>, vector<16x32xf32>
    %cst_25 = arith.constant dense<0.000000e+00> : vector<64x32xf32>
    %58 = tpu.matmul %56, %57, %cst_25 {dimension_numbers = #tpu.dot_dimension_numbers<[1], [0], [0], [1], [0, 0, 1, 1], [], []>} : vector<64x16xf32>, vector<16x32xf32>, vector<64x32xf32> -> vector<64x32xf32>
    %59 = arith.addf %30, %58 : vector<64x32xf32>
    %60 = vector.extract_strided_slice %29 {offsets = [0, 16], sizes = [64, 16], strides = [1, 1]} : vector<64x96xf32> to vector<64x16xf32>
    %cst_26 = arith.constant 2.500000e-01 : f32
    %61 = vector.broadcast %cst_26 : f32 to vector<64x16xf32>
    %62 = arith.mulf %60, %61 : vector<64x16xf32>
    %63 = vector.shape_cast %62 : vector<64x16xf32> to vector<4x16x16xf32>
    %64 = vector.extract_strided_slice %29 {offsets = [0, 48], sizes = [64, 16], strides = [1, 1]} : vector<64x96xf32> to vector<64x16xf32>
    %65 = vector.shape_cast %64 : vector<64x16xf32> to vector<4x16x16xf32>
    %66 = vector.extract_strided_slice %29 {offsets = [0, 80], sizes = [64, 16], strides = [1, 1]} : vector<64x96xf32> to vector<64x16xf32>
    %67 = vector.shape_cast %66 : vector<64x16xf32> to vector<4x16x16xf32>
    "tpu.trace_start"() <{level = 10 : i32, message = "wnd,wmd->wnm"}> : () -> ()
    %cst_27 = arith.constant dense<0.000000e+00> : vector<4x16x16xf32>
    %68 = tpu.matmul %63, %65, %cst_27 {dimension_numbers = #tpu.dot_dimension_numbers<[2], [2], [1], [1], [0, 0, 0, 1, 1, 1], [0], [0]>} : vector<4x16x16xf32>, vector<4x16x16xf32>, vector<4x16x16xf32> -> vector<4x16x16xf32>
    "tpu.trace_stop"() : () -> ()
    %c1 = arith.constant 1 : index
    %c0_28 = arith.constant 0 : index
    %c0_29 = arith.constant 0 : index
    %69 = vector.load %arg2[%c1, %c0_28, %c0_29] : memref<2x16x16xf32, #tpu.memory_space<vmem>>, vector<1x16x16xf32>
    %70 = vector.shape_cast %69 : vector<1x16x16xf32> to vector<16x16xf32>
    %71 = vector.shape_cast %70 : vector<16x16xf32> to vector<1x16x16xf32>
    %72 = vector.broadcast %71 : vector<1x16x16xf32> to vector<4x16x16xf32>
    %73 = arith.addf %68, %72 : vector<4x16x16xf32>
    %cst_30 = arith.constant dense<0xFF800000> : vector<4x16xf32>
    %74 = vector.multi_reduction <maximumf>, %73, %cst_30 [2] : vector<4x16x16xf32> to vector<4x16xf32>
    %75 = vector.shape_cast %74 : vector<4x16xf32> to vector<4x16x1xf32>
    %76 = vector.broadcast %75 : vector<4x16x1xf32> to vector<4x16x16xf32>
    %77 = arith.subf %73, %76 : vector<4x16x16xf32>
    %78 = math.exp %77 : vector<4x16x16xf32>
    %cst_31 = arith.constant dense<0.000000e+00> : vector<4x16xf32>
    %79 = vector.multi_reduction <add>, %78, %cst_31 [2] : vector<4x16x16xf32> to vector<4x16xf32>
    %80 = vector.shape_cast %79 : vector<4x16xf32> to vector<4x16x1xf32>
    %81 = tpu.reciprocal %80 {approx = true} : vector<4x16x1xf32> -> vector<4x16x1xf32>
    %82 = vector.broadcast %81 : vector<4x16x1xf32> to vector<4x16x16xf32>
    %83 = arith.mulf %78, %82 : vector<4x16x16xf32>
    "tpu.trace_start"() <{level = 10 : i32, message = "wnm,wmd->wnd"}> : () -> ()
    %cst_32 = arith.constant dense<0.000000e+00> : vector<4x16x16xf32>
    %84 = tpu.matmul %83, %67, %cst_32 {dimension_numbers = #tpu.dot_dimension_numbers<[2], [1], [1], [2], [0, 0, 0, 1, 1, 2], [0], [0]>} : vector<4x16x16xf32>, vector<4x16x16xf32>, vector<4x16x16xf32> -> vector<4x16x16xf32>
    "tpu.trace_stop"() : () -> ()
    %85 = vector.shape_cast %84 : vector<4x16x16xf32> to vector<64x16xf32>
    %c16 = arith.constant 16 : index
    %c0_33 = arith.constant 0 : index
    %86 = vector.load %arg7[%c16, %c0_33] : memref<32x32xf32, #tpu.memory_space<vmem>>, vector<16x32xf32>
    %cst_34 = arith.constant dense<0.000000e+00> : vector<64x32xf32>
    %87 = tpu.matmul %85, %86, %cst_34 {dimension_numbers = #tpu.dot_dimension_numbers<[1], [0], [0], [1], [0, 0, 1, 1], [], []>} : vector<64x16xf32>, vector<16x32xf32>, vector<64x32xf32> -> vector<64x32xf32>
    %88 = arith.addf %59, %87 : vector<64x32xf32>
    %89 = arith.addf %0, %88 : vector<64x32xf32>
    %c0_35 = arith.constant 0 : index
    %c0_36 = arith.constant 0 : index
    %90 = vector.load %arg8[%c0_35, %c0_36] : memref<1x32xf32, #tpu.memory_space<vmem>>, vector<1x32xf32>
    %91 = vector.broadcast %90 : vector<1x32xf32> to vector<64x32xf32>
    %92 = arith.addf %89, %91 : vector<64x32xf32>
    %cst_37 = arith.constant dense<0.000000e+00> : vector<64xf32>
    %93 = vector.multi_reduction <add>, %92, %cst_37 [1] : vector<64x32xf32> to vector<64xf32>
    %94 = vector.shape_cast %93 : vector<64xf32> to vector<64x1xf32>
    %cst_38 = arith.constant 3.200000e+01 : f32
    %95 = vector.broadcast %cst_38 : f32 to vector<64x1xf32>
    %96 = arith.divf %94, %95 : vector<64x1xf32>
    %97 = vector.broadcast %96 : vector<64x1xf32> to vector<64x32xf32>
    %98 = arith.subf %92, %97 : vector<64x32xf32>
    %99 = arith.mulf %98, %98 : vector<64x32xf32>
    %cst_39 = arith.constant dense<0.000000e+00> : vector<64xf32>
    %100 = vector.multi_reduction <add>, %99, %cst_39 [1] : vector<64x32xf32> to vector<64xf32>
    %101 = vector.shape_cast %100 : vector<64xf32> to vector<64x1xf32>
    %cst_40 = arith.constant 3.200000e+01 : f32
    %102 = vector.broadcast %cst_40 : f32 to vector<64x1xf32>
    %103 = arith.divf %101, %102 : vector<64x1xf32>
    %104 = vector.broadcast %96 : vector<64x1xf32> to vector<64x32xf32>
    %105 = arith.subf %92, %104 : vector<64x32xf32>
    %cst_41 = arith.constant 9.99999974E-6 : f32
    %106 = vector.broadcast %cst_41 : f32 to vector<64x1xf32>
    %107 = arith.addf %103, %106 : vector<64x1xf32>
    %108 = math.rsqrt %107 : vector<64x1xf32>
    %109 = vector.broadcast %108 : vector<64x1xf32> to vector<64x32xf32>
    %110 = arith.mulf %105, %109 : vector<64x32xf32>
    %c0_42 = arith.constant 0 : index
    %c0_43 = arith.constant 0 : index
    %111 = vector.load %arg9[%c0_42, %c0_43] : memref<1x32xf32, #tpu.memory_space<vmem>>, vector<1x32xf32>
    %112 = vector.broadcast %111 : vector<1x32xf32> to vector<64x32xf32>
    %113 = arith.mulf %110, %112 : vector<64x32xf32>
    %c0_44 = arith.constant 0 : index
    %c0_45 = arith.constant 0 : index
    %114 = vector.load %arg10[%c0_44, %c0_45] : memref<1x32xf32, #tpu.memory_space<vmem>>, vector<1x32xf32>
    %115 = vector.broadcast %114 : vector<1x32xf32> to vector<64x32xf32>
    %116 = arith.addf %113, %115 : vector<64x32xf32>
    %c0_46 = arith.constant 0 : index
    %c0_47 = arith.constant 0 : index
    %117 = vector.load %arg11[%c0_46, %c0_47] : memref<32x128xf32, #tpu.memory_space<vmem>>, vector<32x128xf32>
    %cst_48 = arith.constant dense<0.000000e+00> : vector<64x128xf32>
    %118 = tpu.matmul %116, %117, %cst_48 {dimension_numbers = #tpu.dot_dimension_numbers<[1], [0], [0], [1], [0, 0, 1, 1], [], []>} : vector<64x32xf32>, vector<32x128xf32>, vector<64x128xf32> -> vector<64x128xf32>
    %c0_49 = arith.constant 0 : index
    %c0_50 = arith.constant 0 : index
    %119 = vector.load %arg12[%c0_49, %c0_50] : memref<1x128xf32, #tpu.memory_space<vmem>>, vector<1x128xf32>
    %120 = vector.broadcast %119 : vector<1x128xf32> to vector<64x128xf32>
    %121 = arith.addf %118, %120 : vector<64x128xf32>
    %cst_51 = arith.constant 5.000000e-01 : f32
    %122 = vector.broadcast %cst_51 : f32 to vector<64x128xf32>
    %123 = arith.mulf %122, %121 : vector<64x128xf32>
    %cst_52 = arith.constant 0.707106769 : f32
    %124 = vector.broadcast %cst_52 : f32 to vector<64x128xf32>
    %125 = arith.mulf %121, %124 : vector<64x128xf32>
    %126 = math.erf %125 : vector<64x128xf32>
    %cst_53 = arith.constant 1.000000e+00 : f32
    %127 = vector.broadcast %cst_53 : f32 to vector<64x128xf32>
    %128 = arith.addf %127, %126 : vector<64x128xf32>
    %129 = arith.mulf %123, %128 : vector<64x128xf32>
    %c0_54 = arith.constant 0 : index
    %c0_55 = arith.constant 0 : index
    %130 = vector.load %arg13[%c0_54, %c0_55] : memref<128x32xf32, #tpu.memory_space<vmem>>, vector<128x32xf32>
    %cst_56 = arith.constant dense<0.000000e+00> : vector<64x32xf32>
    %131 = tpu.matmul %129, %130, %cst_56 {dimension_numbers = #tpu.dot_dimension_numbers<[1], [0], [0], [1], [0, 0, 1, 1], [], []>} : vector<64x128xf32>, vector<128x32xf32>, vector<64x32xf32> -> vector<64x32xf32>
    %c0_57 = arith.constant 0 : index
    %c0_58 = arith.constant 0 : index
    %132 = vector.load %arg14[%c0_57, %c0_58] : memref<1x32xf32, #tpu.memory_space<vmem>>, vector<1x32xf32>
    %133 = vector.broadcast %132 : vector<1x32xf32> to vector<64x32xf32>
    %134 = arith.addf %131, %133 : vector<64x32xf32>
    %135 = arith.addf %92, %134 : vector<64x32xf32>
    %c0_59 = arith.constant 0 : index
    %c0_60 = arith.constant 0 : index
    %136 = vector.load %arg15[%c0_59, %c0_60] : memref<64x32xf32, #tpu.memory_space<vmem>>, vector<64x32xf32>
    tpu.vector_store %arg15[%c0_59, %c0_60], %135 {strides = array<i32>} : memref<64x32xf32, #tpu.memory_space<vmem>>, vector<64x32xf32>,
    return
  }
  func.func @transform_0(%arg0: i32) -> (i32, i32) {
    %c0_i32 = arith.constant 0 : i32
    %c0_i32_0 = arith.constant 0 : i32
    return %arg0, %c0_i32 : i32, i32
  }
  func.func @transform_1(%arg0: i32) -> (i32, i32, i32) {
    %c0_i32 = arith.constant 0 : i32
    %c0_i32_0 = arith.constant 0 : i32
    %c0_i32_1 = arith.constant 0 : i32
    %c0_i32_2 = arith.constant 0 : i32
    return %c0_i32, %c0_i32_0, %c0_i32_1 : i32, i32, i32
  }
  func.func @transform_2(%arg0: i32) -> (i32, i32) {
    %c0_i32 = arith.constant 0 : i32
    %c0_i32_0 = arith.constant 0 : i32
    %c0_i32_1 = arith.constant 0 : i32
    return %c0_i32, %c0_i32_0 : i32, i32
  }
  func.func @transform_3(%arg0: i32) -> (i32, i32) {
    %c0_i32 = arith.constant 0 : i32
    %c0_i32_0 = arith.constant 0 : i32
    %c0_i32_1 = arith.constant 0 : i32
    return %c0_i32, %c0_i32_0 : i32, i32
  }
  func.func @transform_4(%arg0: i32) -> (i32, i32) {
    %c0_i32 = arith.constant 0 : i32
    %c0_i32_0 = arith.constant 0 : i32
    %c0_i32_1 = arith.constant 0 : i32
    return %c0_i32, %c0_i32_0 : i32, i32
  }
  func.func @transform_5(%arg0: i32) -> (i32, i32) {
    %c0_i32 = arith.constant 0 : i32
    %c0_i32_0 = arith.constant 0 : i32
    %c0_i32_1 = arith.constant 0 : i32
    return %c0_i32, %c0_i32_0 : i32, i32
  }
  func.func @transform_6(%arg0: i32) -> (i32, i32) {
    %c0_i32 = arith.constant 0 : i32
    %c0_i32_0 = arith.constant 0 : i32
    %c0_i32_1 = arith.constant 0 : i32
    return %c0_i32, %c0_i32_0 : i32, i32
  }
  func.func @transform_7(%arg0: i32) -> (i32, i32) {
    %c0_i32 = arith.constant 0 : i32
    %c0_i32_0 = arith.constant 0 : i32
    %c0_i32_1 = arith.constant 0 : i32
    return %c0_i32, %c0_i32_0 : i32, i32
  }
  func.func @transform_8(%arg0: i32) -> (i32, i32) {
    %c0_i32 = arith.constant 0 : i32
    %c0_i32_0 = arith.constant 0 : i32
    %c0_i32_1 = arith.constant 0 : i32
    return %c0_i32, %c0_i32_0 : i32, i32
  }
  func.func @transform_9(%arg0: i32) -> (i32, i32) {
    %c0_i32 = arith.constant 0 : i32
    %c0_i32_0 = arith.constant 0 : i32
    %c0_i32_1 = arith.constant 0 : i32
    return %c0_i32, %c0_i32_0 : i32, i32
  }
  func.func @transform_10(%arg0: i32) -> (i32, i32) {
    %c0_i32 = arith.constant 0 : i32
    %c0_i32_0 = arith.constant 0 : i32
    %c0_i32_1 = arith.constant 0 : i32
    return %c0_i32, %c0_i32_0 : i32, i32
  }
  func.func @transform_11(%arg0: i32) -> (i32, i32) {
    %c0_i32 = arith.constant 0 : i32
    %c0_i32_0 = arith.constant 0 : i32
    %c0_i32_1 = arith.constant 0 : i32
    return %c0_i32, %c0_i32_0 : i32, i32
  }
  func.func @transform_12(%arg0: i32) -> (i32, i32) {
    %c0_i32 = arith.constant 0 : i32
    %c0_i32_0 = arith.constant 0 : i32
    %c0_i32_1 = arith.constant 0 : i32
    return %c0_i32, %c0_i32_0 : i32, i32
  }
  func.func @transform_13(%arg0: i32) -> (i32, i32) {
    %c0_i32 = arith.constant 0 : i32
    %c0_i32_0 = arith.constant 0 : i32
    %c0_i32_1 = arith.constant 0 : i32
    return %c0_i32, %c0_i32_0 : i32, i32
  }
  func.func @transform_14(%arg0: i32) -> (i32, i32) {
    %c0_i32 = arith.constant 0 : i32
    %c0_i32_0 = arith.constant 0 : i32
    return %arg0, %c0_i32 : i32, i32
  }
}

</mosaic_0001>

<llo_original>
// kernel: tpu_custom_call.1
$region0: #{tpu_custom_call.1}
  #allocation0 [shape = 'u32[]', space=smem, size = 0x4, offset = 0x4, fixed_abs, tag = 'smem constant byte address 0x4 - core index']
  #allocation1 [shape = 'u32[144,128]{1,0:T(1,128)}', space=vmem, size = 0x12000, scoped, tag = 'internal scratch']
  %s0 = inlined_call_operand.vmem [shape: f32[128,32], index: 0, kind: input, shape index: {}]
  %s1 = inlined_call_operand.vmem [shape: f32[2,16,16], index: 1, kind: input, shape index: {}]
  %s2 = inlined_call_operand.vmem [shape: f32[1,32], index: 2, kind: input, shape index: {}]
  %s3 = inlined_call_operand.vmem [shape: f32[1,32], index: 3, kind: input, shape index: {}]
  %s4 = inlined_call_operand.vmem [shape: f32[32,96], index: 4, kind: input, shape index: {}]
  %s5 = inlined_call_operand.vmem [shape: f32[1,96], index: 5, kind: input, shape index: {}]
  %s6 = inlined_call_operand.vmem [shape: f32[32,32], index: 6, kind: input, shape index: {}]
  %s7 = inlined_call_operand.vmem [shape: f32[1,32], index: 7, kind: input, shape index: {}]
  %s8 = inlined_call_operand.vmem [shape: f32[1,32], index: 8, kind: input, shape index: {}]
  %s9 = inlined_call_operand.vmem [shape: f32[1,32], index: 9, kind: input, shape index: {}]
  %s10 = inlined_call_operand.vmem [shape: f32[32,128], index: 10, kind: input, shape index: {}]
  %s11 = inlined_call_operand.vmem [shape: f32[1,128], index: 11, kind: input, shape index: {}]
  %s12 = inlined_call_operand.vmem [shape: f32[128,32], index: 12, kind: input, shape index: {}]
  %s13 = inlined_call_operand.vmem [shape: f32[1,32], index: 13, kind: input, shape index: {}]
  %s14 = inlined_call_operand.vmem [shape: f32[128,32], index: 14, kind: output, shape index: {}]
  %s15 = sld [smem:[#allocation0]]
  $region89: #{tpu_custom_call.1} parent=0
    _
  %s17 = ssub.s32 1, %s15
  %s18 = scalar_select 0, %s17, %s15
  loop: start=0, step=1, limit=4
  $region2: #{tpu_custom_call.1} parent=0 // loop_pre_header
    _
  $region3: #{tpu_custom_call.1} parent=0 // loop_header
    %s20 = sphi 0, %s24
    %p21 = scmp.ge.s32.totalorder %s20, 4
    %s30 = sphi 0, %s32
    %s33 = sphi 0, %s30
    %s34 = sphi 0, %s33
    %s50 = sphi 0, %s34
    %s54 = sphi 0, %s54
    %s56 = sphi 0, %s54
    %s57 = sphi 0, %s56
    %s71 = sphi 0, %s57
    %s75 = sphi 0, %s75
    %s77 = sphi 0, %s75
    %s78 = sphi 0, %s77
    %s92 = sphi 0, %s78
    %s96 = sphi 0, %s96
    %s98 = sphi 0, %s96
    %s99 = sphi 0, %s98
    %s113 = sphi 0, %s99
    %s117 = sphi 0, %s117
    %s119 = sphi 0, %s117
    %s120 = sphi 0, %s119
    %s134 = sphi 0, %s120
    %s138 = sphi 0, %s138
    %s140 = sphi 0, %s138
    %s141 = sphi 0, %s140
    %s155 = sphi 0, %s141
    %s159 = sphi 0, %s159
    %s161 = sphi 0, %s159
    %s162 = sphi 0, %s161
    %s176 = sphi 0, %s162
    %s180 = sphi 0, %s180
    %s182 = sphi 0, %s180
    %s183 = sphi 0, %s182
    %s197 = sphi 0, %s183
    %s201 = sphi 0, %s201
    %s203 = sphi 0, %s201
    %s204 = sphi 0, %s203
    %s218 = sphi 0, %s204
    %s222 = sphi 0, %s222
    %s224 = sphi 0, %s222
    %s225 = sphi 0, %s224
    %s239 = sphi 0, %s225
    %s243 = sphi 0, %s243
    %s245 = sphi 0, %s243
    %s246 = sphi 0, %s245
    %s260 = sphi 0, %s246
    %s264 = sphi 0, %s264
    %s266 = sphi 0, %s264
    %s267 = sphi 0, %s266
    %s281 = sphi 0, %s267
    %s285 = sphi 0, %s285
    %s287 = sphi 0, %s285
    %s288 = sphi 0, %s287
    %s302 = sphi 0, %s288
    %s306 = sphi 0, %s306
    %s308 = sphi 0, %s306
    %s309 = sphi 0, %s308
    %s323 = sphi 0, %s309
    %s329 = sphi 0, %s331
    %s332 = sphi 0, %s329
    %s333 = sphi 0, %s332
    %s349 = sphi 0, %s333
  $region4: #{tpu_custom_call.1} parent=0 // loop_header_branch
    %23 = sbr.rel (%p21) target = $region8
  $region5: #{tpu_custom_call.1} parent=0 // loop_body
    %s25 = ssub.s32 %s20, 1
    %s26 = ssub.s32 %s20, 2
    %s27 = sadd.s32 %s20, 1
    %s28 = ssub.s32 %s20, %s27
    %p29 = scmp.eq.s32.totalorder %s28, 0
    %s31 = sadd.s32 %s30, 1
    %s32 = scalar_select %p29, %s30, %s31
    %p35 = pneg %p29
    %p36 = scmp.eq.s32.totalorder %s20, 1
    %p37 = por %p35, %p36
    %p38 = scmp.ne.s32.totalorder %s30, %s33
    %p39 = scmp.eq.s32.totalorder %s20, 0
    %p40 = por %p38, %p39
    %p41 = scmp.ne.s32.totalorder %s30, %s33
    %p42 = scmp.eq.s32.totalorder %s25, 1
    %p43 = por %p41, %p42
    %p44 = scmp.ne.s32.totalorder %s33, %s34
    %p45 = scmp.eq.s32.totalorder %s25, 0
    %p46 = por %p44, %p45
    %p47 = scmp.ne.s32.totalorder %s33, %s34
    %p48 = scmp.eq.s32.totalorder %s26, 1
    %p49 = por %p47, %p48
    %p51 = scmp.ne.s32.totalorder %s34, %s50
    %p52 = scmp.eq.s32.totalorder %s26, 0
    %p53 = por %p51, %p52
    %s55 = sadd.s32 %s54, 1
    %p58 = scmp.eq.s32.totalorder %s20, 1
    %p59 = scmp.ne.s32.totalorder %s54, %s56
    %p60 = scmp.eq.s32.totalorder %s20, 0
    %p61 = por %p59, %p60
    %p62 = scmp.ne.s32.totalorder %s54, %s56
    %p63 = scmp.eq.s32.totalorder %s25, 1
    %p64 = por %p62, %p63
    %p65 = scmp.ne.s32.totalorder %s56, %s57
    %p66 = scmp.eq.s32.totalorder %s25, 0
    %p67 = por %p65, %p66
    %p68 = scmp.ne.s32.totalorder %s56, %s57
    %p69 = scmp.eq.s32.totalorder %s26, 1
    %p70 = por %p68, %p69
    %p72 = scmp.ne.s32.totalorder %s57, %s71
    %p73 = scmp.eq.s32.totalorder %s26, 0
    %p74 = por %p72, %p73
    %s76 = sadd.s32 %s75, 1
    %p79 = scmp.eq.s32.totalorder %s20, 1
    %p80 = scmp.ne.s32.totalorder %s75, %s77
    %p81 = scmp.eq.s32.totalorder %s20, 0
    %p82 = por %p80, %p81
    %p83 = scmp.ne.s32.totalorder %s75, %s77
    %p84 = scmp.eq.s32.totalorder %s25, 1
    %p85 = por %p83, %p84
    %p86 = scmp.ne.s32.totalorder %s77, %s78
    %p87 = scmp.eq.s32.totalorder %s25, 0
    %p88 = por %p86, %p87
    %p89 = scmp.ne.s32.totalorder %s77, %s78
    %p90 = scmp.eq.s32.totalorder %s26, 1
    %p91 = por %p89, %p90
    %p93 = scmp.ne.s32.totalorder %s78, %s92
    %p94 = scmp.eq.s32.totalorder %s26, 0
    %p95 = por %p93, %p94
    %s97 = sadd.s32 %s96, 1
    %p100 = scmp.eq.s32.totalorder %s20, 1
    %p101 = scmp.ne.s32.totalorder %s96, %s98
    %p102 = scmp.eq.s32.totalorder %s20, 0
    %p103 = por %p101, %p102
    %p104 = scmp.ne.s32.totalorder %s96, %s98
    %p105 = scmp.eq.s32.totalorder %s25, 1
    %p106 = por %p104, %p105
    %p107 = scmp.ne.s32.totalorder %s98, %s99
    %p108 = scmp.eq.s32.totalorder %s25, 0
    %p109 = por %p107, %p108
    %p110 = scmp.ne.s32.totalorder %s98, %s99
    %p111 = scmp.eq.s32.totalorder %s26, 1
    %p112 = por %p110, %p111
    %p114 = scmp.ne.s32.totalorder %s99, %s113
    %p115 = scmp.eq.s32.totalorder %s26, 0
    %p116 = por %p114, %p115
    %s118 = sadd.s32 %s117, 1
    %p121 = scmp.eq.s32.totalorder %s20, 1
    %p122 = scmp.ne.s32.totalorder %s117, %s119
    %p123 = scmp.eq.s32.totalorder %s20, 0
    %p124 = por %p122, %p123
    %p125 = scmp.ne.s32.totalorder %s117, %s119
    %p126 = scmp.eq.s32.totalorder %s25, 1
    %p127 = por %p125, %p126
    %p128 = scmp.ne.s32.totalorder %s119, %s120
    %p129 = scmp.eq.s32.totalorder %s25, 0
    %p130 = por %p128, %p129
    %p131 = scmp.ne.s32.totalorder %s119, %s120
    %p132 = scmp.eq.s32.totalorder %s26, 1
    %p133 = por %p131, %p132
    %p135 = scmp.ne.s32.totalorder %s120, %s134
    %p136 = scmp.eq.s32.totalorder %s26, 0
    %p137 = por %p135, %p136
    %s139 = sadd.s32 %s138, 1
    %p142 = scmp.eq.s32.totalorder %s20, 1
    %p143 = scmp.ne.s32.totalorder %s138, %s140
    %p144 = scmp.eq.s32.totalorder %s20, 0
    %p145 = por %p143, %p144
    %p146 = scmp.ne.s32.totalorder %s138, %s140
    %p147 = scmp.eq.s32.totalorder %s25, 1
    %p148 = por %p146, %p147
    %p149 = scmp.ne.s32.totalorder %s140, %s141
    %p150 = scmp.eq.s32.totalorder %s25, 0
    %p151 = por %p149, %p150
    %p152 = scmp.ne.s32.totalorder %s140, %s141
    %p153 = scmp.eq.s32.totalorder %s26, 1
    %p154 = por %p152, %p153
    %p156 = scmp.ne.s32.totalorder %s141, %s155
    %p157 = scmp.eq.s32.totalorder %s26, 0
    %p158 = por %p156, %p157
    %s160 = sadd.s32 %s159, 1
    %p163 = scmp.eq.s32.totalorder %s20, 1
    %p164 = scmp.ne.s32.totalorder %s159, %s161
    %p165 = scmp.eq.s32.totalorder %s20, 0
    %p166 = por %p164, %p165
    %p167 = scmp.ne.s32.totalorder %s159, %s161
    %p168 = scmp.eq.s32.totalorder %s25, 1
    %p169 = por %p167, %p168
    %p170 = scmp.ne.s32.totalorder %s161, %s162
    %p171 = scmp.eq.s32.totalorder %s25, 0
    %p172 = por %p170, %p171
    %p173 = scmp.ne.s32.totalorder %s161, %s162
    %p174 = scmp.eq.s32.totalorder %s26, 1
    %p175 = por %p173, %p174
    %p177 = scmp.ne.s32.totalorder %s162, %s176
    %p178 = scmp.eq.s32.totalorder %s26, 0
    %p179 = por %p177, %p178
    %s181 = sadd.s32 %s180, 1
    %p184 = scmp.eq.s32.totalorder %s20, 1
    %p185 = scmp.ne.s32.totalorder %s180, %s182
    %p186 = scmp.eq.s32.totalorder %s20, 0
    %p187 = por %p185, %p186
    %p188 = scmp.ne.s32.totalorder %s180, %s182
    %p189 = scmp.eq.s32.totalorder %s25, 1
    %p190 = por %p188, %p189
    %p191 = scmp.ne.s32.totalorder %s182, %s183
    %p192 = scmp.eq.s32.totalorder %s25, 0
    %p193 = por %p191, %p192
    %p194 = scmp.ne.s32.totalorder %s182, %s183
    %p195 = scmp.eq.s32.totalorder %s26, 1
    %p196 = por %p194, %p195
    %p198 = scmp.ne.s32.totalorder %s183, %s197
    %p199 = scmp.eq.s32.totalorder %s26, 0
    %p200 = por %p198, %p199
    %s202 = sadd.s32 %s201, 1
    %p205 = scmp.eq.s32.totalorder %s20, 1
    %p206 = scmp.ne.s32.totalorder %s201, %s203
    %p207 = scmp.eq.s32.totalorder %s20, 0
    %p208 = por %p206, %p207
    %p209 = scmp.ne.s32.totalorder %s201, %s203
    %p210 = scmp.eq.s32.totalorder %s25, 1
    %p211 = por %p209, %p210
    %p212 = scmp.ne.s32.totalorder %s203, %s204
    %p213 = scmp.eq.s32.totalorder %s25, 0
    %p214 = por %p212, %p213
    %p215 = scmp.ne.s32.totalorder %s203, %s204
    %p216 = scmp.eq.s32.totalorder %s26, 1
    %p217 = por %p215, %p216
    %p219 = scmp.ne.s32.totalorder %s204, %s218
    %p220 = scmp.eq.s32.totalorder %s26, 0
    %p221 = por %p219, %p220
    %s223 = sadd.s32 %s222, 1
    %p226 = scmp.eq.s32.totalorder %s20, 1
    %p227 = scmp.ne.s32.totalorder %s222, %s224
    %p228 = scmp.eq.s32.totalorder %s20, 0
    %p229 = por %p227, %p228
    %p230 = scmp.ne.s32.totalorder %s222, %s224
    %p231 = scmp.eq.s32.totalorder %s25, 1
    %p232 = por %p230, %p231
    %p233 = scmp.ne.s32.totalorder %s224, %s225
    %p234 = scmp.eq.s32.totalorder %s25, 0
    %p235 = por %p233, %p234
    %p236 = scmp.ne.s32.totalorder %s224, %s225
    %p237 = scmp.eq.s32.totalorder %s26, 1
    %p238 = por %p236, %p237
    %p240 = scmp.ne.s32.totalorder %s225, %s239
    %p241 = scmp.eq.s32.totalorder %s26, 0
    %p242 = por %p240, %p241
    %s244 = sadd.s32 %s243, 1
    %p247 = scmp.eq.s32.totalorder %s20, 1
    %p248 = scmp.ne.s32.totalorder %s243, %s245
    %p249 = scmp.eq.s32.totalorder %s20, 0
    %p250 = por %p248, %p249
    %p251 = scmp.ne.s32.totalorder %s243, %s245
    %p252 = scmp.eq.s32.totalorder %s25, 1
    %p253 = por %p251, %p252
    %p254 = scmp.ne.s32.totalorder %s245, %s246
    %p255 = scmp.eq.s32.totalorder %s25, 0
    %p256 = por %p254, %p255
    %p257 = scmp.ne.s32.totalorder %s245, %s246
    %p258 = scmp.eq.s32.totalorder %s26, 1
    %p259 = por %p257, %p258
    %p261 = scmp.ne.s32.totalorder %s246, %s260
    %p262 = scmp.eq.s32.totalorder %s26, 0
    %p263 = por %p261, %p262
    %s265 = sadd.s32 %s264, 1
    %p268 = scmp.eq.s32.totalorder %s20, 1
    %p269 = scmp.ne.s32.totalorder %s264, %s266
    %p270 = scmp.eq.s32.totalorder %s20, 0
    %p271 = por %p269, %p270
    %p272 = scmp.ne.s32.totalorder %s264, %s266
    %p273 = scmp.eq.s32.totalorder %s25, 1
    %p274 = por %p272, %p273
    %p275 = scmp.ne.s32.totalorder %s266, %s267
    %p276 = scmp.eq.s32.totalorder %s25, 0
    %p277 = por %p275, %p276
    %p278 = scmp.ne.s32.totalorder %s266, %s267
    %p279 = scmp.eq.s32.totalorder %s26, 1
    %p280 = por %p278, %p279
    %p282 = scmp.ne.s32.totalorder %s267, %s281
    %p283 = scmp.eq.s32.totalorder %s26, 0
    %p284 = por %p282, %p283
    %s286 = sadd.s32 %s285, 1
    %p289 = scmp.eq.s32.totalorder %s20, 1
    %p290 = scmp.ne.s32.totalorder %s285, %s287
    %p291 = scmp.eq.s32.totalorder %s20, 0
    %p292 = por %p290, %p291
    %p293 = scmp.ne.s32.totalorder %s285, %s287
    %p294 = scmp.eq.s32.totalorder %s25, 1
    %p295 = por %p293, %p294
    %p296 = scmp.ne.s32.totalorder %s287, %s288
    %p297 = scmp.eq.s32.totalorder %s25, 0
    %p298 = por %p296, %p297
    %p299 = scmp.ne.s32.totalorder %s287, %s288
    %p300 = scmp.eq.s32.totalorder %s26, 1
    %p301 = por %p299, %p300
    %p303 = scmp.ne.s32.totalorder %s288, %s302
    %p304 = scmp.eq.s32.totalorder %s26, 0
    %p305 = por %p303, %p304
    %s307 = sadd.s32 %s306, 1
    %p310 = scmp.eq.s32.totalorder %s20, 1
    %p311 = scmp.ne.s32.totalorder %s306, %s308
    %p312 = scmp.eq.s32.totalorder %s20, 0
    %p313 = por %p311, %p312
    %p314 = scmp.ne.s32.totalorder %s306, %s308
    %p315 = scmp.eq.s32.totalorder %s25, 1
    %p316 = por %p314, %p315
    %p317 = scmp.ne.s32.totalorder %s308, %s309
    %p318 = scmp.eq.s32.totalorder %s25, 0
    %p319 = por %p317, %p318
    %p320 = scmp.ne.s32.totalorder %s308, %s309
    %p321 = scmp.eq.s32.totalorder %s26, 1
    %p322 = por %p320, %p321
    %p324 = scmp.ne.s32.totalorder %s309, %s323
    %p325 = scmp.eq.s32.totalorder %s26, 0
    %p326 = por %p324, %p325
    %s327 = ssub.s32 %s20, %s27
    %p328 = scmp.eq.s32.totalorder %s327, 0
    %s330 = sadd.s32 %s329, 1
    %s331 = scalar_select %p328, %s329, %s330
    %p334 = pneg %p328
    %p335 = scmp.eq.s32.totalorder %s20, 1
    %p336 = por %p334, %p335
    %p337 = scmp.ne.s32.totalorder %s329, %s332
    %p338 = scmp.eq.s32.totalorder %s20, 0
    %p339 = por %p337, %p338
    %p340 = scmp.ne.s32.totalorder %s329, %s332
    %p341 = scmp.eq.s32.totalorder %s25, 1
    %p342 = por %p340, %p341
    %p343 = scmp.ne.s32.totalorder %s332, %s333
    %p344 = scmp.eq.s32.totalorder %s25, 0
    %p345 = por %p343, %p344
    %p346 = scmp.ne.s32.totalorder %s332, %s333
    %p347 = scmp.eq.s32.totalorder %s26, 1
    %p348 = por %p346, %p347
    %p350 = scmp.ne.s32.totalorder %s333, %s349
    %p351 = scmp.eq.s32.totalorder %s26, 0
    %p352 = por %p350, %p351
    %p353 = scmp.le.s32.totalorder 1, %s20
    %p354 = scmp.lt.s32.totalorder %s20, 3
    %p355 = pnand %p353, %p354
    %p356 = pneg %p355
    // Predicated region
    $region9: #{tpu_custom_call.1} parent=5 // pred_check
      _
    $region10: #{tpu_custom_call.1} parent=5 // pred_check_branch
      %358 = sbr.rel (%p355) target = $region12
    $region11: #{tpu_custom_call.1} parent=5 // pred_region
      %s359 = ssub.s32 %s20, 1
      // Predicated region
      $region13: #{tpu_custom_call.1} parent=11 // pred_check
        %p360 = pneg %p67
      $region14: #{tpu_custom_call.1} parent=11 // pred_check_branch
        %362 = sbr.rel (%p360) target = $region16
      $region15: #{tpu_custom_call.1} parent=11 // pred_region
        _
      $region16: #{tpu_custom_call.1} parent=11 // pred_fallthru
        _
      // Predicated region
      $region17: #{tpu_custom_call.1} parent=11 // pred_check
        %p363 = pneg %p88
      $region18: #{tpu_custom_call.1} parent=11 // pred_check_branch
        %365 = sbr.rel (%p363) target = $region20
      $region19: #{tpu_custom_call.1} parent=11 // pred_region
        _
      $region20: #{tpu_custom_call.1} parent=11 // pred_fallthru
        _
      // Predicated region
      $region21: #{tpu_custom_call.1} parent=11 // pred_check
        %p366 = pneg %p109
      $region22: #{tpu_custom_call.1} parent=11 // pred_check_branch
        %368 = sbr.rel (%p366) target = $region24
      $region23: #{tpu_custom_call.1} parent=11 // pred_region
        _
      $region24: #{tpu_custom_call.1} parent=11 // pred_fallthru
        _
      // Predicated region
      $region25: #{tpu_custom_call.1} parent=11 // pred_check
        %p369 = pneg %p130
      $region26: #{tpu_custom_call.1} parent=11 // pred_check_branch
        %371 = sbr.rel (%p369) target = $region28
      $region27: #{tpu_custom_call.1} parent=11 // pred_region
        _
      $region28: #{tpu_custom_call.1} parent=11 // pred_fallthru
        _
      // Predicated region
      $region29: #{tpu_custom_call.1} parent=11 // pred_check
        %p372 = pneg %p151
      $region30: #{tpu_custom_call.1} parent=11 // pred_check_branch
        %374 = sbr.rel (%p372) target = $region32
      $region31: #{tpu_custom_call.1} parent=11 // pred_region
        _
      $region32: #{tpu_custom_call.1} parent=11 // pred_fallthru
        _
      // Predicated region
      $region33: #{tpu_custom_call.1} parent=11 // pred_check
        %p375 = pneg %p172
      $region34: #{tpu_custom_call.1} parent=11 // pred_check_branch
        %377 = sbr.rel (%p375) target = $region36
      $region35: #{tpu_custom_call.1} parent=11 // pred_region
        _
      $region36: #{tpu_custom_call.1} parent=11 // pred_fallthru
        _
      // Predicated region
      $region37: #{tpu_custom_call.1} parent=11 // pred_check
        %p378 = pneg %p193
      $region38: #{tpu_custom_call.1} parent=11 // pred_check_branch
        %380 = sbr.rel (%p378) target = $region40
      $region39: #{tpu_custom_call.1} parent=11 // pred_region
        _
      $region40: #{tpu_custom_call.1} parent=11 // pred_fallthru
        _
      // Predicated region
      $region41: #{tpu_custom_call.1} parent=11 // pred_check
        %p381 = pneg %p214
      $region42: #{tpu_custom_call.1} parent=11 // pred_check_branch
        %383 = sbr.rel (%p381) target = $region44
      $region43: #{tpu_custom_call.1} parent=11 // pred_region
        _
      $region44: #{tpu_custom_call.1} parent=11 // pred_fallthru
        _
      // Predicated region
      $region45: #{tpu_custom_call.1} parent=11 // pred_check
        %p384 = pneg %p235
      $region46: #{tpu_custom_call.1} parent=11 // pred_check_branch
        %386 = sbr.rel (%p384) target = $region48
      $region47: #{tpu_custom_call.1} parent=11 // pred_region
        _
      $region48: #{tpu_custom_call.1} parent=11 // pred_fallthru
        _
      // Predicated region
      $region49: #{tpu_custom_call.1} parent=11 // pred_check
        %p387 = pneg %p256
      $region50: #{tpu_custom_call.1} parent=11 // pred_check_branch
        %389 = sbr.rel (%p387) target = $region52
      $region51: #{tpu_custom_call.1} parent=11 // pred_region
        _
      $region52: #{tpu_custom_call.1} parent=11 // pred_fallthru
        _
      // Predicated region
      $region53: #{tpu_custom_call.1} parent=11 // pred_check
        %p390 = pneg %p277
      $region54: #{tpu_custom_call.1} parent=11 // pred_check_branch
        %392 = sbr.rel (%p390) target = $region56
      $region55: #{tpu_custom_call.1} parent=11 // pred_region
        _
      $region56: #{tpu_custom_call.1} parent=11 // pred_fallthru
        _
      // Predicated region
      $region57: #{tpu_custom_call.1} parent=11 // pred_check
        %p393 = pneg %p298
      $region58: #{tpu_custom_call.1} parent=11 // pred_check_branch
        %395 = sbr.rel (%p393) target = $region60
      $region59: #{tpu_custom_call.1} parent=11 // pred_region
        _
      $region60: #{tpu_custom_call.1} parent=11 // pred_fallthru
        _
      // Predicated region
      $region61: #{tpu_custom_call.1} parent=11 // pred_check
        %p396 = pneg %p319
      $region62: #{tpu_custom_call.1} parent=11 // pred_check_branch
        %398 = sbr.rel (%p396) target = $region64
      $region63: #{tpu_custom_call.1} parent=11 // pred_region
        _
      $region64: #{tpu_custom_call.1} parent=11 // pred_fallthru
        _
    $region12: #{tpu_custom_call.1} parent=5 // pred_fallthru
      _
    %p399 = scmp.lt.s32.totalorder %s20, 2
    // Predicated region
    $region65: #{tpu_custom_call.1} parent=5 // pred_check
      %p400 = pneg %p399
    $region66: #{tpu_custom_call.1} parent=5 // pred_check_branch
      %402 = sbr.rel (%p400) target = $region68
    $region67: #{tpu_custom_call.1} parent=5 // pred_region
      // Predicated region
      $region69: #{tpu_custom_call.1} parent=67 // pred_check
        %p403 = pneg %p40
      $region70: #{tpu_custom_call.1} parent=67 // pred_check_branch
        %405 = sbr.rel (%p403) target = $region72
      $region71: #{tpu_custom_call.1} parent=67 // pred_region
        %s406 = smul.u32 8, %s20
        %p407 = scmp.lt.s32.totalorder %s406, 15
        %s408 = scalar_select %p407, %s406, 15
        %s409 = smul.addr %s408, 8
        %s410 = scalar_lea.vmem %s0, %s409
        %s411 = smul.u32 8, %s20
      $region72: #{tpu_custom_call.1} parent=67 // pred_fallthru
        _
    $region68: #{tpu_custom_call.1} parent=5 // pred_fallthru
      _
    %p412 = scmp.le.s32.totalorder 1, %s20
    %p413 = scmp.lt.s32.totalorder %s20, 3
    %p414 = pnand %p412, %p413
    %p415 = pneg %p414
    // Predicated region
    $region73: #{tpu_custom_call.1} parent=5 // pred_check
      _
    $region74: #{tpu_custom_call.1} parent=5 // pred_check_branch
      %417 = sbr.rel (%p414) target = $region76
    $region75: #{tpu_custom_call.1} parent=5 // pred_region
      %s418 = ssub.s32 %s20, 1
      %s419 = smul.u32 8, %s25
      %p420 = scmp.lt.s32.totalorder %s419, 15
      %s421 = scalar_select %p420, %s419, 15
      %s422 = smul.addr %s421, 8
      %s423 = scalar_lea.vmem %s0, %s422
      %p424 = pneg %p46
      %p425 = pneg %p43
      %p426 = pneg %p67
      %p427 = pneg %p64
      %p428 = pneg %p88
      %p429 = pneg %p85
      %p430 = pneg %p109
      %p431 = pneg %p106
      %p432 = pneg %p130
      %p433 = pneg %p127
      %p434 = pneg %p151
      %p435 = pneg %p148
      %p436 = pneg %p172
      %p437 = pneg %p169
      %p438 = pneg %p193
      %p439 = pneg %p190
      %p440 = pneg %p214
      %p441 = pneg %p211
      %p442 = pneg %p235
      %p443 = pneg %p232
      %p444 = pneg %p256
      %p445 = pneg %p253
      %p446 = pneg %p277
      %p447 = pneg %p274
      %p448 = pneg %p298
      %p449 = pneg %p295
      %p450 = pneg %p319
      %p451 = pneg %p316
      %p452 = pneg %p345
      %p453 = pneg %p342
      %s454 = smul.u32 8, %s25
      %p455 = scmp.lt.s32.totalorder %s454, 15
      %s456 = scalar_select %p455, %s454, 15
      %s457 = smul.addr %s456, 8
      %s458 = scalar_lea.vmem %s14, %s457
      %s459 = smul.u32 8, %s25
      %p460 = scmp.lt.s32.totalorder %s459, 15
      %s461 = scalar_select %p460, %s459, 15
      %s462 = smul.addr %s461, 8
      %s463 = scalar_lea.vmem %s0, %s462
      %s464 = smul.u32 8, %s25
      %s465 = smul.u32 8, %s25
      %p466 = scmp.lt.s32.totalorder %s465, 15
      %s467 = scalar_select %p466, %s465, 15
      %s468 = smul.addr %s467, 8
      %s469 = scalar_lea.vmem %s14, %s468
      %s470 = smul.u32 8, %s25
      %v471 = vld [vmem:[%s463] sm:$0xff]
      %v472 = vld [vmem:[%s463 + $0x8] sm:$0xff]
      %v473 = vld [vmem:[%s463 + $0x10] sm:$0xff]
      %v474 = vld [vmem:[%s463 + $0x18] sm:$0xff]
      %v475 = vld [vmem:[%s463 + $0x20] sm:$0xff]
      %v476 = vld [vmem:[%s463 + $0x28] sm:$0xff]
      %v477 = vld [vmem:[%s463 + $0x30] sm:$0xff]
      %v478 = vld [vmem:[%s463 + $0x38] sm:$0xff]
      %vm479 = vcmask 261120
      %v480 = vsel %vm479, %v471, 0.0
      %481 = vadd.xlane.f32.xlu0 %v480
      %v482 = vpop.xlane.xlu0 %481
      %v483 = vsel %vm479, %v472, 0.0
      %484 = vadd.xlane.f32.xlu0 %v483
      %v485 = vpop.xlane.xlu0 %484
      %v486 = vsel %vm479, %v473, 0.0
      %487 = vadd.xlane.f32.xlu0 %v486
      %v488 = vpop.xlane.xlu0 %487
      %v489 = vsel %vm479, %v474, 0.0
      %490 = vadd.xlane.f32.xlu0 %v489
      %v491 = vpop.xlane.xlu0 %490
      %v492 = vsel %vm479, %v475, 0.0
      %493 = vadd.xlane.f32.xlu0 %v492
      %v494 = vpop.xlane.xlu0 %493
      %v495 = vsel %vm479, %v476, 0.0
      %496 = vadd.xlane.f32.xlu0 %v495
      %v497 = vpop.xlane.xlu0 %496
      %v498 = vsel %vm479, %v477, 0.0
      %499 = vadd.xlane.f32.xlu0 %v498
      %v500 = vpop.xlane.xlu0 %499
      %v501 = vsel %vm479, %v478, 0.0
      %502 = vadd.xlane.f32.xlu0 %v501
      %v503 = vpop.xlane.xlu0 %502
      %v504 = vrcp.pop 32.0
      %v505 = vmul.f32 %v482, %v504
      %v506 = vmul.f32 %v485, %v504
      %v507 = vmul.f32 %v488, %v504
      %v508 = vmul.f32 %v491, %v504
      %v509 = vmul.f32 %v494, %v504
      %v510 = vmul.f32 %v497, %v504
      %v511 = vmul.f32 %v500, %v504
      %v512 = vmul.f32 %v503, %v504
      %v513 = vsub.f32 %v471, %v505
      %v514 = vsub.f32 %v472, %v506
      %v515 = vsub.f32 %v473, %v507
      %v516 = vsub.f32 %v474, %v508
      %v517 = vsub.f32 %v475, %v509
      %v518 = vsub.f32 %v476, %v510
      %v519 = vsub.f32 %v477, %v511
      %v520 = vsub.f32 %v478, %v512
      %v521 = vmul.f32 %v513, %v513
      %v522 = vmul.f32 %v514, %v514
      %v523 = vmul.f32 %v515, %v515
      %v524 = vmul.f32 %v516, %v516
      %v525 = vmul.f32 %v517, %v517
      %v526 = vmul.f32 %v518, %v518
      %v527 = vmul.f32 %v519, %v519
      %v528 = vmul.f32 %v520, %v520
      %v529 = vsel %vm479, %v521, 0.0
      %530 = vadd.xlane.f32.xlu0 %v529
      %v531 = vpop.xlane.xlu0 %530
      %v532 = vsel %vm479, %v522, 0.0
      %533 = vadd.xlane.f32.xlu0 %v532
      %v534 = vpop.xlane.xlu0 %533
      %v535 = vsel %vm479, %v523, 0.0
      %536 = vadd.xlane.f32.xlu0 %v535
      %v537 = vpop.xlane.xlu0 %536
      %v538 = vsel %vm479, %v524, 0.0
      %539 = vadd.xlane.f32.xlu0 %v538
      %v540 = vpop.xlane.xlu0 %539
      %v541 = vsel %vm479, %v525, 0.0
      %542 = vadd.xlane.f32.xlu0 %v541
      %v543 = vpop.xlane.xlu0 %542
      %v544 = vsel %vm479, %v526, 0.0
      %545 = vadd.xlane.f32.xlu0 %v544
      %v546 = vpop.xlane.xlu0 %545
      %v547 = vsel %vm479, %v527, 0.0
      %548 = vadd.xlane.f32.xlu0 %v547
      %v549 = vpop.xlane.xlu0 %548
      %v550 = vsel %vm479, %v528, 0.0
      %551 = vadd.xlane.f32.xlu0 %v550
      %v552 = vpop.xlane.xlu0 %551
      %v553 = vmul.f32 %v531, %v504
      %v554 = vmul.f32 %v534, %v504
      %v555 = vmul.f32 %v537, %v504
      %v556 = vmul.f32 %v540, %v504
      %v557 = vmul.f32 %v543, %v504
      %v558 = vmul.f32 %v546, %v504
      %v559 = vmul.f32 %v549, %v504
      %v560 = vmul.f32 %v552, %v504
      %v561 = vadd.f32 %v553, 1e-05
      %v562 = vadd.f32 %v554, 1e-05
      %v563 = vadd.f32 %v555, 1e-05
      %v564 = vadd.f32 %v556, 1e-05
      %v565 = vadd.f32 %v557, 1e-05
      %v566 = vadd.f32 %v558, 1e-05
      %v567 = vadd.f32 %v559, 1e-05
      %v568 = vadd.f32 %v560, 1e-05
      %v569 = vrsqrt.pop %v561
      %v570 = vrsqrt.pop %v562
      %v571 = vrsqrt.pop %v563
      %v572 = vrsqrt.pop %v564
      %v573 = vrsqrt.pop %v565
      %v574 = vrsqrt.pop %v566
      %v575 = vrsqrt.pop %v567
      %v576 = vrsqrt.pop %v568
      %v577 = vmul.f32 %v513, %v569
      %v578 = vmul.f32 %v514, %v570
      %v579 = vmul.f32 %v515, %v571
      %v580 = vmul.f32 %v516, %v572
      %v581 = vmul.f32 %v517, %v573
      %v582 = vmul.f32 %v518, %v574
      %v583 = vmul.f32 %v519, %v575
      %v584 = vmul.f32 %v520, %v576
      %v585 = vld [vmem:[%s2] sm:$0x1]
      %v587 = vlaneseq
      %v588 = vshrl.u32 %v587, 7
      %v589 = vsub.s32 0, %v588
      %v590 = vrot.slane %v585, %v589
      %v592 = vmul.f32 %v577, %v590
      %v593 = vmul.f32 %v578, %v590
      %v594 = vmul.f32 %v579, %v590
      %v595 = vmul.f32 %v580, %v590
      %v596 = vmul.f32 %v581, %v590
      %v597 = vmul.f32 %v582, %v590
      %v598 = vmul.f32 %v583, %v590
      %v599 = vmul.f32 %v584, %v590
      %v600 = vld [vmem:[%s3] sm:$0x1]
      %v602 = vlaneseq
      %v603 = vshrl.u32 %v602, 7
      %v604 = vsub.s32 0, %v603
      %v605 = vrot.slane %v600, %v604
      %v607 = vadd.f32 %v592, %v605
      %v608 = vadd.f32 %v593, %v605
      %v609 = vadd.f32 %v594, %v605
      %v610 = vadd.f32 %v595, %v605
      %v611 = vadd.f32 %v596, %v605
      %v612 = vadd.f32 %v597, %v605
      %v613 = vadd.f32 %v598, %v605
      %v614 = vadd.f32 %v599, %v605
      %v615 = vld [vmem:[%s4] sm:$0xff]
      %v616 = vld [vmem:[%s4 + $0x8] sm:$0xff]
      %v617 = vld [vmem:[%s4 + $0x10] sm:$0xff]
      %v618 = vld [vmem:[%s4 + $0x18] sm:$0xff]
      %v619 = vld [vmem:[%s5] sm:$0x1]
      %v621 = vlaneseq
      %v622 = vshrl.u32 %v621, 7
      %v623 = vsub.s32 0, %v622
      %v624 = vrot.slane %v619, %v623
      %v627 = vsel %vm479, %v607, 0
      %v630 = vsel %vm479, %v608, 0
      %v633 = vsel %vm479, %v609, 0
      %v636 = vsel %vm479, %v610, 0
      %v639 = vsel %vm479, %v611, 0
      %v642 = vsel %vm479, %v612, 0
      %v645 = vsel %vm479, %v613, 0
      %v648 = vsel %vm479, %v614, 0
      %650 = vmatprep.subr.mxu0 0.0
      %651 = vmatpush1.msra.mxu0 %v615
      %652 = vmatprep.subr.mxu0 0.0
      %653 = vmatpush1.msra.mxu0 %v616
      %654 = vmatprep.subr.mxu0 0.0
      %655 = vmatpush1.msra.mxu0 %v617
      %656 = vmatprep.subr.mxu0 0.0
      %657 = vmatpush1.msra.mxu0 %v618
      %658 = vmatprep.subr.mxu0 0.0
      %659 = vmatpush1.msra.mxu0 0.0
      %660 = vmatprep.subr.mxu0 0.0
      %661 = vmatpush1.msra.mxu0 0.0
      %662 = vmatprep.subr.mxu0 0.0
      %663 = vmatpush1.msra.mxu0 0.0
      %664 = vmatprep.subr.mxu0 0.0
      %665 = vmatpush1.msra.mxu0 0.0
      %666 = vmatprep.subr.mxu0 0.0
      %667 = vmatpush1.msra.mxu0 0.0
      %668 = vmatprep.subr.mxu0 0.0
      %669 = vmatpush1.msra.mxu0 0.0
      %670 = vmatprep.subr.mxu0 0.0
      %671 = vmatpush1.msra.mxu0 0.0
      %672 = vmatprep.subr.mxu0 0.0
      %673 = vmatpush1.msra.mxu0 0.0
      %674 = vmatprep.subr.mxu0 0.0
      %675 = vmatpush1.msra.mxu0 0.0
      %676 = vmatprep.subr.mxu0 0.0
      %677 = vmatpush1.msra.mxu0 0.0
      %678 = vmatprep.subr.mxu0 0.0
      %679 = vmatpush1.msra.mxu0 0.0
      %680 = vmatprep.subr.mxu0 0.0
      %681 = vmatpush1.msra.mxu0 0.0
      %682 = vmatprep.subr.mxu0 0.0
      %683 = vmatpush1.msra.mxu0 0.0
      %684 = vmatprep.subr.mxu0 0.0
      %685 = vmatpush1.msra.mxu0 0.0
      %686 = vmatprep.subr.mxu0 0.0
      %687 = vmatpush1.msra.mxu0 0.0
      %688 = vmatprep.subr.mxu0 0.0
      %689 = vmatpush1.msra.mxu0 0.0
      %690 = vmatprep.subr.mxu0 0.0
      %691 = vmatpush1.msra.mxu0 0.0
      %692 = vmatprep.subr.mxu0 0.0
      %693 = vmatpush1.msra.mxu0 0.0
      %694 = vmatprep.subr.mxu0 0.0
      %695 = vmatpush1.msra.mxu0 0.0
      %696 = vmatprep.subr.mxu0 0.0
      %697 = vmatpush1.msra.mxu0 0.0
      %698 = vmatprep.subr.mxu0 0.0
      %699 = vmatpush1.msra.mxu0 0.0
      %700 = vmatprep.subr.mxu0 0.0
      %701 = vmatpush1.msra.mxu0 0.0
      %702 = vmatprep.subr.mxu0 0.0
      %703 = vmatpush1.msra.mxu0 0.0
      %704 = vmatprep.subr.mxu0 0.0
      %705 = vmatpush1.msra.mxu0 0.0
      %706 = vmatprep.subr.mxu0 0.0
      %707 = vmatpush1.msra.mxu0 0.0
      %708 = vmatprep.subr.mxu0 0.0
      %709 = vmatpush1.msra.mxu0 0.0
      %710 = vmatprep.subr.mxu0 0.0
      %711 = vmatpush1.msra.mxu0 0.0
      %712 = vmatprep.subr.mxu0 0.0
      %713 = vmatpush1.msra.mxu0 0.0
      %714 = vmatprep.mubr.f32.mxu0 0.0
      %715 = vmatmul.mubr.f32.gmra.mrb[0].mxu0 %v627
      %v716 = vpop.f32.mrb[0].mxu0
      %v717 = vadd.f32 %v624, %v716
      %v718 = vpop.f32.mrb[0].mxu0
      %719 = vmatprep.mubr.f32.mxu0 0.0
      %720 = vmatmul.mubr.f32.gmra.mrb[0].mxu0 %v630
      %v721 = vpop.f32.mrb[0].mxu0
      %v722 = vadd.f32 %v624, %v721
      %v723 = vpop.f32.mrb[0].mxu0
      %724 = vmatprep.mubr.f32.mxu0 0.0
      %725 = vmatmul.mubr.f32.gmra.mrb[0].mxu0 %v633
      %v726 = vpop.f32.mrb[0].mxu0
      %v727 = vadd.f32 %v624, %v726
      %v728 = vpop.f32.mrb[0].mxu0
      %729 = vmatprep.mubr.f32.mxu0 0.0
      %730 = vmatmul.mubr.f32.gmra.mrb[0].mxu0 %v636
      %v731 = vpop.f32.mrb[0].mxu0
      %v732 = vadd.f32 %v624, %v731
      %v733 = vpop.f32.mrb[0].mxu0
      %734 = vmatprep.mubr.f32.mxu0 0.0
      %735 = vmatmul.mubr.f32.gmra.mrb[0].mxu0 %v639
      %v736 = vpop.f32.mrb[0].mxu0
      %v737 = vadd.f32 %v624, %v736
      %v738 = vpop.f32.mrb[0].mxu0
      %739 = vmatprep.mubr.f32.mxu0 0.0
      %740 = vmatmul.mubr.f32.gmra.mrb[0].mxu0 %v642
      %v741 = vpop.f32.mrb[0].mxu0
      %v742 = vadd.f32 %v624, %v741
      %v743 = vpop.f32.mrb[0].mxu0
      %744 = vmatprep.mubr.f32.mxu0 0.0
      %745 = vmatmul.mubr.f32.gmra.mrb[0].mxu0 %v645
      %v746 = vpop.f32.mrb[0].mxu0
      %v747 = vadd.f32 %v624, %v746
      %v748 = vpop.f32.mrb[0].mxu0
      %749 = vmatprep.mubr.f32.mxu0 0.0
      %750 = vmatmul.mubr.f32.gmra.mrb[0].mxu0 %v648
      %v751 = vpop.f32.mrb[0].mxu0
      %v752 = vadd.f32 %v624, %v751
      %v753 = vpop.f32.mrb[0].mxu0
      %754 = vdwg.mxu0
      %v755 = vmul.f32 %v717, 0.25
      %v756 = vmul.f32 %v722, 0.25
      %v757 = vmul.f32 %v727, 0.25
      %v758 = vmul.f32 %v732, 0.25
      %v759 = vmul.f32 %v737, 0.25
      %v760 = vmul.f32 %v742, 0.25
      %v761 = vmul.f32 %v747, 0.25
      %v762 = vmul.f32 %v752, 0.25
      %v763 = vld [vmem:[%s1] sm:$0xff]
      %v764 = vld [vmem:[%s1 + $0x8] sm:$0xff]
      %767 = vrot.lane.b32.xlu0 %v717, 96
      %v768 = vpop.permute.xlu0 %767
      %769 = vrot.lane.b32.xlu0 %v722, 96
      %v770 = vpop.permute.xlu0 %769
      %vm771 = vcmask 130048
      %v773 = vsel %vm771, %v755, 0
      %v776 = vsel %vm771, %v756, 0
      %v778 = vsel %vm771, %v768, 0
      %v780 = vsel %vm771, %v770, 0
      %782 = vmatprep.subr.mxu0 0.0
      %783 = vmatpush1.xpose.msra.mxu0 %v778
      %784 = vmatprep.subr.mxu0 0.0
      %785 = vmatpush1.xpose.msra.mxu0 %v780
      %786 = vmatprep.subr.mxu0 0.0
      %787 = vmatpush1.xpose.msra.mxu0 0.0
      %788 = vmatprep.subr.mxu0 0.0
      %789 = vmatpush1.xpose.msra.mxu0 0.0
      %790 = vmatprep.subr.mxu0 0.0
      %791 = vmatpush1.xpose.msra.mxu0 0.0
      %792 = vmatprep.subr.mxu0 0.0
      %793 = vmatpush1.xpose.msra.mxu0 0.0
      %794 = vmatprep.subr.mxu0 0.0
      %795 = vmatpush1.xpose.msra.mxu0 0.0
      %796 = vmatprep.subr.mxu0 0.0
      %797 = vmatpush1.xpose.msra.mxu0 0.0
      %798 = vmatprep.subr.mxu0 0.0
      %799 = vmatpush1.xpose.msra.mxu0 0.0
      %800 = vmatprep.subr.mxu0 0.0
      %801 = vmatpush1.xpose.msra.mxu0 0.0
      %802 = vmatprep.subr.mxu0 0.0
      %803 = vmatpush1.xpose.msra.mxu0 0.0
      %804 = vmatprep.subr.mxu0 0.0
      %805 = vmatpush1.xpose.msra.mxu0 0.0
      %806 = vmatprep.subr.mxu0 0.0
      %807 = vmatpush1.xpose.msra.mxu0 0.0
      %808 = vmatprep.subr.mxu0 0.0
      %809 = vmatpush1.xpose.msra.mxu0 0.0
      %810 = vmatprep.subr.mxu0 0.0
      %811 = vmatpush1.xpose.msra.mxu0 0.0
      %812 = vmatprep.subr.mxu0 0.0
      %813 = vmatpush1.xpose.msra.mxu0 0.0
      %814 = vmatprep.subr.mxu0 0.0
      %815 = vmatpush1.xpose.msra.mxu0 0.0
      %816 = vmatprep.subr.mxu0 0.0
      %817 = vmatpush1.xpose.msra.mxu0 0.0
      %818 = vmatprep.subr.mxu0 0.0
      %819 = vmatpush1.xpose.msra.mxu0 0.0
      %820 = vmatprep.subr.mxu0 0.0
      %821 = vmatpush1.xpose.msra.mxu0 0.0
      %822 = vmatprep.subr.mxu0 0.0
      %823 = vmatpush1.xpose.msra.mxu0 0.0
      %824 = vmatprep.subr.mxu0 0.0
      %825 = vmatpush1.xpose.msra.mxu0 0.0
      %826 = vmatprep.subr.mxu0 0.0
      %827 = vmatpush1.xpose.msra.mxu0 0.0
      %828 = vmatprep.subr.mxu0 0.0
      %829 = vmatpush1.xpose.msra.mxu0 0.0
      %830 = vmatprep.subr.mxu0 0.0
      %831 = vmatpush1.xpose.msra.mxu0 0.0
      %832 = vmatprep.subr.mxu0 0.0
      %833 = vmatpush1.xpose.msra.mxu0 0.0
      %834 = vmatprep.subr.mxu0 0.0
      %835 = vmatpush1.xpose.msra.mxu0 0.0
      %836 = vmatprep.subr.mxu0 0.0
      %837 = vmatpush1.xpose.msra.mxu0 0.0
      %838 = vmatprep.subr.mxu0 0.0
      %839 = vmatpush1.xpose.msra.mxu0 0.0
      %840 = vmatprep.subr.mxu0 0.0
      %841 = vmatpush1.xpose.msra.mxu0 0.0
      %842 = vmatprep.subr.mxu0 0.0
      %843 = vmatpush1.xpose.msra.mxu0 0.0
      %844 = vmatprep.subr.mxu0 0.0
      %845 = vmatpush1.xpose.msra.mxu0 0.0
      %846 = vmatprep.mubr.f32.mxu0 0.0
      %847 = vmatmul.mubr.f32.gmra.mrb[0].mxu0 %v773
      %v848 = vpop.f32.mrb[0].mxu0
      %v849 = vadd.f32 %v763, %v848
      %v850 = vpop.f32.mrb[0].mxu0
      %851 = vmatprep.mubr.f32.mxu0 0.0
      %852 = vmatmul.mubr.f32.gmra.mrb[0].mxu0 %v776
      %v853 = vpop.f32.mrb[0].mxu0
      %v854 = vadd.f32 %v764, %v853
      %v855 = vpop.f32.mrb[0].mxu0
      %856 = vdwg.mxu0
      %859 = vrot.lane.b32.xlu0 %v727, 96
      %v860 = vpop.permute.xlu0 %859
      %861 = vrot.lane.b32.xlu0 %v732, 96
      %v862 = vpop.permute.xlu0 %861
      %v864 = vsel %vm771, %v757, 0
      %v867 = vsel %vm771, %v758, 0
      %v869 = vsel %vm771, %v860, 0
      %v871 = vsel %vm771, %v862, 0
      %873 = vmatprep.subr.mxu0 0.0
      %874 = vmatpush1.xpose.msra.mxu0 %v869
      %875 = vmatprep.subr.mxu0 0.0
      %876 = vmatpush1.xpose.msra.mxu0 %v871
      %877 = vmatprep.subr.mxu0 0.0
      %878 = vmatpush1.xpose.msra.mxu0 0.0
      %879 = vmatprep.subr.mxu0 0.0
      %880 = vmatpush1.xpose.msra.mxu0 0.0
      %881 = vmatprep.subr.mxu0 0.0
      %882 = vmatpush1.xpose.msra.mxu0 0.0
      %883 = vmatprep.subr.mxu0 0.0
      %884 = vmatpush1.xpose.msra.mxu0 0.0
      %885 = vmatprep.subr.mxu0 0.0
      %886 = vmatpush1.xpose.msra.mxu0 0.0
      %887 = vmatprep.subr.mxu0 0.0
      %888 = vmatpush1.xpose.msra.mxu0 0.0
      %889 = vmatprep.subr.mxu0 0.0
      %890 = vmatpush1.xpose.msra.mxu0 0.0
      %891 = vmatprep.subr.mxu0 0.0
      %892 = vmatpush1.xpose.msra.mxu0 0.0
      %893 = vmatprep.subr.mxu0 0.0
      %894 = vmatpush1.xpose.msra.mxu0 0.0
      %895 = vmatprep.subr.mxu0 0.0
      %896 = vmatpush1.xpose.msra.mxu0 0.0
      %897 = vmatprep.subr.mxu0 0.0
      %898 = vmatpush1.xpose.msra.mxu0 0.0
      %899 = vmatprep.subr.mxu0 0.0
      %900 = vmatpush1.xpose.msra.mxu0 0.0
      %901 = vmatprep.subr.mxu0 0.0
      %902 = vmatpush1.xpose.msra.mxu0 0.0
      %903 = vmatprep.subr.mxu0 0.0
      %904 = vmatpush1.xpose.msra.mxu0 0.0
      %905 = vmatprep.subr.mxu0 0.0
      %906 = vmatpush1.xpose.msra.mxu0 0.0
      %907 = vmatprep.subr.mxu0 0.0
      %908 = vmatpush1.xpose.msra.mxu0 0.0
      %909 = vmatprep.subr.mxu0 0.0
      %910 = vmatpush1.xpose.msra.mxu0 0.0
      %911 = vmatprep.subr.mxu0 0.0
      %912 = vmatpush1.xpose.msra.mxu0 0.0
      %913 = vmatprep.subr.mxu0 0.0
      %914 = vmatpush1.xpose.msra.mxu0 0.0
      %915 = vmatprep.subr.mxu0 0.0
      %916 = vmatpush1.xpose.msra.mxu0 0.0
      %917 = vmatprep.subr.mxu0 0.0
      %918 = vmatpush1.xpose.msra.mxu0 0.0
      %919 = vmatprep.subr.mxu0 0.0
      %920 = vmatpush1.xpose.msra.mxu0 0.0
      %921 = vmatprep.subr.mxu0 0.0
      %922 = vmatpush1.xpose.msra.mxu0 0.0
      %923 = vmatprep.subr.mxu0 0.0
      %924 = vmatpush1.xpose.msra.mxu0 0.0
      %925 = vmatprep.subr.mxu0 0.0
      %926 = vmatpush1.xpose.msra.mxu0 0.0
      %927 = vmatprep.subr.mxu0 0.0
      %928 = vmatpush1.xpose.msra.mxu0 0.0
      %929 = vmatprep.subr.mxu0 0.0
      %930 = vmatpush1.xpose.msra.mxu0 0.0
      %931 = vmatprep.subr.mxu0 0.0
      %932 = vmatpush1.xpose.msra.mxu0 0.0
      %933 = vmatprep.subr.mxu0 0.0
      %934 = vmatpush1.xpose.msra.mxu0 0.0
      %935 = vmatprep.subr.mxu0 0.0
      %936 = vmatpush1.xpose.msra.mxu0 0.0
      %937 = vmatprep.mubr.f32.mxu0 0.0
      %938 = vmatmul.mubr.f32.gmra.mrb[0].mxu0 %v864
      %v939 = vpop.f32.mrb[0].mxu0
      %v940 = vadd.f32 %v763, %v939
      %v941 = vpop.f32.mrb[0].mxu0
      %942 = vmatprep.mubr.f32.mxu0 0.0
      %943 = vmatmul.mubr.f32.gmra.mrb[0].mxu0 %v867
      %v944 = vpop.f32.mrb[0].mxu0
      %v945 = vadd.f32 %v764, %v944
      %v946 = vpop.f32.mrb[0].mxu0
      %947 = vdwg.mxu0
      %950 = vrot.lane.b32.xlu0 %v737, 96
      %v951 = vpop.permute.xlu0 %950
      %952 = vrot.lane.b32.xlu0 %v742, 96
      %v953 = vpop.permute.xlu0 %952
      %v955 = vsel %vm771, %v759, 0
      %v958 = vsel %vm771, %v760, 0
      %v960 = vsel %vm771, %v951, 0
      %v962 = vsel %vm771, %v953, 0
      %964 = vmatprep.subr.mxu0 0.0
      %965 = vmatpush1.xpose.msra.mxu0 %v960
      %966 = vmatprep.subr.mxu0 0.0
      %967 = vmatpush1.xpose.msra.mxu0 %v962
      %968 = vmatprep.subr.mxu0 0.0
      %969 = vmatpush1.xpose.msra.mxu0 0.0
      %970 = vmatprep.subr.mxu0 0.0
      %971 = vmatpush1.xpose.msra.mxu0 0.0
      %972 = vmatprep.subr.mxu0 0.0
      %973 = vmatpush1.xpose.msra.mxu0 0.0
      %974 = vmatprep.subr.mxu0 0.0
      %975 = vmatpush1.xpose.msra.mxu0 0.0
      %976 = vmatprep.subr.mxu0 0.0
      %977 = vmatpush1.xpose.msra.mxu0 0.0
      %978 = vmatprep.subr.mxu0 0.0
      %979 = vmatpush1.xpose.msra.mxu0 0.0
      %980 = vmatprep.subr.mxu0 0.0
      %981 = vmatpush1.xpose.msra.mxu0 0.0
      %982 = vmatprep.subr.mxu0 0.0
      %983 = vmatpush1.xpose.msra.mxu0 0.0
      %984 = vmatprep.subr.mxu0 0.0
      %985 = vmatpush1.xpose.msra.mxu0 0.0
      %986 = vmatprep.subr.mxu0 0.0
      %987 = vmatpush1.xpose.msra.mxu0 0.0
      %988 = vmatprep.subr.mxu0 0.0
      %989 = vmatpush1.xpose.msra.mxu0 0.0
      %990 = vmatprep.subr.mxu0 0.0
      %991 = vmatpush1.xpose.msra.mxu0 0.0
      %992 = vmatprep.subr.mxu0 0.0
      %993 = vmatpush1.xpose.msra.mxu0 0.0
      %994 = vmatprep.subr.mxu0 0.0
      %995 = vmatpush1.xpose.msra.mxu0 0.0
      %996 = vmatprep.subr.mxu0 0.0
      %997 = vmatpush1.xpose.msra.mxu0 0.0
      %998 = vmatprep.subr.mxu0 0.0
      %999 = vmatpush1.xpose.msra.mxu0 0.0
      %1000 = vmatprep.subr.mxu0 0.0
      %1001 = vmatpush1.xpose.msra.mxu0 0.0
      %1002 = vmatprep.subr.mxu0 0.0
      %1003 = vmatpush1.xpose.msra.mxu0 0.0
      %1004 = vmatprep.subr.mxu0 0.0
      %1005 = vmatpush1.xpose.msra.mxu0 0.0
      %1006 = vmatprep.subr.mxu0 0.0
      %1007 = vmatpush1.xpose.msra.mxu0 0.0
      %1008 = vmatprep.subr.mxu0 0.0
      %1009 = vmatpush1.xpose.msra.mxu0 0.0
      %1010 = vmatprep.subr.mxu0 0.0
      %1011 = vmatpush1.xpose.msra.mxu0 0.0
      %1012 = vmatprep.subr.mxu0 0.0
      %1013 = vmatpush1.xpose.msra.mxu0 0.0
      %1014 = vmatprep.subr.mxu0 0.0
      %1015 = vmatpush1.xpose.msra.mxu0 0.0
      %1016 = vmatprep.subr.mxu0 0.0
      %1017 = vmatpush1.xpose.msra.mxu0 0.0
      %1018 = vmatprep.subr.mxu0 0.0
      %1019 = vmatpush1.xpose.msra.mxu0 0.0
      %1020 = vmatprep.subr.mxu0 0.0
      %1021 = vmatpush1.xpose.msra.mxu0 0.0
      %1022 = vmatprep.subr.mxu0 0.0
      %1023 = vmatpush1.xpose.msra.mxu0 0.0
      %1024 = vmatprep.subr.mxu0 0.0
      %1025 = vmatpush1.xpose.msra.mxu0 0.0
      %1026 = vmatprep.subr.mxu0 0.0
      %1027 = vmatpush1.xpose.msra.mxu0 0.0
      %1028 = vmatprep.mubr.f32.mxu0 0.0
      %1029 = vmatmul.mubr.f32.gmra.mrb[0].mxu0 %v955
      %v1030 = vpop.f32.mrb[0].mxu0
      %v1031 = vadd.f32 %v763, %v1030
      %v1032 = vpop.f32.mrb[0].mxu0
      %1033 = vmatprep.mubr.f32.mxu0 0.0
      %1034 = vmatmul.mubr.f32.gmra.mrb[0].mxu0 %v958
      %v1035 = vpop.f32.mrb[0].mxu0
      %v1036 = vadd.f32 %v764, %v1035
      %v1037 = vpop.f32.mrb[0].mxu0
      %1038 = vdwg.mxu0
      %1041 = vrot.lane.b32.xlu0 %v747, 96
      %v1042 = vpop.permute.xlu0 %1041
      %1043 = vrot.lane.b32.xlu0 %v752, 96
      %v1044 = vpop.permute.xlu0 %1043
      %v1046 = vsel %vm771, %v761, 0
      %v1049 = vsel %vm771, %v762, 0
      %v1051 = vsel %vm771, %v1042, 0
      %v1053 = vsel %vm771, %v1044, 0
      %1055 = vmatprep.subr.mxu0 0.0
      %1056 = vmatpush1.xpose.msra.mxu0 %v1051
      %1057 = vmatprep.subr.mxu0 0.0
      %1058 = vmatpush1.xpose.msra.mxu0 %v1053
      %1059 = vmatprep.subr.mxu0 0.0
      %1060 = vmatpush1.xpose.msra.mxu0 0.0
      %1061 = vmatprep.subr.mxu0 0.0
      %1062 = vmatpush1.xpose.msra.mxu0 0.0
      %1063 = vmatprep.subr.mxu0 0.0
      %1064 = vmatpush1.xpose.msra.mxu0 0.0
      %1065 = vmatprep.subr.mxu0 0.0
      %1066 = vmatpush1.xpose.msra.mxu0 0.0
      %1067 = vmatprep.subr.mxu0 0.0
      %1068 = vmatpush1.xpose.msra.mxu0 0.0
      %1069 = vmatprep.subr.mxu0 0.0
      %1070 = vmatpush1.xpose.msra.mxu0 0.0
      %1071 = vmatprep.subr.mxu0 0.0
      %1072 = vmatpush1.xpose.msra.mxu0 0.0
      %1073 = vmatprep.subr.mxu0 0.0
      %1074 = vmatpush1.xpose.msra.mxu0 0.0
      %1075 = vmatprep.subr.mxu0 0.0
      %1076 = vmatpush1.xpose.msra.mxu0 0.0
      %1077 = vmatprep.subr.mxu0 0.0
      %1078 = vmatpush1.xpose.msra.mxu0 0.0
      %1079 = vmatprep.subr.mxu0 0.0
      %1080 = vmatpush1.xpose.msra.mxu0 0.0
      %1081 = vmatprep.subr.mxu0 0.0
      %1082 = vmatpush1.xpose.msra.mxu0 0.0
      %1083 = vmatprep.subr.mxu0 0.0
      %1084 = vmatpush1.xpose.msra.mxu0 0.0
      %1085 = vmatprep.subr.mxu0 0.0
      %1086 = vmatpush1.xpose.msra.mxu0 0.0
      %1087 = vmatprep.subr.mxu0 0.0
      %1088 = vmatpush1.xpose.msra.mxu0 0.0
      %1089 = vmatprep.subr.mxu0 0.0
      %1090 = vmatpush1.xpose.msra.mxu0 0.0
      %1091 = vmatprep.subr.mxu0 0.0
      %1092 = vmatpush1.xpose.msra.mxu0 0.0
      %1093 = vmatprep.subr.mxu0 0.0
      %1094 = vmatpush1.xpose.msra.mxu0 0.0
      %1095 = vmatprep.subr.mxu0 0.0
      %1096 = vmatpush1.xpose.msra.mxu0 0.0
      %1097 = vmatprep.subr.mxu0 0.0
      %1098 = vmatpush1.xpose.msra.mxu0 0.0
      %1099 = vmatprep.subr.mxu0 0.0
      %1100 = vmatpush1.xpose.msra.mxu0 0.0
      %1101 = vmatprep.subr.mxu0 0.0
      %1102 = vmatpush1.xpose.msra.mxu0 0.0
      %1103 = vmatprep.subr.mxu0 0.0
      %1104 = vmatpush1.xpose.msra.mxu0 0.0
      %1105 = vmatprep.subr.mxu0 0.0
      %1106 = vmatpush1.xpose.msra.mxu0 0.0
      %1107 = vmatprep.subr.mxu0 0.0
      %1108 = vmatpush1.xpose.msra.mxu0 0.0
      %1109 = vmatprep.subr.mxu0 0.0
      %1110 = vmatpush1.xpose.msra.mxu0 0.0
      %1111 = vmatprep.subr.mxu0 0.0
      %1112 = vmatpush1.xpose.msra.mxu0 0.0
      %1113 = vmatprep.subr.mxu0 0.0
      %1114 = vmatpush1.xpose.msra.mxu0 0.0
      %1115 = vmatprep.subr.mxu0 0.0
      %1116 = vmatpush1.xpose.msra.mxu0 0.0
      %1117 = vmatprep.subr.mxu0 0.0
      %1118 = vmatpush1.xpose.msra.mxu0 0.0
      %1119 = vmatprep.mubr.f32.mxu0 0.0
      %1120 = vmatmul.mubr.f32.gmra.mrb[0].mxu0 %v1046
      %v1121 = vpop.f32.mrb[0].mxu0
      %v1122 = vadd.f32 %v763, %v1121
      %v1123 = vpop.f32.mrb[0].mxu0
      %1124 = vmatprep.mubr.f32.mxu0 0.0
      %1125 = vmatmul.mubr.f32.gmra.mrb[0].mxu0 %v1049
      %v1126 = vpop.f32.mrb[0].mxu0
      %v1127 = vadd.f32 %v764, %v1126
      %v1128 = vpop.f32.mrb[0].mxu0
      %1129 = vdwg.mxu0
      %v1130 = vsel %vm771, %v849, -inf
      %1131 = vmax.xlane.f32.xlu0 %v1130
      %v1132 = vpop.xlane.xlu0 %1131
      %v1133 = vsel %vm771, %v854, -inf
      %1134 = vmax.xlane.f32.xlu0 %v1133
      %v1135 = vpop.xlane.xlu0 %1134
      %v1136 = vsel %vm771, %v940, -inf
      %1137 = vmax.xlane.f32.xlu0 %v1136
      %v1138 = vpop.xlane.xlu0 %1137
      %v1139 = vsel %vm771, %v945, -inf
      %1140 = vmax.xlane.f32.xlu0 %v1139
      %v1141 = vpop.xlane.xlu0 %1140
      %v1142 = vsel %vm771, %v1031, -inf
      %1143 = vmax.xlane.f32.xlu0 %v1142
      %v1144 = vpop.xlane.xlu0 %1143
      %v1145 = vsel %vm771, %v1036, -inf
      %1146 = vmax.xlane.f32.xlu0 %v1145
      %v1147 = vpop.xlane.xlu0 %1146
      %v1148 = vsel %vm771, %v1122, -inf
      %1149 = vmax.xlane.f32.xlu0 %v1148
      %v1150 = vpop.xlane.xlu0 %1149
      %v1151 = vsel %vm771, %v1127, -inf
      %1152 = vmax.xlane.f32.xlu0 %v1151
      %v1153 = vpop.xlane.xlu0 %1152
      %v1154 = vsub.f32 %v849, %v1132
      %v1155 = vsub.f32 %v854, %v1135
      %v1156 = vsub.f32 %v940, %v1138
      %v1157 = vsub.f32 %v945, %v1141
      %v1158 = vsub.f32 %v1031, %v1144
      %v1159 = vsub.f32 %v1036, %v1147
      %v1160 = vsub.f32 %v1122, %v1150
      %v1161 = vsub.f32 %v1127, %v1153
      %v1162 = vmul.f32 %v1154, 1.442695
      %v1163 = vpow.pop %v1162
      %v1164 = vmul.f32 %v1155, 1.442695
      %v1165 = vpow.pop %v1164
      %v1166 = vmul.f32 %v1156, 1.442695
      %v1167 = vpow.pop %v1166
      %v1168 = vmul.f32 %v1157, 1.442695
      %v1169 = vpow.pop %v1168
      %v1170 = vmul.f32 %v1158, 1.442695
      %v1171 = vpow.pop %v1170
      %v1172 = vmul.f32 %v1159, 1.442695
      %v1173 = vpow.pop %v1172
      %v1174 = vmul.f32 %v1160, 1.442695
      %v1175 = vpow.pop %v1174
      %v1176 = vmul.f32 %v1161, 1.442695
      %v1177 = vpow.pop %v1176
      %v1178 = vsel %vm771, %v1163, 0.0
      %1179 = vadd.xlane.f32.xlu0 %v1178
      %v1180 = vpop.xlane.xlu0 %1179
      %v1181 = vsel %vm771, %v1165, 0.0
      %1182 = vadd.xlane.f32.xlu0 %v1181
      %v1183 = vpop.xlane.xlu0 %1182
      %v1184 = vsel %vm771, %v1167, 0.0
      %1185 = vadd.xlane.f32.xlu0 %v1184
      %v1186 = vpop.xlane.xlu0 %1185
      %v1187 = vsel %vm771, %v1169, 0.0
      %1188 = vadd.xlane.f32.xlu0 %v1187
      %v1189 = vpop.xlane.xlu0 %1188
      %v1190 = vsel %vm771, %v1171, 0.0
      %1191 = vadd.xlane.f32.xlu0 %v1190
      %v1192 = vpop.xlane.xlu0 %1191
      %v1193 = vsel %vm771, %v1173, 0.0
      %1194 = vadd.xlane.f32.xlu0 %v1193
      %v1195 = vpop.xlane.xlu0 %1194
      %v1196 = vsel %vm771, %v1175, 0.0
      %1197 = vadd.xlane.f32.xlu0 %v1196
      %v1198 = vpop.xlane.xlu0 %1197
      %v1199 = vsel %vm771, %v1177, 0.0
      %1200 = vadd.xlane.f32.xlu0 %v1199
      %v1201 = vpop.xlane.xlu0 %1200
      %v1202 = vrcp.pop %v1180
      %v1203 = vrcp.pop %v1183
      %v1204 = vrcp.pop %v1186
      %v1205 = vrcp.pop %v1189
      %v1206 = vrcp.pop %v1192
      %v1207 = vrcp.pop %v1195
      %v1208 = vrcp.pop %v1198
      %v1209 = vrcp.pop %v1201
      %v1210 = vmul.f32 %v1163, %v1202
      %v1211 = vmul.f32 %v1165, %v1203
      %v1212 = vmul.f32 %v1167, %v1204
      %v1213 = vmul.f32 %v1169, %v1205
      %v1214 = vmul.f32 %v1171, %v1206
      %v1215 = vmul.f32 %v1173, %v1207
      %v1216 = vmul.f32 %v1175, %v1208
      %v1217 = vmul.f32 %v1177, %v1209
      %1218 = vrot.lane.b32.xlu0 %v717, 64
      %v1219 = vpop.permute.xlu0 %1218
      %1220 = vrot.lane.b32.xlu0 %v722, 64
      %v1221 = vpop.permute.xlu0 %1220
      %v1225 = vsel %vm771, %v1210, 0
      %v1228 = vsel %vm771, %v1211, 0
      %1230 = vmatprep.subr.mxu0 0.0
      %1231 = vmatpush1.msra.mxu0 %v1219
      %1232 = vmatprep.subr.mxu0 0.0
      %1233 = vmatpush1.msra.mxu0 %v1221
      %1234 = vmatprep.subr.mxu0 0.0
      %1235 = vmatpush1.msra.mxu0 0.0
      %1236 = vmatprep.subr.mxu0 0.0
      %1237 = vmatpush1.msra.mxu0 0.0
      %1238 = vmatprep.subr.mxu0 0.0
      %1239 = vmatpush1.msra.mxu0 0.0
      %1240 = vmatprep.subr.mxu0 0.0
      %1241 = vmatpush1.msra.mxu0 0.0
      %1242 = vmatprep.subr.mxu0 0.0
      %1243 = vmatpush1.msra.mxu0 0.0
      %1244 = vmatprep.subr.mxu0 0.0
      %1245 = vmatpush1.msra.mxu0 0.0
      %1246 = vmatprep.subr.mxu0 0.0
      %1247 = vmatpush1.msra.mxu0 0.0
      %1248 = vmatprep.subr.mxu0 0.0
      %1249 = vmatpush1.msra.mxu0 0.0
      %1250 = vmatprep.subr.mxu0 0.0
      %1251 = vmatpush1.msra.mxu0 0.0
      %1252 = vmatprep.subr.mxu0 0.0
      %1253 = vmatpush1.msra.mxu0 0.0
      %1254 = vmatprep.subr.mxu0 0.0
      %1255 = vmatpush1.msra.mxu0 0.0
      %1256 = vmatprep.subr.mxu0 0.0
      %1257 = vmatpush1.msra.mxu0 0.0
      %1258 = vmatprep.subr.mxu0 0.0
      %1259 = vmatpush1.msra.mxu0 0.0
      %1260 = vmatprep.subr.mxu0 0.0
      %1261 = vmatpush1.msra.mxu0 0.0
      %1262 = vmatprep.subr.mxu0 0.0
      %1263 = vmatpush1.msra.mxu0 0.0
      %1264 = vmatprep.subr.mxu0 0.0
      %1265 = vmatpush1.msra.mxu0 0.0
      %1266 = vmatprep.subr.mxu0 0.0
      %1267 = vmatpush1.msra.mxu0 0.0
      %1268 = vmatprep.subr.mxu0 0.0
      %1269 = vmatpush1.msra.mxu0 0.0
      %1270 = vmatprep.subr.mxu0 0.0
      %1271 = vmatpush1.msra.mxu0 0.0
      %1272 = vmatprep.subr.mxu0 0.0
      %1273 = vmatpush1.msra.mxu0 0.0
      %1274 = vmatprep.subr.mxu0 0.0
      %1275 = vmatpush1.msra.mxu0 0.0
      %1276 = vmatprep.subr.mxu0 0.0
      %1277 = vmatpush1.msra.mxu0 0.0
      %1278 = vmatprep.subr.mxu0 0.0
      %1279 = vmatpush1.msra.mxu0 0.0
      %1280 = vmatprep.subr.mxu0 0.0
      %1281 = vmatpush1.msra.mxu0 0.0
      %1282 = vmatprep.subr.mxu0 0.0
      %1283 = vmatpush1.msra.mxu0 0.0
      %1284 = vmatprep.subr.mxu0 0.0
      %1285 = vmatpush1.msra.mxu0 0.0
      %1286 = vmatprep.subr.mxu0 0.0
      %1287 = vmatpush1.msra.mxu0 0.0
      %1288 = vmatprep.subr.mxu0 0.0
      %1289 = vmatpush1.msra.mxu0 0.0
      %1290 = vmatprep.subr.mxu0 0.0
      %1291 = vmatpush1.msra.mxu0 0.0
      %1292 = vmatprep.subr.mxu0 0.0
      %1293 = vmatpush1.msra.mxu0 0.0
      %1294 = vmatprep.mubr.f32.mxu0 0.0
      %1295 = vmatmul.mubr.f32.gmra.mrb[0].mxu0 %v1225
      %v1296 = vpop.f32.mrb[0].mxu0
      %v1297 = vadd.f32 0.0, %v1296
      %v1298 = vpop.f32.mrb[0].mxu0
      %1299 = vmatprep.mubr.f32.mxu0 0.0
      %1300 = vmatmul.mubr.f32.gmra.mrb[0].mxu0 %v1228
      %v1301 = vpop.f32.mrb[0].mxu0
      %v1302 = vadd.f32 0.0, %v1301
      %v1303 = vpop.f32.mrb[0].mxu0
      %1304 = vdwg.mxu0
      %1305 = vrot.lane.b32.xlu0 %v727, 64
      %v1306 = vpop.permute.xlu0 %1305
      %1307 = vrot.lane.b32.xlu0 %v732, 64
      %v1308 = vpop.permute.xlu0 %1307
      %v1312 = vsel %vm771, %v1212, 0
      %v1315 = vsel %vm771, %v1213, 0
      %1317 = vmatprep.subr.mxu0 0.0
      %1318 = vmatpush1.msra.mxu0 %v1306
      %1319 = vmatprep.subr.mxu0 0.0
      %1320 = vmatpush1.msra.mxu0 %v1308
      %1321 = vmatprep.subr.mxu0 0.0
      %1322 = vmatpush1.msra.mxu0 0.0
      %1323 = vmatprep.subr.mxu0 0.0
      %1324 = vmatpush1.msra.mxu0 0.0
      %1325 = vmatprep.subr.mxu0 0.0
      %1326 = vmatpush1.msra.mxu0 0.0
      %1327 = vmatprep.subr.mxu0 0.0
      %1328 = vmatpush1.msra.mxu0 0.0
      %1329 = vmatprep.subr.mxu0 0.0
      %1330 = vmatpush1.msra.mxu0 0.0
      %1331 = vmatprep.subr.mxu0 0.0
      %1332 = vmatpush1.msra.mxu0 0.0
      %1333 = vmatprep.subr.mxu0 0.0
      %1334 = vmatpush1.msra.mxu0 0.0
      %1335 = vmatprep.subr.mxu0 0.0
      %1336 = vmatpush1.msra.mxu0 0.0
      %1337 = vmatprep.subr.mxu0 0.0
      %1338 = vmatpush1.msra.mxu0 0.0
      %1339 = vmatprep.subr.mxu0 0.0
      %1340 = vmatpush1.msra.mxu0 0.0
      %1341 = vmatprep.subr.mxu0 0.0
      %1342 = vmatpush1.msra.mxu0 0.0
      %1343 = vmatprep.subr.mxu0 0.0
      %1344 = vmatpush1.msra.mxu0 0.0
      %1345 = vmatprep.subr.mxu0 0.0
      %1346 = vmatpush1.msra.mxu0 0.0
      %1347 = vmatprep.subr.mxu0 0.0
      %1348 = vmatpush1.msra.mxu0 0.0
      %1349 = vmatprep.subr.mxu0 0.0
      %1350 = vmatpush1.msra.mxu0 0.0
      %1351 = vmatprep.subr.mxu0 0.0
      %1352 = vmatpush1.msra.mxu0 0.0
      %1353 = vmatprep.subr.mxu0 0.0
      %1354 = vmatpush1.msra.mxu0 0.0
      %1355 = vmatprep.subr.mxu0 0.0
      %1356 = vmatpush1.msra.mxu0 0.0
      %1357 = vmatprep.subr.mxu0 0.0
      %1358 = vmatpush1.msra.mxu0 0.0
      %1359 = vmatprep.subr.mxu0 0.0
      %1360 = vmatpush1.msra.mxu0 0.0
      %1361 = vmatprep.subr.mxu0 0.0
      %1362 = vmatpush1.msra.mxu0 0.0
      %1363 = vmatprep.subr.mxu0 0.0
      %1364 = vmatpush1.msra.mxu0 0.0
      %1365 = vmatprep.subr.mxu0 0.0
      %1366 = vmatpush1.msra.mxu0 0.0
      %1367 = vmatprep.subr.mxu0 0.0
      %1368 = vmatpush1.msra.mxu0 0.0
      %1369 = vmatprep.subr.mxu0 0.0
      %1370 = vmatpush1.msra.mxu0 0.0
      %1371 = vmatprep.subr.mxu0 0.0
      %1372 = vmatpush1.msra.mxu0 0.0
      %1373 = vmatprep.subr.mxu0 0.0
      %1374 = vmatpush1.msra.mxu0 0.0
      %1375 = vmatprep.subr.mxu0 0.0
      %1376 = vmatpush1.msra.mxu0 0.0
      %1377 = vmatprep.subr.mxu0 0.0
      %1378 = vmatpush1.msra.mxu0 0.0
      %1379 = vmatprep.subr.mxu0 0.0
      %1380 = vmatpush1.msra.mxu0 0.0
      %1381 = vmatprep.mubr.f32.mxu0 0.0
      %1382 = vmatmul.mubr.f32.gmra.mrb[0].mxu0 %v1312
      %v1383 = vpop.f32.mrb[0].mxu0
      %v1384 = vadd.f32 0.0, %v1383
      %v1385 = vpop.f32.mrb[0].mxu0
      %1386 = vmatprep.mubr.f32.mxu0 0.0
      %1387 = vmatmul.mubr.f32.gmra.mrb[0].mxu0 %v1315
      %v1388 = vpop.f32.mrb[0].mxu0
      %v1389 = vadd.f32 0.0, %v1388
      %v1390 = vpop.f32.mrb[0].mxu0
      %1391 = vdwg.mxu0
      %1392 = vrot.lane.b32.xlu0 %v737, 64
      %v1393 = vpop.permute.xlu0 %1392
      %1394 = vrot.lane.b32.xlu0 %v742, 64
      %v1395 = vpop.permute.xlu0 %1394
      %v1399 = vsel %vm771, %v1214, 0
      %v1402 = vsel %vm771, %v1215, 0
      %1404 = vmatprep.subr.mxu0 0.0
      %1405 = vmatpush1.msra.mxu0 %v1393
      %1406 = vmatprep.subr.mxu0 0.0
      %1407 = vmatpush1.msra.mxu0 %v1395
      %1408 = vmatprep.subr.mxu0 0.0
      %1409 = vmatpush1.msra.mxu0 0.0
      %1410 = vmatprep.subr.mxu0 0.0
      %1411 = vmatpush1.msra.mxu0 0.0
      %1412 = vmatprep.subr.mxu0 0.0
      %1413 = vmatpush1.msra.mxu0 0.0
      %1414 = vmatprep.subr.mxu0 0.0
      %1415 = vmatpush1.msra.mxu0 0.0
      %1416 = vmatprep.subr.mxu0 0.0
      %1417 = vmatpush1.msra.mxu0 0.0
      %1418 = vmatprep.subr.mxu0 0.0
      %1419 = vmatpush1.msra.mxu0 0.0
      %1420 = vmatprep.subr.mxu0 0.0
      %1421 = vmatpush1.msra.mxu0 0.0
      %1422 = vmatprep.subr.mxu0 0.0
      %1423 = vmatpush1.msra.mxu0 0.0
      %1424 = vmatprep.subr.mxu0 0.0
      %1425 = vmatpush1.msra.mxu0 0.0
      %1426 = vmatprep.subr.mxu0 0.0
      %1427 = vmatpush1.msra.mxu0 0.0
      %1428 = vmatprep.subr.mxu0 0.0
      %1429 = vmatpush1.msra.mxu0 0.0
      %1430 = vmatprep.subr.mxu0 0.0
      %1431 = vmatpush1.msra.mxu0 0.0
      %1432 = vmatprep.subr.mxu0 0.0
      %1433 = vmatpush1.msra.mxu0 0.0
      %1434 = vmatprep.subr.mxu0 0.0
      %1435 = vmatpush1.msra.mxu0 0.0
      %1436 = vmatprep.subr.mxu0 0.0
      %1437 = vmatpush1.msra.mxu0 0.0
      %1438 = vmatprep.subr.mxu0 0.0
      %1439 = vmatpush1.msra.mxu0 0.0
      %1440 = vmatprep.subr.mxu0 0.0
      %1441 = vmatpush1.msra.mxu0 0.0
      %1442 = vmatprep.subr.mxu0 0.0
      %1443 = vmatpush1.msra.mxu0 0.0
      %1444 = vmatprep.subr.mxu0 0.0
      %1445 = vmatpush1.msra.mxu0 0.0
      %1446 = vmatprep.subr.mxu0 0.0
      %1447 = vmatpush1.msra.mxu0 0.0
      %1448 = vmatprep.subr.mxu0 0.0
      %1449 = vmatpush1.msra.mxu0 0.0
      %1450 = vmatprep.subr.mxu0 0.0
      %1451 = vmatpush1.msra.mxu0 0.0
      %1452 = vmatprep.subr.mxu0 0.0
      %1453 = vmatpush1.msra.mxu0 0.0
      %1454 = vmatprep.subr.mxu0 0.0
      %1455 = vmatpush1.msra.mxu0 0.0
      %1456 = vmatprep.subr.mxu0 0.0
      %1457 = vmatpush1.msra.mxu0 0.0
      %1458 = vmatprep.subr.mxu0 0.0
      %1459 = vmatpush1.msra.mxu0 0.0
      %1460 = vmatprep.subr.mxu0 0.0
      %1461 = vmatpush1.msra.mxu0 0.0
      %1462 = vmatprep.subr.mxu0 0.0
      %1463 = vmatpush1.msra.mxu0 0.0
      %1464 = vmatprep.subr.mxu0 0.0
      %1465 = vmatpush1.msra.mxu0 0.0
      %1466 = vmatprep.subr.mxu0 0.0
      %1467 = vmatpush1.msra.mxu0 0.0
      %1468 = vmatprep.mubr.f32.mxu0 0.0
      %1469 = vmatmul.mubr.f32.gmra.mrb[0].mxu0 %v1399
      %v1470 = vpop.f32.mrb[0].mxu0
      %v1471 = vadd.f32 0.0, %v1470
      %v1472 = vpop.f32.mrb[0].mxu0
      %1473 = vmatprep.mubr.f32.mxu0 0.0
      %1474 = vmatmul.mubr.f32.gmra.mrb[0].mxu0 %v1402
      %v1475 = vpop.f32.mrb[0].mxu0
      %v1476 = vadd.f32 0.0, %v1475
      %v1477 = vpop.f32.mrb[0].mxu0
      %1478 = vdwg.mxu0
      %1479 = vrot.lane.b32.xlu0 %v747, 64
      %v1480 = vpop.permute.xlu0 %1479
      %1481 = vrot.lane.b32.xlu0 %v752, 64
      %v1482 = vpop.permute.xlu0 %1481
      %v1486 = vsel %vm771, %v1216, 0
      %v1489 = vsel %vm771, %v1217, 0
      %1491 = vmatprep.subr.mxu0 0.0
      %1492 = vmatpush1.msra.mxu0 %v1480
      %1493 = vmatprep.subr.mxu0 0.0
      %1494 = vmatpush1.msra.mxu0 %v1482
      %1495 = vmatprep.subr.mxu0 0.0
      %1496 = vmatpush1.msra.mxu0 0.0
      %1497 = vmatprep.subr.mxu0 0.0
      %1498 = vmatpush1.msra.mxu0 0.0
      %1499 = vmatprep.subr.mxu0 0.0
      %1500 = vmatpush1.msra.mxu0 0.0
      %1501 = vmatprep.subr.mxu0 0.0
      %1502 = vmatpush1.msra.mxu0 0.0
      %1503 = vmatprep.subr.mxu0 0.0
      %1504 = vmatpush1.msra.mxu0 0.0
      %1505 = vmatprep.subr.mxu0 0.0
      %1506 = vmatpush1.msra.mxu0 0.0
      %1507 = vmatprep.subr.mxu0 0.0
      %1508 = vmatpush1.msra.mxu0 0.0
      %1509 = vmatprep.subr.mxu0 0.0
      %1510 = vmatpush1.msra.mxu0 0.0
      %1511 = vmatprep.subr.mxu0 0.0
      %1512 = vmatpush1.msra.mxu0 0.0
      %1513 = vmatprep.subr.mxu0 0.0
      %1514 = vmatpush1.msra.mxu0 0.0
      %1515 = vmatprep.subr.mxu0 0.0
      %1516 = vmatpush1.msra.mxu0 0.0
      %1517 = vmatprep.subr.mxu0 0.0
      %1518 = vmatpush1.msra.mxu0 0.0
      %1519 = vmatprep.subr.mxu0 0.0
      %1520 = vmatpush1.msra.mxu0 0.0
      %1521 = vmatprep.subr.mxu0 0.0
      %1522 = vmatpush1.msra.mxu0 0.0
      %1523 = vmatprep.subr.mxu0 0.0
      %1524 = vmatpush1.msra.mxu0 0.0
      %1525 = vmatprep.subr.mxu0 0.0
      %1526 = vmatpush1.msra.mxu0 0.0
      %1527 = vmatprep.subr.mxu0 0.0
      %1528 = vmatpush1.msra.mxu0 0.0
      %1529 = vmatprep.subr.mxu0 0.0
      %1530 = vmatpush1.msra.mxu0 0.0
      %1531 = vmatprep.subr.mxu0 0.0
      %1532 = vmatpush1.msra.mxu0 0.0
      %1533 = vmatprep.subr.mxu0 0.0
      %1534 = vmatpush1.msra.mxu0 0.0
      %1535 = vmatprep.subr.mxu0 0.0
      %1536 = vmatpush1.msra.mxu0 0.0
      %1537 = vmatprep.subr.mxu0 0.0
      %1538 = vmatpush1.msra.mxu0 0.0
      %1539 = vmatprep.subr.mxu0 0.0
      %1540 = vmatpush1.msra.mxu0 0.0
      %1541 = vmatprep.subr.mxu0 0.0
      %1542 = vmatpush1.msra.mxu0 0.0
      %1543 = vmatprep.subr.mxu0 0.0
      %1544 = vmatpush1.msra.mxu0 0.0
      %1545 = vmatprep.subr.mxu0 0.0
      %1546 = vmatpush1.msra.mxu0 0.0
      %1547 = vmatprep.subr.mxu0 0.0
      %1548 = vmatpush1.msra.mxu0 0.0
      %1549 = vmatprep.subr.mxu0 0.0
      %1550 = vmatpush1.msra.mxu0 0.0
      %1551 = vmatprep.subr.mxu0 0.0
      %1552 = vmatpush1.msra.mxu0 0.0
      %1553 = vmatprep.subr.mxu0 0.0
      %1554 = vmatpush1.msra.mxu0 0.0
      %1555 = vmatprep.mubr.f32.mxu0 0.0
      %1556 = vmatmul.mubr.f32.gmra.mrb[0].mxu0 %v1486
      %v1557 = vpop.f32.mrb[0].mxu0
      %v1558 = vadd.f32 0.0, %v1557
      %v1559 = vpop.f32.mrb[0].mxu0
      %1560 = vmatprep.mubr.f32.mxu0 0.0
      %1561 = vmatmul.mubr.f32.gmra.mrb[0].mxu0 %v1489
      %v1562 = vpop.f32.mrb[0].mxu0
      %v1563 = vadd.f32 0.0, %v1562
      %v1564 = vpop.f32.mrb[0].mxu0
      %1565 = vdwg.mxu0
      %v1566 = vld [vmem:[%s6] sm:$0xff]
      %v1567 = vld [vmem:[%s6 + $0x8] sm:$0xff]
      %s1568 = scalar_lea.vmem %s1, 16
      %v1569 = vld [vmem:[%s1568] sm:$0xff]
      %v1570 = vld [vmem:[%s1568 + $0x8] sm:$0xff]
      %1571 = vrot.lane.b32.xlu0 %v755, 112
      %v1572 = vpop.permute.xlu0 %1571
      %1573 = vrot.lane.b32.xlu0 %v756, 112
      %v1574 = vpop.permute.xlu0 %1573
      %1575 = vrot.lane.b32.xlu0 %v717, 80
      %v1576 = vpop.permute.xlu0 %1575
      %1577 = vrot.lane.b32.xlu0 %v722, 80
      %v1578 = vpop.permute.xlu0 %1577
      %v1579 = vsel %vm771, %v1572, 0
      %v1581 = vsel %vm771, %v1574, 0
      %v1583 = vsel %vm771, %v1576, 0
      %v1585 = vsel %vm771, %v1578, 0
      %1587 = vmatprep.subr.mxu0 0.0
      %1588 = vmatpush1.xpose.msra.mxu0 %v1583
      %1589 = vmatprep.subr.mxu0 0.0
      %1590 = vmatpush1.xpose.msra.mxu0 %v1585
      %1591 = vmatprep.subr.mxu0 0.0
      %1592 = vmatpush1.xpose.msra.mxu0 0.0
      %1593 = vmatprep.subr.mxu0 0.0
      %1594 = vmatpush1.xpose.msra.mxu0 0.0
      %1595 = vmatprep.subr.mxu0 0.0
      %1596 = vmatpush1.xpose.msra.mxu0 0.0
      %1597 = vmatprep.subr.mxu0 0.0
      %1598 = vmatpush1.xpose.msra.mxu0 0.0
      %1599 = vmatprep.subr.mxu0 0.0
      %1600 = vmatpush1.xpose.msra.mxu0 0.0
      %1601 = vmatprep.subr.mxu0 0.0
      %1602 = vmatpush1.xpose.msra.mxu0 0.0
      %1603 = vmatprep.subr.mxu0 0.0
      %1604 = vmatpush1.xpose.msra.mxu0 0.0
      %1605 = vmatprep.subr.mxu0 0.0
      %1606 = vmatpush1.xpose.msra.mxu0 0.0
      %1607 = vmatprep.subr.mxu0 0.0
      %1608 = vmatpush1.xpose.msra.mxu0 0.0
      %1609 = vmatprep.subr.mxu0 0.0
      %1610 = vmatpush1.xpose.msra.mxu0 0.0
      %1611 = vmatprep.subr.mxu0 0.0
      %1612 = vmatpush1.xpose.msra.mxu0 0.0
      %1613 = vmatprep.subr.mxu0 0.0
      %1614 = vmatpush1.xpose.msra.mxu0 0.0
      %1615 = vmatprep.subr.mxu0 0.0
      %1616 = vmatpush1.xpose.msra.mxu0 0.0
      %1617 = vmatprep.subr.mxu0 0.0
      %1618 = vmatpush1.xpose.msra.mxu0 0.0
      %1619 = vmatprep.subr.mxu0 0.0
      %1620 = vmatpush1.xpose.msra.mxu0 0.0
      %1621 = vmatprep.subr.mxu0 0.0
      %1622 = vmatpush1.xpose.msra.mxu0 0.0
      %1623 = vmatprep.subr.mxu0 0.0
      %1624 = vmatpush1.xpose.msra.mxu0 0.0
      %1625 = vmatprep.subr.mxu0 0.0
      %1626 = vmatpush1.xpose.msra.mxu0 0.0
      %1627 = vmatprep.subr.mxu0 0.0
      %1628 = vmatpush1.xpose.msra.mxu0 0.0
      %1629 = vmatprep.subr.mxu0 0.0
      %1630 = vmatpush1.xpose.msra.mxu0 0.0
      %1631 = vmatprep.subr.mxu0 0.0
      %1632 = vmatpush1.xpose.msra.mxu0 0.0
      %1633 = vmatprep.subr.mxu0 0.0
      %1634 = vmatpush1.xpose.msra.mxu0 0.0
      %1635 = vmatprep.subr.mxu0 0.0
      %1636 = vmatpush1.xpose.msra.mxu0 0.0
      %1637 = vmatprep.subr.mxu0 0.0
      %1638 = vmatpush1.xpose.msra.mxu0 0.0
      %1639 = vmatprep.subr.mxu0 0.0
      %1640 = vmatpush1.xpose.msra.mxu0 0.0
      %1641 = vmatprep.subr.mxu0 0.0
      %1642 = vmatpush1.xpose.msra.mxu0 0.0
      %1643 = vmatprep.subr.mxu0 0.0
      %1644 = vmatpush1.xpose.msra.mxu0 0.0
      %1645 = vmatprep.subr.mxu0 0.0
      %1646 = vmatpush1.xpose.msra.mxu0 0.0
      %1647 = vmatprep.subr.mxu0 0.0
      %1648 = vmatpush1.xpose.msra.mxu0 0.0
      %1649 = vmatprep.subr.mxu0 0.0
      %1650 = vmatpush1.xpose.msra.mxu0 0.0
      %1651 = vmatprep.mubr.f32.mxu0 0.0
      %1652 = vmatmul.mubr.f32.gmra.mrb[0].mxu0 %v1579
      %v1653 = vpop.f32.mrb[0].mxu0
      %v1654 = vadd.f32 %v1569, %v1653
      %v1655 = vpop.f32.mrb[0].mxu0
      %1656 = vmatprep.mubr.f32.mxu0 0.0
      %1657 = vmatmul.mubr.f32.gmra.mrb[0].mxu0 %v1581
      %v1658 = vpop.f32.mrb[0].mxu0
      %v1659 = vadd.f32 %v1570, %v1658
      %v1660 = vpop.f32.mrb[0].mxu0
      %1661 = vdwg.mxu0
      %1662 = vrot.lane.b32.xlu0 %v757, 112
      %v1663 = vpop.permute.xlu0 %1662
      %1664 = vrot.lane.b32.xlu0 %v758, 112
      %v1665 = vpop.permute.xlu0 %1664
      %1666 = vrot.lane.b32.xlu0 %v727, 80
      %v1667 = vpop.permute.xlu0 %1666
      %1668 = vrot.lane.b32.xlu0 %v732, 80
      %v1669 = vpop.permute.xlu0 %1668
      %v1670 = vsel %vm771, %v1663, 0
      %v1672 = vsel %vm771, %v1665, 0
      %v1674 = vsel %vm771, %v1667, 0
      %v1676 = vsel %vm771, %v1669, 0
      %1678 = vmatprep.subr.mxu0 0.0
      %1679 = vmatpush1.xpose.msra.mxu0 %v1674
      %1680 = vmatprep.subr.mxu0 0.0
      %1681 = vmatpush1.xpose.msra.mxu0 %v1676
      %1682 = vmatprep.subr.mxu0 0.0
      %1683 = vmatpush1.xpose.msra.mxu0 0.0
      %1684 = vmatprep.subr.mxu0 0.0
      %1685 = vmatpush1.xpose.msra.mxu0 0.0
      %1686 = vmatprep.subr.mxu0 0.0
      %1687 = vmatpush1.xpose.msra.mxu0 0.0
      %1688 = vmatprep.subr.mxu0 0.0
      %1689 = vmatpush1.xpose.msra.mxu0 0.0
      %1690 = vmatprep.subr.mxu0 0.0
      %1691 = vmatpush1.xpose.msra.mxu0 0.0
      %1692 = vmatprep.subr.mxu0 0.0
      %1693 = vmatpush1.xpose.msra.mxu0 0.0
      %1694 = vmatprep.subr.mxu0 0.0
      %1695 = vmatpush1.xpose.msra.mxu0 0.0
      %1696 = vmatprep.subr.mxu0 0.0
      %1697 = vmatpush1.xpose.msra.mxu0 0.0
      %1698 = vmatprep.subr.mxu0 0.0
      %1699 = vmatpush1.xpose.msra.mxu0 0.0
      %1700 = vmatprep.subr.mxu0 0.0
      %1701 = vmatpush1.xpose.msra.mxu0 0.0
      %1702 = vmatprep.subr.mxu0 0.0
      %1703 = vmatpush1.xpose.msra.mxu0 0.0
      %1704 = vmatprep.subr.mxu0 0.0
      %1705 = vmatpush1.xpose.msra.mxu0 0.0
      %1706 = vmatprep.subr.mxu0 0.0
      %1707 = vmatpush1.xpose.msra.mxu0 0.0
      %1708 = vmatprep.subr.mxu0 0.0
      %1709 = vmatpush1.xpose.msra.mxu0 0.0
      %1710 = vmatprep.subr.mxu0 0.0
      %1711 = vmatpush1.xpose.msra.mxu0 0.0
      %1712 = vmatprep.subr.mxu0 0.0
      %1713 = vmatpush1.xpose.msra.mxu0 0.0
      %1714 = vmatprep.subr.mxu0 0.0
      %1715 = vmatpush1.xpose.msra.mxu0 0.0
      %1716 = vmatprep.subr.mxu0 0.0
      %1717 = vmatpush1.xpose.msra.mxu0 0.0
      %1718 = vmatprep.subr.mxu0 0.0
      %1719 = vmatpush1.xpose.msra.mxu0 0.0
      %1720 = vmatprep.subr.mxu0 0.0
      %1721 = vmatpush1.xpose.msra.mxu0 0.0
      %1722 = vmatprep.subr.mxu0 0.0
      %1723 = vmatpush1.xpose.msra.mxu0 0.0
      %1724 = vmatprep.subr.mxu0 0.0
      %1725 = vmatpush1.xpose.msra.mxu0 0.0
      %1726 = vmatprep.subr.mxu0 0.0
      %1727 = vmatpush1.xpose.msra.mxu0 0.0
      %1728 = vmatprep.subr.mxu0 0.0
      %1729 = vmatpush1.xpose.msra.mxu0 0.0
      %1730 = vmatprep.subr.mxu0 0.0
      %1731 = vmatpush1.xpose.msra.mxu0 0.0
      %1732 = vmatprep.subr.mxu0 0.0
      %1733 = vmatpush1.xpose.msra.mxu0 0.0
      %1734 = vmatprep.subr.mxu0 0.0
      %1735 = vmatpush1.xpose.msra.mxu0 0.0
      %1736 = vmatprep.subr.mxu0 0.0
      %1737 = vmatpush1.xpose.msra.mxu0 0.0
      %1738 = vmatprep.subr.mxu0 0.0
      %1739 = vmatpush1.xpose.msra.mxu0 0.0
      %1740 = vmatprep.subr.mxu0 0.0
      %1741 = vmatpush1.xpose.msra.mxu0 0.0
      %1742 = vmatprep.mubr.f32.mxu0 0.0
      %1743 = vmatmul.mubr.f32.gmra.mrb[0].mxu0 %v1670
      %v1744 = vpop.f32.mrb[0].mxu0
      %v1745 = vadd.f32 %v1569, %v1744
      %v1746 = vpop.f32.mrb[0].mxu0
      %1747 = vmatprep.mubr.f32.mxu0 0.0
      %1748 = vmatmul.mubr.f32.gmra.mrb[0].mxu0 %v1672
      %v1749 = vpop.f32.mrb[0].mxu0
      %v1750 = vadd.f32 %v1570, %v1749
      %v1751 = vpop.f32.mrb[0].mxu0
      %1752 = vdwg.mxu0
      %1753 = vrot.lane.b32.xlu0 %v759, 112
      %v1754 = vpop.permute.xlu0 %1753
      %1755 = vrot.lane.b32.xlu0 %v760, 112
      %v1756 = vpop.permute.xlu0 %1755
      %1757 = vrot.lane.b32.xlu0 %v737, 80
      %v1758 = vpop.permute.xlu0 %1757
      %1759 = vrot.lane.b32.xlu0 %v742, 80
      %v1760 = vpop.permute.xlu0 %1759
      %v1761 = vsel %vm771, %v1754, 0
      %v1763 = vsel %vm771, %v1756, 0
      %v1765 = vsel %vm771, %v1758, 0
      %v1767 = vsel %vm771, %v1760, 0
      %1769 = vmatprep.subr.mxu0 0.0
      %1770 = vmatpush1.xpose.msra.mxu0 %v1765
      %1771 = vmatprep.subr.mxu0 0.0
      %1772 = vmatpush1.xpose.msra.mxu0 %v1767
      %1773 = vmatprep.subr.mxu0 0.0
      %1774 = vmatpush1.xpose.msra.mxu0 0.0
      %1775 = vmatprep.subr.mxu0 0.0
      %1776 = vmatpush1.xpose.msra.mxu0 0.0
      %1777 = vmatprep.subr.mxu0 0.0
      %1778 = vmatpush1.xpose.msra.mxu0 0.0
      %1779 = vmatprep.subr.mxu0 0.0
      %1780 = vmatpush1.xpose.msra.mxu0 0.0
      %1781 = vmatprep.subr.mxu0 0.0
      %1782 = vmatpush1.xpose.msra.mxu0 0.0
      %1783 = vmatprep.subr.mxu0 0.0
      %1784 = vmatpush1.xpose.msra.mxu0 0.0
      %1785 = vmatprep.subr.mxu0 0.0
      %1786 = vmatpush1.xpose.msra.mxu0 0.0
      %1787 = vmatprep.subr.mxu0 0.0
      %1788 = vmatpush1.xpose.msra.mxu0 0.0
      %1789 = vmatprep.subr.mxu0 0.0
      %1790 = vmatpush1.xpose.msra.mxu0 0.0
      %1791 = vmatprep.subr.mxu0 0.0
      %1792 = vmatpush1.xpose.msra.mxu0 0.0
      %1793 = vmatprep.subr.mxu0 0.0
      %1794 = vmatpush1.xpose.msra.mxu0 0.0
      %1795 = vmatprep.subr.mxu0 0.0
      %1796 = vmatpush1.xpose.msra.mxu0 0.0
      %1797 = vmatprep.subr.mxu0 0.0
      %1798 = vmatpush1.xpose.msra.mxu0 0.0
      %1799 = vmatprep.subr.mxu0 0.0
      %1800 = vmatpush1.xpose.msra.mxu0 0.0
      %1801 = vmatprep.subr.mxu0 0.0
      %1802 = vmatpush1.xpose.msra.mxu0 0.0
      %1803 = vmatprep.subr.mxu0 0.0
      %1804 = vmatpush1.xpose.msra.mxu0 0.0
      %1805 = vmatprep.subr.mxu0 0.0
      %1806 = vmatpush1.xpose.msra.mxu0 0.0
      %1807 = vmatprep.subr.mxu0 0.0
      %1808 = vmatpush1.xpose.msra.mxu0 0.0
      %1809 = vmatprep.subr.mxu0 0.0
      %1810 = vmatpush1.xpose.msra.mxu0 0.0
      %1811 = vmatprep.subr.mxu0 0.0
      %1812 = vmatpush1.xpose.msra.mxu0 0.0
      %1813 = vmatprep.subr.mxu0 0.0
      %1814 = vmatpush1.xpose.msra.mxu0 0.0
      %1815 = vmatprep.subr.mxu0 0.0
      %1816 = vmatpush1.xpose.msra.mxu0 0.0
      %1817 = vmatprep.subr.mxu0 0.0
      %1818 = vmatpush1.xpose.msra.mxu0 0.0
      %1819 = vmatprep.subr.mxu0 0.0
      %1820 = vmatpush1.xpose.msra.mxu0 0.0
      %1821 = vmatprep.subr.mxu0 0.0
      %1822 = vmatpush1.xpose.msra.mxu0 0.0
      %1823 = vmatprep.subr.mxu0 0.0
      %1824 = vmatpush1.xpose.msra.mxu0 0.0
      %1825 = vmatprep.subr.mxu0 0.0
      %1826 = vmatpush1.xpose.msra.mxu0 0.0
      %1827 = vmatprep.subr.mxu0 0.0
      %1828 = vmatpush1.xpose.msra.mxu0 0.0
      %1829 = vmatprep.subr.mxu0 0.0
      %1830 = vmatpush1.xpose.msra.mxu0 0.0
      %1831 = vmatprep.subr.mxu0 0.0
      %1832 = vmatpush1.xpose.msra.mxu0 0.0
      %1833 = vmatprep.mubr.f32.mxu0 0.0
      %1834 = vmatmul.mubr.f32.gmra.mrb[0].mxu0 %v1761
      %v1835 = vpop.f32.mrb[0].mxu0
      %v1836 = vadd.f32 %v1569, %v1835
      %v1837 = vpop.f32.mrb[0].mxu0
      %1838 = vmatprep.mubr.f32.mxu0 0.0
      %1839 = vmatmul.mubr.f32.gmra.mrb[0].mxu0 %v1763
      %v1840 = vpop.f32.mrb[0].mxu0
      %v1841 = vadd.f32 %v1570, %v1840
      %v1842 = vpop.f32.mrb[0].mxu0
      %1843 = vdwg.mxu0
      %1844 = vrot.lane.b32.xlu0 %v761, 112
      %v1845 = vpop.permute.xlu0 %1844
      %1846 = vrot.lane.b32.xlu0 %v762, 112
      %v1847 = vpop.permute.xlu0 %1846
      %1848 = vrot.lane.b32.xlu0 %v747, 80
      %v1849 = vpop.permute.xlu0 %1848
      %1850 = vrot.lane.b32.xlu0 %v752, 80
      %v1851 = vpop.permute.xlu0 %1850
      %v1852 = vsel %vm771, %v1845, 0
      %v1854 = vsel %vm771, %v1847, 0
      %v1856 = vsel %vm771, %v1849, 0
      %v1858 = vsel %vm771, %v1851, 0
      %1860 = vmatprep.subr.mxu0 0.0
      %1861 = vmatpush1.xpose.msra.mxu0 %v1856
      %1862 = vmatprep.subr.mxu0 0.0
      %1863 = vmatpush1.xpose.msra.mxu0 %v1858
      %1864 = vmatprep.subr.mxu0 0.0
      %1865 = vmatpush1.xpose.msra.mxu0 0.0
      %1866 = vmatprep.subr.mxu0 0.0
      %1867 = vmatpush1.xpose.msra.mxu0 0.0
      %1868 = vmatprep.subr.mxu0 0.0
      %1869 = vmatpush1.xpose.msra.mxu0 0.0
      %1870 = vmatprep.subr.mxu0 0.0
      %1871 = vmatpush1.xpose.msra.mxu0 0.0
      %1872 = vmatprep.subr.mxu0 0.0
      %1873 = vmatpush1.xpose.msra.mxu0 0.0
      %1874 = vmatprep.subr.mxu0 0.0
      %1875 = vmatpush1.xpose.msra.mxu0 0.0
      %1876 = vmatprep.subr.mxu0 0.0
      %1877 = vmatpush1.xpose.msra.mxu0 0.0
      %1878 = vmatprep.subr.mxu0 0.0
      %1879 = vmatpush1.xpose.msra.mxu0 0.0
      %1880 = vmatprep.subr.mxu0 0.0
      %1881 = vmatpush1.xpose.msra.mxu0 0.0
      %1882 = vmatprep.subr.mxu0 0.0
      %1883 = vmatpush1.xpose.msra.mxu0 0.0
      %1884 = vmatprep.subr.mxu0 0.0
      %1885 = vmatpush1.xpose.msra.mxu0 0.0
      %1886 = vmatprep.subr.mxu0 0.0
      %1887 = vmatpush1.xpose.msra.mxu0 0.0
      %1888 = vmatprep.subr.mxu0 0.0
      %1889 = vmatpush1.xpose.msra.mxu0 0.0
      %1890 = vmatprep.subr.mxu0 0.0
      %1891 = vmatpush1.xpose.msra.mxu0 0.0
      %1892 = vmatprep.subr.mxu0 0.0
      %1893 = vmatpush1.xpose.msra.mxu0 0.0
      %1894 = vmatprep.subr.mxu0 0.0
      %1895 = vmatpush1.xpose.msra.mxu0 0.0
      %1896 = vmatprep.subr.mxu0 0.0
      %1897 = vmatpush1.xpose.msra.mxu0 0.0
      %1898 = vmatprep.subr.mxu0 0.0
      %1899 = vmatpush1.xpose.msra.mxu0 0.0
      %1900 = vmatprep.subr.mxu0 0.0
      %1901 = vmatpush1.xpose.msra.mxu0 0.0
      %1902 = vmatprep.subr.mxu0 0.0
      %1903 = vmatpush1.xpose.msra.mxu0 0.0
      %1904 = vmatprep.subr.mxu0 0.0
      %1905 = vmatpush1.xpose.msra.mxu0 0.0
      %1906 = vmatprep.subr.mxu0 0.0
      %1907 = vmatpush1.xpose.msra.mxu0 0.0
      %1908 = vmatprep.subr.mxu0 0.0
      %1909 = vmatpush1.xpose.msra.mxu0 0.0
      %1910 = vmatprep.subr.mxu0 0.0
      %1911 = vmatpush1.xpose.msra.mxu0 0.0
      %1912 = vmatprep.subr.mxu0 0.0
      %1913 = vmatpush1.xpose.msra.mxu0 0.0
      %1914 = vmatprep.subr.mxu0 0.0
      %1915 = vmatpush1.xpose.msra.mxu0 0.0
      %1916 = vmatprep.subr.mxu0 0.0
      %1917 = vmatpush1.xpose.msra.mxu0 0.0
      %1918 = vmatprep.subr.mxu0 0.0
      %1919 = vmatpush1.xpose.msra.mxu0 0.0
      %1920 = vmatprep.subr.mxu0 0.0
      %1921 = vmatpush1.xpose.msra.mxu0 0.0
      %1922 = vmatprep.subr.mxu0 0.0
      %1923 = vmatpush1.xpose.msra.mxu0 0.0
      %1924 = vmatprep.mubr.f32.mxu0 0.0
      %1925 = vmatmul.mubr.f32.gmra.mrb[0].mxu0 %v1852
      %v1926 = vpop.f32.mrb[0].mxu0
      %v1927 = vadd.f32 %v1569, %v1926
      %v1928 = vpop.f32.mrb[0].mxu0
      %1929 = vmatprep.mubr.f32.mxu0 0.0
      %1930 = vmatmul.mubr.f32.gmra.mrb[0].mxu0 %v1854
      %v1931 = vpop.f32.mrb[0].mxu0
      %v1932 = vadd.f32 %v1570, %v1931
      %v1933 = vpop.f32.mrb[0].mxu0
      %1934 = vdwg.mxu0
      %v1935 = vsel %vm771, %v1654, -inf
      %1936 = vmax.xlane.f32.xlu0 %v1935
      %v1937 = vpop.xlane.xlu0 %1936
      %v1938 = vsel %vm771, %v1659, -inf
      %1939 = vmax.xlane.f32.xlu0 %v1938
      %v1940 = vpop.xlane.xlu0 %1939
      %v1941 = vsel %vm771, %v1745, -inf
      %1942 = vmax.xlane.f32.xlu0 %v1941
      %v1943 = vpop.xlane.xlu0 %1942
      %v1944 = vsel %vm771, %v1750, -inf
      %1945 = vmax.xlane.f32.xlu0 %v1944
      %v1946 = vpop.xlane.xlu0 %1945
      %v1947 = vsel %vm771, %v1836, -inf
      %1948 = vmax.xlane.f32.xlu0 %v1947
      %v1949 = vpop.xlane.xlu0 %1948
      %v1950 = vsel %vm771, %v1841, -inf
      %1951 = vmax.xlane.f32.xlu0 %v1950
      %v1952 = vpop.xlane.xlu0 %1951
      %v1953 = vsel %vm771, %v1927, -inf
      %1954 = vmax.xlane.f32.xlu0 %v1953
      %v1955 = vpop.xlane.xlu0 %1954
      %v1956 = vsel %vm771, %v1932, -inf
      %1957 = vmax.xlane.f32.xlu0 %v1956
      %v1958 = vpop.xlane.xlu0 %1957
      %v1959 = vsub.f32 %v1654, %v1937
      %v1960 = vsub.f32 %v1659, %v1940
      %v1961 = vsub.f32 %v1745, %v1943
      %v1962 = vsub.f32 %v1750, %v1946
      %v1963 = vsub.f32 %v1836, %v1949
      %v1964 = vsub.f32 %v1841, %v1952
      %v1965 = vsub.f32 %v1927, %v1955
      %v1966 = vsub.f32 %v1932, %v1958
      %v1967 = vmul.f32 %v1959, 1.442695
      %v1968 = vpow.pop %v1967
      %v1969 = vmul.f32 %v1960, 1.442695
      %v1970 = vpow.pop %v1969
      %v1971 = vmul.f32 %v1961, 1.442695
      %v1972 = vpow.pop %v1971
      %v1973 = vmul.f32 %v1962, 1.442695
      %v1974 = vpow.pop %v1973
      %v1975 = vmul.f32 %v1963, 1.442695
      %v1976 = vpow.pop %v1975
      %v1977 = vmul.f32 %v1964, 1.442695
      %v1978 = vpow.pop %v1977
      %v1979 = vmul.f32 %v1965, 1.442695
      %v1980 = vpow.pop %v1979
      %v1981 = vmul.f32 %v1966, 1.442695
      %v1982 = vpow.pop %v1981
      %v1983 = vsel %vm771, %v1968, 0.0
      %1984 = vadd.xlane.f32.xlu0 %v1983
      %v1985 = vpop.xlane.xlu0 %1984
      %v1986 = vsel %vm771, %v1970, 0.0
      %1987 = vadd.xlane.f32.xlu0 %v1986
      %v1988 = vpop.xlane.xlu0 %1987
      %v1989 = vsel %vm771, %v1972, 0.0
      %1990 = vadd.xlane.f32.xlu0 %v1989
      %v1991 = vpop.xlane.xlu0 %1990
      %v1992 = vsel %vm771, %v1974, 0.0
      %1993 = vadd.xlane.f32.xlu0 %v1992
      %v1994 = vpop.xlane.xlu0 %1993
      %v1995 = vsel %vm771, %v1976, 0.0
      %1996 = vadd.xlane.f32.xlu0 %v1995
      %v1997 = vpop.xlane.xlu0 %1996
      %v1998 = vsel %vm771, %v1978, 0.0
      %1999 = vadd.xlane.f32.xlu0 %v1998
      %v2000 = vpop.xlane.xlu0 %1999
      %v2001 = vsel %vm771, %v1980, 0.0
      %2002 = vadd.xlane.f32.xlu0 %v2001
      %v2003 = vpop.xlane.xlu0 %2002
      %v2004 = vsel %vm771, %v1982, 0.0
      %2005 = vadd.xlane.f32.xlu0 %v2004
      %v2006 = vpop.xlane.xlu0 %2005
      %v2007 = vrcp.pop %v1985
      %v2008 = vrcp.pop %v1988
      %v2009 = vrcp.pop %v1991
      %v2010 = vrcp.pop %v1994
      %v2011 = vrcp.pop %v1997
      %v2012 = vrcp.pop %v2000
      %v2013 = vrcp.pop %v2003
      %v2014 = vrcp.pop %v2006
      %v2015 = vmul.f32 %v1968, %v2007
      %v2016 = vmul.f32 %v1970, %v2008
      %v2017 = vmul.f32 %v1972, %v2009
      %v2018 = vmul.f32 %v1974, %v2010
      %v2019 = vmul.f32 %v1976, %v2011
      %v2020 = vmul.f32 %v1978, %v2012
      %v2021 = vmul.f32 %v1980, %v2013
      %v2022 = vmul.f32 %v1982, %v2014
      %2023 = vrot.lane.b32.xlu0 %v717, 48
      %v2024 = vpop.permute.xlu0 %2023
      %2025 = vrot.lane.b32.xlu0 %v722, 48
      %v2026 = vpop.permute.xlu0 %2025
      %v2030 = vsel %vm771, %v2015, 0
      %v2033 = vsel %vm771, %v2016, 0
      %2035 = vmatprep.subr.mxu0 0.0
      %2036 = vmatpush1.msra.mxu0 %v2024
      %2037 = vmatprep.subr.mxu0 0.0
      %2038 = vmatpush1.msra.mxu0 %v2026
      %2039 = vmatprep.subr.mxu0 0.0
      %2040 = vmatpush1.msra.mxu0 0.0
      %2041 = vmatprep.subr.mxu0 0.0
      %2042 = vmatpush1.msra.mxu0 0.0
      %2043 = vmatprep.subr.mxu0 0.0
      %2044 = vmatpush1.msra.mxu0 0.0
      %2045 = vmatprep.subr.mxu0 0.0
      %2046 = vmatpush1.msra.mxu0 0.0
      %2047 = vmatprep.subr.mxu0 0.0
      %2048 = vmatpush1.msra.mxu0 0.0
      %2049 = vmatprep.subr.mxu0 0.0
      %2050 = vmatpush1.msra.mxu0 0.0
      %2051 = vmatprep.subr.mxu0 0.0
      %2052 = vmatpush1.msra.mxu0 0.0
      %2053 = vmatprep.subr.mxu0 0.0
      %2054 = vmatpush1.msra.mxu0 0.0
      %2055 = vmatprep.subr.mxu0 0.0
      %2056 = vmatpush1.msra.mxu0 0.0
      %2057 = vmatprep.subr.mxu0 0.0
      %2058 = vmatpush1.msra.mxu0 0.0
      %2059 = vmatprep.subr.mxu0 0.0
      %2060 = vmatpush1.msra.mxu0 0.0
      %2061 = vmatprep.subr.mxu0 0.0
      %2062 = vmatpush1.msra.mxu0 0.0
      %2063 = vmatprep.subr.mxu0 0.0
      %2064 = vmatpush1.msra.mxu0 0.0
      %2065 = vmatprep.subr.mxu0 0.0
      %2066 = vmatpush1.msra.mxu0 0.0
      %2067 = vmatprep.subr.mxu0 0.0
      %2068 = vmatpush1.msra.mxu0 0.0
      %2069 = vmatprep.subr.mxu0 0.0
      %2070 = vmatpush1.msra.mxu0 0.0
      %2071 = vmatprep.subr.mxu0 0.0
      %2072 = vmatpush1.msra.mxu0 0.0
      %2073 = vmatprep.subr.mxu0 0.0
      %2074 = vmatpush1.msra.mxu0 0.0
      %2075 = vmatprep.subr.mxu0 0.0
      %2076 = vmatpush1.msra.mxu0 0.0
      %2077 = vmatprep.subr.mxu0 0.0
      %2078 = vmatpush1.msra.mxu0 0.0
      %2079 = vmatprep.subr.mxu0 0.0
      %2080 = vmatpush1.msra.mxu0 0.0
      %2081 = vmatprep.subr.mxu0 0.0
      %2082 = vmatpush1.msra.mxu0 0.0
      %2083 = vmatprep.subr.mxu0 0.0
      %2084 = vmatpush1.msra.mxu0 0.0
      %2085 = vmatprep.subr.mxu0 0.0
      %2086 = vmatpush1.msra.mxu0 0.0
      %2087 = vmatprep.subr.mxu0 0.0
      %2088 = vmatpush1.msra.mxu0 0.0
      %2089 = vmatprep.subr.mxu0 0.0
      %2090 = vmatpush1.msra.mxu0 0.0
      %2091 = vmatprep.subr.mxu0 0.0
      %2092 = vmatpush1.msra.mxu0 0.0
      %2093 = vmatprep.subr.mxu0 0.0
      %2094 = vmatpush1.msra.mxu0 0.0
      %2095 = vmatprep.subr.mxu0 0.0
      %2096 = vmatpush1.msra.mxu0 0.0
      %2097 = vmatprep.subr.mxu0 0.0
      %2098 = vmatpush1.msra.mxu0 0.0
      %2099 = vmatprep.mubr.f32.mxu0 0.0
      %2100 = vmatmul.mubr.f32.gmra.mrb[0].mxu0 %v2030
      %v2101 = vpop.f32.mrb[0].mxu0
      %v2102 = vadd.f32 0.0, %v2101
      %v2103 = vpop.f32.mrb[0].mxu0
      %2104 = vmatprep.mubr.f32.mxu0 0.0
      %2105 = vmatmul.mubr.f32.gmra.mrb[0].mxu0 %v2033
      %v2106 = vpop.f32.mrb[0].mxu0
      %v2107 = vadd.f32 0.0, %v2106
      %v2108 = vpop.f32.mrb[0].mxu0
      %2109 = vdwg.mxu0
      %2110 = vrot.lane.b32.xlu0 %v727, 48
      %v2111 = vpop.permute.xlu0 %2110
      %2112 = vrot.lane.b32.xlu0 %v732, 48
      %v2113 = vpop.permute.xlu0 %2112
      %v2117 = vsel %vm771, %v2017, 0
      %v2120 = vsel %vm771, %v2018, 0
      %2122 = vmatprep.subr.mxu0 0.0
      %2123 = vmatpush1.msra.mxu0 %v2111
      %2124 = vmatprep.subr.mxu0 0.0
      %2125 = vmatpush1.msra.mxu0 %v2113
      %2126 = vmatprep.subr.mxu0 0.0
      %2127 = vmatpush1.msra.mxu0 0.0
      %2128 = vmatprep.subr.mxu0 0.0
      %2129 = vmatpush1.msra.mxu0 0.0
      %2130 = vmatprep.subr.mxu0 0.0
      %2131 = vmatpush1.msra.mxu0 0.0
      %2132 = vmatprep.subr.mxu0 0.0
      %2133 = vmatpush1.msra.mxu0 0.0
      %2134 = vmatprep.subr.mxu0 0.0
      %2135 = vmatpush1.msra.mxu0 0.0
      %2136 = vmatprep.subr.mxu0 0.0
      %2137 = vmatpush1.msra.mxu0 0.0
      %2138 = vmatprep.subr.mxu0 0.0
      %2139 = vmatpush1.msra.mxu0 0.0
      %2140 = vmatprep.subr.mxu0 0.0
      %2141 = vmatpush1.msra.mxu0 0.0
      %2142 = vmatprep.subr.mxu0 0.0
      %2143 = vmatpush1.msra.mxu0 0.0
      %2144 = vmatprep.subr.mxu0 0.0
      %2145 = vmatpush1.msra.mxu0 0.0
      %2146 = vmatprep.subr.mxu0 0.0
      %2147 = vmatpush1.msra.mxu0 0.0
      %2148 = vmatprep.subr.mxu0 0.0
      %2149 = vmatpush1.msra.mxu0 0.0
      %2150 = vmatprep.subr.mxu0 0.0
      %2151 = vmatpush1.msra.mxu0 0.0
      %2152 = vmatprep.subr.mxu0 0.0
      %2153 = vmatpush1.msra.mxu0 0.0
      %2154 = vmatprep.subr.mxu0 0.0
      %2155 = vmatpush1.msra.mxu0 0.0
      %2156 = vmatprep.subr.mxu0 0.0
      %2157 = vmatpush1.msra.mxu0 0.0
      %2158 = vmatprep.subr.mxu0 0.0
      %2159 = vmatpush1.msra.mxu0 0.0
      %2160 = vmatprep.subr.mxu0 0.0
      %2161 = vmatpush1.msra.mxu0 0.0
      %2162 = vmatprep.subr.mxu0 0.0
      %2163 = vmatpush1.msra.mxu0 0.0
      %2164 = vmatprep.subr.mxu0 0.0
      %2165 = vmatpush1.msra.mxu0 0.0
      %2166 = vmatprep.subr.mxu0 0.0
      %2167 = vmatpush1.msra.mxu0 0.0
      %2168 = vmatprep.subr.mxu0 0.0
      %2169 = vmatpush1.msra.mxu0 0.0
      %2170 = vmatprep.subr.mxu0 0.0
      %2171 = vmatpush1.msra.mxu0 0.0
      %2172 = vmatprep.subr.mxu0 0.0
      %2173 = vmatpush1.msra.mxu0 0.0
      %2174 = vmatprep.subr.mxu0 0.0
      %2175 = vmatpush1.msra.mxu0 0.0
      %2176 = vmatprep.subr.mxu0 0.0
      %2177 = vmatpush1.msra.mxu0 0.0
      %2178 = vmatprep.subr.mxu0 0.0
      %2179 = vmatpush1.msra.mxu0 0.0
      %2180 = vmatprep.subr.mxu0 0.0
      %2181 = vmatpush1.msra.mxu0 0.0
      %2182 = vmatprep.subr.mxu0 0.0
      %2183 = vmatpush1.msra.mxu0 0.0
      %2184 = vmatprep.subr.mxu0 0.0
      %2185 = vmatpush1.msra.mxu0 0.0
      %2186 = vmatprep.mubr.f32.mxu0 0.0
      %2187 = vmatmul.mubr.f32.gmra.mrb[0].mxu0 %v2117
      %v2188 = vpop.f32.mrb[0].mxu0
      %v2189 = vadd.f32 0.0, %v2188
      %v2190 = vpop.f32.mrb[0].mxu0
      %2191 = vmatprep.mubr.f32.mxu0 0.0
      %2192 = vmatmul.mubr.f32.gmra.mrb[0].mxu0 %v2120
      %v2193 = vpop.f32.mrb[0].mxu0
      %v2194 = vadd.f32 0.0, %v2193
      %v2195 = vpop.f32.mrb[0].mxu0
      %2196 = vdwg.mxu0
      %2197 = vrot.lane.b32.xlu0 %v737, 48
      %v2198 = vpop.permute.xlu0 %2197
      %2199 = vrot.lane.b32.xlu0 %v742, 48
      %v2200 = vpop.permute.xlu0 %2199
      %v2204 = vsel %vm771, %v2019, 0
      %v2207 = vsel %vm771, %v2020, 0
      %2209 = vmatprep.subr.mxu0 0.0
      %2210 = vmatpush1.msra.mxu0 %v2198
      %2211 = vmatprep.subr.mxu0 0.0
      %2212 = vmatpush1.msra.mxu0 %v2200
      %2213 = vmatprep.subr.mxu0 0.0
      %2214 = vmatpush1.msra.mxu0 0.0
      %2215 = vmatprep.subr.mxu0 0.0
      %2216 = vmatpush1.msra.mxu0 0.0
      %2217 = vmatprep.subr.mxu0 0.0
      %2218 = vmatpush1.msra.mxu0 0.0
      %2219 = vmatprep.subr.mxu0 0.0
      %2220 = vmatpush1.msra.mxu0 0.0
      %2221 = vmatprep.subr.mxu0 0.0
      %2222 = vmatpush1.msra.mxu0 0.0
      %2223 = vmatprep.subr.mxu0 0.0
      %2224 = vmatpush1.msra.mxu0 0.0
      %2225 = vmatprep.subr.mxu0 0.0
      %2226 = vmatpush1.msra.mxu0 0.0
      %2227 = vmatprep.subr.mxu0 0.0
      %2228 = vmatpush1.msra.mxu0 0.0
      %2229 = vmatprep.subr.mxu0 0.0
      %2230 = vmatpush1.msra.mxu0 0.0
      %2231 = vmatprep.subr.mxu0 0.0
      %2232 = vmatpush1.msra.mxu0 0.0
      %2233 = vmatprep.subr.mxu0 0.0
      %2234 = vmatpush1.msra.mxu0 0.0
      %2235 = vmatprep.subr.mxu0 0.0
      %2236 = vmatpush1.msra.mxu0 0.0
      %2237 = vmatprep.subr.mxu0 0.0
      %2238 = vmatpush1.msra.mxu0 0.0
      %2239 = vmatprep.subr.mxu0 0.0
      %2240 = vmatpush1.msra.mxu0 0.0
      %2241 = vmatprep.subr.mxu0 0.0
      %2242 = vmatpush1.msra.mxu0 0.0
      %2243 = vmatprep.subr.mxu0 0.0
      %2244 = vmatpush1.msra.mxu0 0.0
      %2245 = vmatprep.subr.mxu0 0.0
      %2246 = vmatpush1.msra.mxu0 0.0
      %2247 = vmatprep.subr.mxu0 0.0
      %2248 = vmatpush1.msra.mxu0 0.0
      %2249 = vmatprep.subr.mxu0 0.0
      %2250 = vmatpush1.msra.mxu0 0.0
      %2251 = vmatprep.subr.mxu0 0.0
      %2252 = vmatpush1.msra.mxu0 0.0
      %2253 = vmatprep.subr.mxu0 0.0
      %2254 = vmatpush1.msra.mxu0 0.0
      %2255 = vmatprep.subr.mxu0 0.0
      %2256 = vmatpush1.msra.mxu0 0.0
      %2257 = vmatprep.subr.mxu0 0.0
      %2258 = vmatpush1.msra.mxu0 0.0
      %2259 = vmatprep.subr.mxu0 0.0
      %2260 = vmatpush1.msra.mxu0 0.0
      %2261 = vmatprep.subr.mxu0 0.0
      %2262 = vmatpush1.msra.mxu0 0.0
      %2263 = vmatprep.subr.mxu0 0.0
      %2264 = vmatpush1.msra.mxu0 0.0
      %2265 = vmatprep.subr.mxu0 0.0
      %2266 = vmatpush1.msra.mxu0 0.0
      %2267 = vmatprep.subr.mxu0 0.0
      %2268 = vmatpush1.msra.mxu0 0.0
      %2269 = vmatprep.subr.mxu0 0.0
      %2270 = vmatpush1.msra.mxu0 0.0
      %2271 = vmatprep.subr.mxu0 0.0
      %2272 = vmatpush1.msra.mxu0 0.0
      %2273 = vmatprep.mubr.f32.mxu0 0.0
      %2274 = vmatmul.mubr.f32.gmra.mrb[0].mxu0 %v2204
      %v2275 = vpop.f32.mrb[0].mxu0
      %v2276 = vadd.f32 0.0, %v2275
      %v2277 = vpop.f32.mrb[0].mxu0
      %2278 = vmatprep.mubr.f32.mxu0 0.0
      %2279 = vmatmul.mubr.f32.gmra.mrb[0].mxu0 %v2207
      %v2280 = vpop.f32.mrb[0].mxu0
      %v2281 = vadd.f32 0.0, %v2280
      %v2282 = vpop.f32.mrb[0].mxu0
      %2283 = vdwg.mxu0
      %2284 = vrot.lane.b32.xlu0 %v747, 48
      %v2285 = vpop.permute.xlu0 %2284
      %2286 = vrot.lane.b32.xlu0 %v752, 48
      %v2287 = vpop.permute.xlu0 %2286
      %v2291 = vsel %vm771, %v2021, 0
      %v2294 = vsel %vm771, %v2022, 0
      %2296 = vmatprep.subr.mxu0 0.0
      %2297 = vmatpush1.msra.mxu0 %v2285
      %2298 = vmatprep.subr.mxu0 0.0
      %2299 = vmatpush1.msra.mxu0 %v2287
      %2300 = vmatprep.subr.mxu0 0.0
      %2301 = vmatpush1.msra.mxu0 0.0
      %2302 = vmatprep.subr.mxu0 0.0
      %2303 = vmatpush1.msra.mxu0 0.0
      %2304 = vmatprep.subr.mxu0 0.0
      %2305 = vmatpush1.msra.mxu0 0.0
      %2306 = vmatprep.subr.mxu0 0.0
      %2307 = vmatpush1.msra.mxu0 0.0
      %2308 = vmatprep.subr.mxu0 0.0
      %2309 = vmatpush1.msra.mxu0 0.0
      %2310 = vmatprep.subr.mxu0 0.0
      %2311 = vmatpush1.msra.mxu0 0.0
      %2312 = vmatprep.subr.mxu0 0.0
      %2313 = vmatpush1.msra.mxu0 0.0
      %2314 = vmatprep.subr.mxu0 0.0
      %2315 = vmatpush1.msra.mxu0 0.0
      %2316 = vmatprep.subr.mxu0 0.0
      %2317 = vmatpush1.msra.mxu0 0.0
      %2318 = vmatprep.subr.mxu0 0.0
      %2319 = vmatpush1.msra.mxu0 0.0
      %2320 = vmatprep.subr.mxu0 0.0
      %2321 = vmatpush1.msra.mxu0 0.0
      %2322 = vmatprep.subr.mxu0 0.0
      %2323 = vmatpush1.msra.mxu0 0.0
      %2324 = vmatprep.subr.mxu0 0.0
      %2325 = vmatpush1.msra.mxu0 0.0
      %2326 = vmatprep.subr.mxu0 0.0
      %2327 = vmatpush1.msra.mxu0 0.0
      %2328 = vmatprep.subr.mxu0 0.0
      %2329 = vmatpush1.msra.mxu0 0.0
      %2330 = vmatprep.subr.mxu0 0.0
      %2331 = vmatpush1.msra.mxu0 0.0
      %2332 = vmatprep.subr.mxu0 0.0
      %2333 = vmatpush1.msra.mxu0 0.0
      %2334 = vmatprep.subr.mxu0 0.0
      %2335 = vmatpush1.msra.mxu0 0.0
      %2336 = vmatprep.subr.mxu0 0.0
      %2337 = vmatpush1.msra.mxu0 0.0
      %2338 = vmatprep.subr.mxu0 0.0
      %2339 = vmatpush1.msra.mxu0 0.0
      %2340 = vmatprep.subr.mxu0 0.0
      %2341 = vmatpush1.msra.mxu0 0.0
      %2342 = vmatprep.subr.mxu0 0.0
      %2343 = vmatpush1.msra.mxu0 0.0
      %2344 = vmatprep.subr.mxu0 0.0
      %2345 = vmatpush1.msra.mxu0 0.0
      %2346 = vmatprep.subr.mxu0 0.0
      %2347 = vmatpush1.msra.mxu0 0.0
      %2348 = vmatprep.subr.mxu0 0.0
      %2349 = vmatpush1.msra.mxu0 0.0
      %2350 = vmatprep.subr.mxu0 0.0
      %2351 = vmatpush1.msra.mxu0 0.0
      %2352 = vmatprep.subr.mxu0 0.0
      %2353 = vmatpush1.msra.mxu0 0.0
      %2354 = vmatprep.subr.mxu0 0.0
      %2355 = vmatpush1.msra.mxu0 0.0
      %2356 = vmatprep.subr.mxu0 0.0
      %2357 = vmatpush1.msra.mxu0 0.0
      %2358 = vmatprep.subr.mxu0 0.0
      %2359 = vmatpush1.msra.mxu0 0.0
      %2360 = vmatprep.mubr.f32.mxu0 0.0
      %2361 = vmatmul.mubr.f32.gmra.mrb[0].mxu0 %v2291
      %v2362 = vpop.f32.mrb[0].mxu0
      %v2363 = vadd.f32 0.0, %v2362
      %v2364 = vpop.f32.mrb[0].mxu0
      %2365 = vmatprep.mubr.f32.mxu0 0.0
      %2366 = vmatmul.mubr.f32.gmra.mrb[0].mxu0 %v2294
      %v2367 = vpop.f32.mrb[0].mxu0
      %v2368 = vadd.f32 0.0, %v2367
      %v2369 = vpop.f32.mrb[0].mxu0
      %2370 = vdwg.mxu0
      %v2371 = vld [vmem:[%s6 + $0x10] sm:$0xff]
      %v2372 = vld [vmem:[%s6 + $0x18] sm:$0xff]
      %v2374 = vsel %vm771, %v2102, 0
      %v2377 = vsel %vm771, %v2107, 0
      %v2380 = vsel %vm771, %v2189, 0
      %v2383 = vsel %vm771, %v2194, 0
      %v2386 = vsel %vm771, %v2276, 0
      %v2389 = vsel %vm771, %v2281, 0
      %v2392 = vsel %vm771, %v2363, 0
      %v2395 = vsel %vm771, %v2368, 0
      %2397 = vmatprep.subr.mxu0 0.0
      %2398 = vmatpush1.msra.mxu0 %v2371
      %2399 = vmatprep.subr.mxu0 0.0
      %2400 = vmatpush1.msra.mxu0 %v2372
      %2401 = vmatprep.subr.mxu0 0.0
      %2402 = vmatpush1.msra.mxu0 0.0
      %2403 = vmatprep.subr.mxu0 0.0
      %2404 = vmatpush1.msra.mxu0 0.0
      %2405 = vmatprep.subr.mxu0 0.0
      %2406 = vmatpush1.msra.mxu0 0.0
      %2407 = vmatprep.subr.mxu0 0.0
      %2408 = vmatpush1.msra.mxu0 0.0
      %2409 = vmatprep.subr.mxu0 0.0
      %2410 = vmatpush1.msra.mxu0 0.0
      %2411 = vmatprep.subr.mxu0 0.0
      %2412 = vmatpush1.msra.mxu0 0.0
      %2413 = vmatprep.subr.mxu0 0.0
      %2414 = vmatpush1.msra.mxu0 0.0
      %2415 = vmatprep.subr.mxu0 0.0
      %2416 = vmatpush1.msra.mxu0 0.0
      %2417 = vmatprep.subr.mxu0 0.0
      %2418 = vmatpush1.msra.mxu0 0.0
      %2419 = vmatprep.subr.mxu0 0.0
      %2420 = vmatpush1.msra.mxu0 0.0
      %2421 = vmatprep.subr.mxu0 0.0
      %2422 = vmatpush1.msra.mxu0 0.0
      %2423 = vmatprep.subr.mxu0 0.0
      %2424 = vmatpush1.msra.mxu0 0.0
      %2425 = vmatprep.subr.mxu0 0.0
      %2426 = vmatpush1.msra.mxu0 0.0
      %2427 = vmatprep.subr.mxu0 0.0
      %2428 = vmatpush1.msra.mxu0 0.0
      %2429 = vmatprep.subr.mxu0 0.0
      %2430 = vmatpush1.msra.mxu0 0.0
      %2431 = vmatprep.subr.mxu0 0.0
      %2432 = vmatpush1.msra.mxu0 0.0
      %2433 = vmatprep.subr.mxu0 0.0
      %2434 = vmatpush1.msra.mxu0 0.0
      %2435 = vmatprep.subr.mxu0 0.0
      %2436 = vmatpush1.msra.mxu0 0.0
      %2437 = vmatprep.subr.mxu0 0.0
      %2438 = vmatpush1.msra.mxu0 0.0
      %2439 = vmatprep.subr.mxu0 0.0
      %2440 = vmatpush1.msra.mxu0 0.0
      %2441 = vmatprep.subr.mxu0 0.0
      %2442 = vmatpush1.msra.mxu0 0.0
      %2443 = vmatprep.subr.mxu0 0.0
      %2444 = vmatpush1.msra.mxu0 0.0
      %2445 = vmatprep.subr.mxu0 0.0
      %2446 = vmatpush1.msra.mxu0 0.0
      %2447 = vmatprep.subr.mxu0 0.0
      %2448 = vmatpush1.msra.mxu0 0.0
      %2449 = vmatprep.subr.mxu0 0.0
      %2450 = vmatpush1.msra.mxu0 0.0
      %2451 = vmatprep.subr.mxu0 0.0
      %2452 = vmatpush1.msra.mxu0 0.0
      %2453 = vmatprep.subr.mxu0 0.0
      %2454 = vmatpush1.msra.mxu0 0.0
      %2455 = vmatprep.subr.mxu0 0.0
      %2456 = vmatpush1.msra.mxu0 0.0
      %2457 = vmatprep.subr.mxu0 0.0
      %2458 = vmatpush1.msra.mxu0 0.0
      %2459 = vmatprep.subr.mxu0 0.0
      %2460 = vmatpush1.msra.mxu0 0.0
      %2461 = vmatprep.mubr.f32.mxu0 0.0
      %2462 = vmatmul.mubr.f32.gmra.mrb[0].mxu0 %v2374
      %v2463 = vpop.f32.mrb[0].mxu0
      %v2464 = vadd.f32 0.0, %v2463
      %v2465 = vpop.f32.mrb[0].mxu0
      %2466 = vmatprep.mubr.f32.mxu0 0.0
      %2467 = vmatmul.mubr.f32.gmra.mrb[0].mxu0 %v2377
      %v2468 = vpop.f32.mrb[0].mxu0
      %v2469 = vadd.f32 0.0, %v2468
      %v2470 = vpop.f32.mrb[0].mxu0
      %2471 = vmatprep.mubr.f32.mxu0 0.0
      %2472 = vmatmul.mubr.f32.gmra.mrb[0].mxu0 %v2380
      %v2473 = vpop.f32.mrb[0].mxu0
      %v2474 = vadd.f32 0.0, %v2473
      %v2475 = vpop.f32.mrb[0].mxu0
      %2476 = vmatprep.mubr.f32.mxu0 0.0
      %2477 = vmatmul.mubr.f32.gmra.mrb[0].mxu0 %v2383
      %v2478 = vpop.f32.mrb[0].mxu0
      %v2479 = vadd.f32 0.0, %v2478
      %v2480 = vpop.f32.mrb[0].mxu0
      %2481 = vmatprep.mubr.f32.mxu0 0.0
      %2482 = vmatmul.mubr.f32.gmra.mrb[0].mxu0 %v2386
      %v2483 = vpop.f32.mrb[0].mxu0
      %v2484 = vadd.f32 0.0, %v2483
      %v2485 = vpop.f32.mrb[0].mxu0
      %2486 = vmatprep.mubr.f32.mxu0 0.0
      %2487 = vmatmul.mubr.f32.gmra.mrb[0].mxu0 %v2389
      %v2488 = vpop.f32.mrb[0].mxu0
      %v2489 = vadd.f32 0.0, %v2488
      %v2490 = vpop.f32.mrb[0].mxu0
      %2491 = vmatprep.mubr.f32.mxu0 0.0
      %2492 = vmatmul.mubr.f32.gmra.mrb[0].mxu0 %v2392
      %v2493 = vpop.f32.mrb[0].mxu0
      %v2494 = vadd.f32 0.0, %v2493
      %v2495 = vpop.f32.mrb[0].mxu0
      %2496 = vmatprep.mubr.f32.mxu0 0.0
      %2497 = vmatmul.mubr.f32.gmra.mrb[0].mxu0 %v2395
      %v2498 = vpop.f32.mrb[0].mxu0
      %v2499 = vadd.f32 0.0, %v2498
      %v2500 = vpop.f32.mrb[0].mxu0
      %2501 = vdwg.mxu0
      %v2503 = vsel %vm771, %v1297, 0
      %v2506 = vsel %vm771, %v1302, 0
      %v2509 = vsel %vm771, %v1384, 0
      %v2512 = vsel %vm771, %v1389, 0
      %v2515 = vsel %vm771, %v1471, 0
      %v2518 = vsel %vm771, %v1476, 0
      %v2521 = vsel %vm771, %v1558, 0
      %v2524 = vsel %vm771, %v1563, 0
      %2526 = vmatprep.subr.mxu0 0.0
      %2527 = vmatpush1.msra.mxu0 %v1566
      %2528 = vmatprep.subr.mxu0 0.0
      %2529 = vmatpush1.msra.mxu0 %v1567
      %2530 = vmatprep.subr.mxu0 0.0
      %2531 = vmatpush1.msra.mxu0 0.0
      %2532 = vmatprep.subr.mxu0 0.0
      %2533 = vmatpush1.msra.mxu0 0.0
      %2534 = vmatprep.subr.mxu0 0.0
      %2535 = vmatpush1.msra.mxu0 0.0
      %2536 = vmatprep.subr.mxu0 0.0
      %2537 = vmatpush1.msra.mxu0 0.0
      %2538 = vmatprep.subr.mxu0 0.0
      %2539 = vmatpush1.msra.mxu0 0.0
      %2540 = vmatprep.subr.mxu0 0.0
      %2541 = vmatpush1.msra.mxu0 0.0
      %2542 = vmatprep.subr.mxu0 0.0
      %2543 = vmatpush1.msra.mxu0 0.0
      %2544 = vmatprep.subr.mxu0 0.0
      %2545 = vmatpush1.msra.mxu0 0.0
      %2546 = vmatprep.subr.mxu0 0.0
      %2547 = vmatpush1.msra.mxu0 0.0
      %2548 = vmatprep.subr.mxu0 0.0
      %2549 = vmatpush1.msra.mxu0 0.0
      %2550 = vmatprep.subr.mxu0 0.0
      %2551 = vmatpush1.msra.mxu0 0.0
      %2552 = vmatprep.subr.mxu0 0.0
      %2553 = vmatpush1.msra.mxu0 0.0
      %2554 = vmatprep.subr.mxu0 0.0
      %2555 = vmatpush1.msra.mxu0 0.0
      %2556 = vmatprep.subr.mxu0 0.0
      %2557 = vmatpush1.msra.mxu0 0.0
      %2558 = vmatprep.subr.mxu0 0.0
      %2559 = vmatpush1.msra.mxu0 0.0
      %2560 = vmatprep.subr.mxu0 0.0
      %2561 = vmatpush1.msra.mxu0 0.0
      %2562 = vmatprep.subr.mxu0 0.0
      %2563 = vmatpush1.msra.mxu0 0.0
      %2564 = vmatprep.subr.mxu0 0.0
      %2565 = vmatpush1.msra.mxu0 0.0
      %2566 = vmatprep.subr.mxu0 0.0
      %2567 = vmatpush1.msra.mxu0 0.0
      %2568 = vmatprep.subr.mxu0 0.0
      %2569 = vmatpush1.msra.mxu0 0.0
      %2570 = vmatprep.subr.mxu0 0.0
      %2571 = vmatpush1.msra.mxu0 0.0
      %2572 = vmatprep.subr.mxu0 0.0
      %2573 = vmatpush1.msra.mxu0 0.0
      %2574 = vmatprep.subr.mxu0 0.0
      %2575 = vmatpush1.msra.mxu0 0.0
      %2576 = vmatprep.subr.mxu0 0.0
      %2577 = vmatpush1.msra.mxu0 0.0
      %2578 = vmatprep.subr.mxu0 0.0
      %2579 = vmatpush1.msra.mxu0 0.0
      %2580 = vmatprep.subr.mxu0 0.0
      %2581 = vmatpush1.msra.mxu0 0.0
      %2582 = vmatprep.subr.mxu0 0.0
      %2583 = vmatpush1.msra.mxu0 0.0
      %2584 = vmatprep.subr.mxu0 0.0
      %2585 = vmatpush1.msra.mxu0 0.0
      %2586 = vmatprep.subr.mxu0 0.0
      %2587 = vmatpush1.msra.mxu0 0.0
      %2588 = vmatprep.subr.mxu0 0.0
      %2589 = vmatpush1.msra.mxu0 0.0
      %2590 = vmatprep.mubr.f32.mxu0 0.0
      %2591 = vmatmul.mubr.f32.gmra.mrb[0].mxu0 %v2503
      %v2592 = vpop.f32.mrb[0].mxu0
      %v2593 = vadd.f32 %v2464, %v2592
      %v2594 = vpop.f32.mrb[0].mxu0
      %2595 = vmatprep.mubr.f32.mxu0 0.0
      %2596 = vmatmul.mubr.f32.gmra.mrb[0].mxu0 %v2506
      %v2597 = vpop.f32.mrb[0].mxu0
      %v2598 = vadd.f32 %v2469, %v2597
      %v2599 = vpop.f32.mrb[0].mxu0
      %2600 = vmatprep.mubr.f32.mxu0 0.0
      %2601 = vmatmul.mubr.f32.gmra.mrb[0].mxu0 %v2509
      %v2602 = vpop.f32.mrb[0].mxu0
      %v2603 = vadd.f32 %v2474, %v2602
      %v2604 = vpop.f32.mrb[0].mxu0
      %2605 = vmatprep.mubr.f32.mxu0 0.0
      %2606 = vmatmul.mubr.f32.gmra.mrb[0].mxu0 %v2512
      %v2607 = vpop.f32.mrb[0].mxu0
      %v2608 = vadd.f32 %v2479, %v2607
      %v2609 = vpop.f32.mrb[0].mxu0
      %2610 = vmatprep.mubr.f32.mxu0 0.0
      %2611 = vmatmul.mubr.f32.gmra.mrb[0].mxu0 %v2515
      %v2612 = vpop.f32.mrb[0].mxu0
      %v2613 = vadd.f32 %v2484, %v2612
      %v2614 = vpop.f32.mrb[0].mxu0
      %2615 = vmatprep.mubr.f32.mxu0 0.0
      %2616 = vmatmul.mubr.f32.gmra.mrb[0].mxu0 %v2518
      %v2617 = vpop.f32.mrb[0].mxu0
      %v2618 = vadd.f32 %v2489, %v2617
      %v2619 = vpop.f32.mrb[0].mxu0
      %2620 = vmatprep.mubr.f32.mxu0 0.0
      %2621 = vmatmul.mubr.f32.gmra.mrb[0].mxu0 %v2521
      %v2622 = vpop.f32.mrb[0].mxu0
      %v2623 = vadd.f32 %v2494, %v2622
      %v2624 = vpop.f32.mrb[0].mxu0
      %2625 = vmatprep.mubr.f32.mxu0 0.0
      %2626 = vmatmul.mubr.f32.gmra.mrb[0].mxu0 %v2524
      %v2627 = vpop.f32.mrb[0].mxu0
      %v2628 = vadd.f32 %v2499, %v2627
      %v2629 = vpop.f32.mrb[0].mxu0
      %2630 = vdwg.mxu0
      %v2631 = vadd.f32 %v471, %v2593
      %v2632 = vadd.f32 %v472, %v2598
      %v2633 = vadd.f32 %v473, %v2603
      %v2634 = vadd.f32 %v474, %v2608
      %v2635 = vadd.f32 %v475, %v2613
      %v2636 = vadd.f32 %v476, %v2618
      %v2637 = vadd.f32 %v477, %v2623
      %v2638 = vadd.f32 %v478, %v2628
      %v2639 = vld [vmem:[%s7] sm:$0x1]
      %v2641 = vlaneseq
      %v2642 = vshrl.u32 %v2641, 7
      %v2643 = vsub.s32 0, %v2642
      %v2644 = vrot.slane %v2639, %v2643
      %v2646 = vadd.f32 %v2631, %v2644
      %v2647 = vadd.f32 %v2632, %v2644
      %v2648 = vadd.f32 %v2633, %v2644
      %v2649 = vadd.f32 %v2634, %v2644
      %v2650 = vadd.f32 %v2635, %v2644
      %v2651 = vadd.f32 %v2636, %v2644
      %v2652 = vadd.f32 %v2637, %v2644
      %v2653 = vadd.f32 %v2638, %v2644
      %v2654 = vsel %vm479, %v2646, 0.0
      %2655 = vadd.xlane.f32.xlu0 %v2654
      %v2656 = vpop.xlane.xlu0 %2655
      %v2657 = vsel %vm479, %v2647, 0.0
      %2658 = vadd.xlane.f32.xlu0 %v2657
      %v2659 = vpop.xlane.xlu0 %2658
      %v2660 = vsel %vm479, %v2648, 0.0
      %2661 = vadd.xlane.f32.xlu0 %v2660
      %v2662 = vpop.xlane.xlu0 %2661
      %v2663 = vsel %vm479, %v2649, 0.0
      %2664 = vadd.xlane.f32.xlu0 %v2663
      %v2665 = vpop.xlane.xlu0 %2664
      %v2666 = vsel %vm479, %v2650, 0.0
      %2667 = vadd.xlane.f32.xlu0 %v2666
      %v2668 = vpop.xlane.xlu0 %2667
      %v2669 = vsel %vm479, %v2651, 0.0
      %2670 = vadd.xlane.f32.xlu0 %v2669
      %v2671 = vpop.xlane.xlu0 %2670
      %v2672 = vsel %vm479, %v2652, 0.0
      %2673 = vadd.xlane.f32.xlu0 %v2672
      %v2674 = vpop.xlane.xlu0 %2673
      %v2675 = vsel %vm479, %v2653, 0.0
      %2676 = vadd.xlane.f32.xlu0 %v2675
      %v2677 = vpop.xlane.xlu0 %2676
      %v2678 = vmul.f32 %v2656, %v504
      %v2679 = vmul.f32 %v2659, %v504
      %v2680 = vmul.f32 %v2662, %v504
      %v2681 = vmul.f32 %v2665, %v504
      %v2682 = vmul.f32 %v2668, %v504
      %v2683 = vmul.f32 %v2671, %v504
      %v2684 = vmul.f32 %v2674, %v504
      %v2685 = vmul.f32 %v2677, %v504
      %v2686 = vsub.f32 %v2646, %v2678
      %v2687 = vsub.f32 %v2647, %v2679
      %v2688 = vsub.f32 %v2648, %v2680
      %v2689 = vsub.f32 %v2649, %v2681
      %v2690 = vsub.f32 %v2650, %v2682
      %v2691 = vsub.f32 %v2651, %v2683
      %v2692 = vsub.f32 %v2652, %v2684
      %v2693 = vsub.f32 %v2653, %v2685
      %v2694 = vmul.f32 %v2686, %v2686
      %v2695 = vmul.f32 %v2687, %v2687
      %v2696 = vmul.f32 %v2688, %v2688
      %v2697 = vmul.f32 %v2689, %v2689
      %v2698 = vmul.f32 %v2690, %v2690
      %v2699 = vmul.f32 %v2691, %v2691
      %v2700 = vmul.f32 %v2692, %v2692
      %v2701 = vmul.f32 %v2693, %v2693
      %v2702 = vsel %vm479, %v2694, 0.0
      %2703 = vadd.xlane.f32.xlu0 %v2702
      %v2704 = vpop.xlane.xlu0 %2703
      %v2705 = vsel %vm479, %v2695, 0.0
      %2706 = vadd.xlane.f32.xlu0 %v2705
      %v2707 = vpop.xlane.xlu0 %2706
      %v2708 = vsel %vm479, %v2696, 0.0
      %2709 = vadd.xlane.f32.xlu0 %v2708
      %v2710 = vpop.xlane.xlu0 %2709
      %v2711 = vsel %vm479, %v2697, 0.0
      %2712 = vadd.xlane.f32.xlu0 %v2711
      %v2713 = vpop.xlane.xlu0 %2712
      %v2714 = vsel %vm479, %v2698, 0.0
      %2715 = vadd.xlane.f32.xlu0 %v2714
      %v2716 = vpop.xlane.xlu0 %2715
      %v2717 = vsel %vm479, %v2699, 0.0
      %2718 = vadd.xlane.f32.xlu0 %v2717
      %v2719 = vpop.xlane.xlu0 %2718
      %v2720 = vsel %vm479, %v2700, 0.0
      %2721 = vadd.xlane.f32.xlu0 %v2720
      %v2722 = vpop.xlane.xlu0 %2721
      %v2723 = vsel %vm479, %v2701, 0.0
      %2724 = vadd.xlane.f32.xlu0 %v2723
      %v2725 = vpop.xlane.xlu0 %2724
      %v2726 = vmul.f32 %v2704, %v504
      %v2727 = vmul.f32 %v2707, %v504
      %v2728 = vmul.f32 %v2710, %v504
      %v2729 = vmul.f32 %v2713, %v504
      %v2730 = vmul.f32 %v2716, %v504
      %v2731 = vmul.f32 %v2719, %v504
      %v2732 = vmul.f32 %v2722, %v504
      %v2733 = vmul.f32 %v2725, %v504
      %v2734 = vadd.f32 %v2726, 1e-05
      %v2735 = vadd.f32 %v2727, 1e-05
      %v2736 = vadd.f32 %v2728, 1e-05
      %v2737 = vadd.f32 %v2729, 1e-05
      %v2738 = vadd.f32 %v2730, 1e-05
      %v2739 = vadd.f32 %v2731, 1e-05
      %v2740 = vadd.f32 %v2732, 1e-05
      %v2741 = vadd.f32 %v2733, 1e-05
      %v2742 = vrsqrt.pop %v2734
      %v2743 = vrsqrt.pop %v2735
      %v2744 = vrsqrt.pop %v2736
      %v2745 = vrsqrt.pop %v2737
      %v2746 = vrsqrt.pop %v2738
      %v2747 = vrsqrt.pop %v2739
      %v2748 = vrsqrt.pop %v2740
      %v2749 = vrsqrt.pop %v2741
      %v2750 = vmul.f32 %v2686, %v2742
      %v2751 = vmul.f32 %v2687, %v2743
      %v2752 = vmul.f32 %v2688, %v2744
      %v2753 = vmul.f32 %v2689, %v2745
      %v2754 = vmul.f32 %v2690, %v2746
      %v2755 = vmul.f32 %v2691, %v2747
      %v2756 = vmul.f32 %v2692, %v2748
      %v2757 = vmul.f32 %v2693, %v2749
      %v2758 = vld [vmem:[%s8] sm:$0x1]
      %v2760 = vlaneseq
      %v2761 = vshrl.u32 %v2760, 7
      %v2762 = vsub.s32 0, %v2761
      %v2763 = vrot.slane %v2758, %v2762
      %v2765 = vmul.f32 %v2750, %v2763
      %v2766 = vmul.f32 %v2751, %v2763
      %v2767 = vmul.f32 %v2752, %v2763
      %v2768 = vmul.f32 %v2753, %v2763
      %v2769 = vmul.f32 %v2754, %v2763
      %v2770 = vmul.f32 %v2755, %v2763
      %v2771 = vmul.f32 %v2756, %v2763
      %v2772 = vmul.f32 %v2757, %v2763
      %v2773 = vld [vmem:[%s9] sm:$0x1]
      %v2775 = vlaneseq
      %v2776 = vshrl.u32 %v2775, 7
      %v2777 = vsub.s32 0, %v2776
      %v2778 = vrot.slane %v2773, %v2777
      %v2780 = vadd.f32 %v2765, %v2778
      %v2781 = vadd.f32 %v2766, %v2778
      %v2782 = vadd.f32 %v2767, %v2778
      %v2783 = vadd.f32 %v2768, %v2778
      %v2784 = vadd.f32 %v2769, %v2778
      %v2785 = vadd.f32 %v2770, %v2778
      %v2786 = vadd.f32 %v2771, %v2778
      %v2787 = vadd.f32 %v2772, %v2778
      %v2788 = vld [vmem:[%s10] sm:$0xff]
      %v2789 = vld [vmem:[%s10 + $0x8] sm:$0xff]
      %v2790 = vld [vmem:[%s10 + $0x10] sm:$0xff]
      %v2791 = vld [vmem:[%s10 + $0x18] sm:$0xff]
      %v2792 = vld [vmem:[%s11] sm:$0x1]
      %v2794 = vlaneseq
      %v2795 = vshrl.u32 %v2794, 7
      %v2796 = vsub.s32 0, %v2795
      %v2797 = vrot.slane %v2792, %v2796
      %v2800 = vsel %vm479, %v2780, 0
      %v2803 = vsel %vm479, %v2781, 0
      %v2806 = vsel %vm479, %v2782, 0
      %v2809 = vsel %vm479, %v2783, 0
      %v2812 = vsel %vm479, %v2784, 0
      %v2815 = vsel %vm479, %v2785, 0
      %v2818 = vsel %vm479, %v2786, 0
      %v2821 = vsel %vm479, %v2787, 0
      %2823 = vmatprep.subr.mxu0 0.0
      %2824 = vmatpush1.msra.mxu0 %v2788
      %2825 = vmatprep.subr.mxu0 0.0
      %2826 = vmatpush1.msra.mxu0 %v2789
      %2827 = vmatprep.subr.mxu0 0.0
      %2828 = vmatpush1.msra.mxu0 %v2790
      %2829 = vmatprep.subr.mxu0 0.0
      %2830 = vmatpush1.msra.mxu0 %v2791
      %2831 = vmatprep.subr.mxu0 0.0
      %2832 = vmatpush1.msra.mxu0 0.0
      %2833 = vmatprep.subr.mxu0 0.0
      %2834 = vmatpush1.msra.mxu0 0.0
      %2835 = vmatprep.subr.mxu0 0.0
      %2836 = vmatpush1.msra.mxu0 0.0
      %2837 = vmatprep.subr.mxu0 0.0
      %2838 = vmatpush1.msra.mxu0 0.0
      %2839 = vmatprep.subr.mxu0 0.0
      %2840 = vmatpush1.msra.mxu0 0.0
      %2841 = vmatprep.subr.mxu0 0.0
      %2842 = vmatpush1.msra.mxu0 0.0
      %2843 = vmatprep.subr.mxu0 0.0
      %2844 = vmatpush1.msra.mxu0 0.0
      %2845 = vmatprep.subr.mxu0 0.0
      %2846 = vmatpush1.msra.mxu0 0.0
      %2847 = vmatprep.subr.mxu0 0.0
      %2848 = vmatpush1.msra.mxu0 0.0
      %2849 = vmatprep.subr.mxu0 0.0
      %2850 = vmatpush1.msra.mxu0 0.0
      %2851 = vmatprep.subr.mxu0 0.0
      %2852 = vmatpush1.msra.mxu0 0.0
      %2853 = vmatprep.subr.mxu0 0.0
      %2854 = vmatpush1.msra.mxu0 0.0
      %2855 = vmatprep.subr.mxu0 0.0
      %2856 = vmatpush1.msra.mxu0 0.0
      %2857 = vmatprep.subr.mxu0 0.0
      %2858 = vmatpush1.msra.mxu0 0.0
      %2859 = vmatprep.subr.mxu0 0.0
      %2860 = vmatpush1.msra.mxu0 0.0
      %2861 = vmatprep.subr.mxu0 0.0
      %2862 = vmatpush1.msra.mxu0 0.0
      %2863 = vmatprep.subr.mxu0 0.0
      %2864 = vmatpush1.msra.mxu0 0.0
      %2865 = vmatprep.subr.mxu0 0.0
      %2866 = vmatpush1.msra.mxu0 0.0
      %2867 = vmatprep.subr.mxu0 0.0
      %2868 = vmatpush1.msra.mxu0 0.0
      %2869 = vmatprep.subr.mxu0 0.0
      %2870 = vmatpush1.msra.mxu0 0.0
      %2871 = vmatprep.subr.mxu0 0.0
      %2872 = vmatpush1.msra.mxu0 0.0
      %2873 = vmatprep.subr.mxu0 0.0
      %2874 = vmatpush1.msra.mxu0 0.0
      %2875 = vmatprep.subr.mxu0 0.0
      %2876 = vmatpush1.msra.mxu0 0.0
      %2877 = vmatprep.subr.mxu0 0.0
      %2878 = vmatpush1.msra.mxu0 0.0
      %2879 = vmatprep.subr.mxu0 0.0
      %2880 = vmatpush1.msra.mxu0 0.0
      %2881 = vmatprep.subr.mxu0 0.0
      %2882 = vmatpush1.msra.mxu0 0.0
      %2883 = vmatprep.subr.mxu0 0.0
      %2884 = vmatpush1.msra.mxu0 0.0
      %2885 = vmatprep.subr.mxu0 0.0
      %2886 = vmatpush1.msra.mxu0 0.0
      %2887 = vmatprep.mubr.f32.mxu0 0.0
      %2888 = vmatmul.mubr.f32.gmra.mrb[0].mxu0 %v2800
      %v2889 = vpop.f32.mrb[0].mxu0
      %v2890 = vadd.f32 %v2797, %v2889
      %v2891 = vpop.f32.mrb[0].mxu0
      %2892 = vmatprep.mubr.f32.mxu0 0.0
      %2893 = vmatmul.mubr.f32.gmra.mrb[0].mxu0 %v2803
      %v2894 = vpop.f32.mrb[0].mxu0
      %v2895 = vadd.f32 %v2797, %v2894
      %v2896 = vpop.f32.mrb[0].mxu0
      %2897 = vmatprep.mubr.f32.mxu0 0.0
      %2898 = vmatmul.mubr.f32.gmra.mrb[0].mxu0 %v2806
      %v2899 = vpop.f32.mrb[0].mxu0
      %v2900 = vadd.f32 %v2797, %v2899
      %v2901 = vpop.f32.mrb[0].mxu0
      %2902 = vmatprep.mubr.f32.mxu0 0.0
      %2903 = vmatmul.mubr.f32.gmra.mrb[0].mxu0 %v2809
      %v2904 = vpop.f32.mrb[0].mxu0
      %v2905 = vadd.f32 %v2797, %v2904
      %v2906 = vpop.f32.mrb[0].mxu0
      %2907 = vmatprep.mubr.f32.mxu0 0.0
      %2908 = vmatmul.mubr.f32.gmra.mrb[0].mxu0 %v2812
      %v2909 = vpop.f32.mrb[0].mxu0
      %v2910 = vadd.f32 %v2797, %v2909
      %v2911 = vpop.f32.mrb[0].mxu0
      %2912 = vmatprep.mubr.f32.mxu0 0.0
      %2913 = vmatmul.mubr.f32.gmra.mrb[0].mxu0 %v2815
      %v2914 = vpop.f32.mrb[0].mxu0
      %v2915 = vadd.f32 %v2797, %v2914
      %v2916 = vpop.f32.mrb[0].mxu0
      %2917 = vmatprep.mubr.f32.mxu0 0.0
      %2918 = vmatmul.mubr.f32.gmra.mrb[0].mxu0 %v2818
      %v2919 = vpop.f32.mrb[0].mxu0
      %v2920 = vadd.f32 %v2797, %v2919
      %v2921 = vpop.f32.mrb[0].mxu0
      %2922 = vmatprep.mubr.f32.mxu0 0.0
      %2923 = vmatmul.mubr.f32.gmra.mrb[0].mxu0 %v2821
      %v2924 = vpop.f32.mrb[0].mxu0
      %v2925 = vadd.f32 %v2797, %v2924
      %v2926 = vpop.f32.mrb[0].mxu0
      %2927 = vdwg.mxu0
      %v2928 = vmul.f32 %v2890, 0.5
      %v2929 = vmul.f32 %v2895, 0.5
      %v2930 = vmul.f32 %v2900, 0.5
      %v2931 = vmul.f32 %v2905, 0.5
      %v2932 = vmul.f32 %v2910, 0.5
      %v2933 = vmul.f32 %v2915, 0.5
      %v2934 = vmul.f32 %v2920, 0.5
      %v2935 = vmul.f32 %v2925, 0.5
      %v2936 = vmul.f32 %v2890, 0.70710677
      %v2937 = vmul.f32 %v2895, 0.70710677
      %v2938 = vmul.f32 %v2900, 0.70710677
      %v2939 = vmul.f32 %v2905, 0.70710677
      %v2940 = vmul.f32 %v2910, 0.70710677
      %v2941 = vmul.f32 %v2915, 0.70710677
      %v2942 = vmul.f32 %v2920, 0.70710677
      %v2943 = vmul.f32 %v2925, 0.70710677
      %v2944 = verf.f32.pop %v2936
      %v2945 = verf.f32.pop %v2937
      %v2946 = verf.f32.pop %v2938
      %v2947 = verf.f32.pop %v2939
      %v2948 = verf.f32.pop %v2940
      %v2949 = verf.f32.pop %v2941
      %v2950 = verf.f32.pop %v2942
      %v2951 = verf.f32.pop %v2943
      %v2952 = vadd.f32 %v2944, 1.0
      %v2953 = vadd.f32 %v2945, 1.0
      %v2954 = vadd.f32 %v2946, 1.0
      %v2955 = vadd.f32 %v2947, 1.0
      %v2956 = vadd.f32 %v2948, 1.0
      %v2957 = vadd.f32 %v2949, 1.0
      %v2958 = vadd.f32 %v2950, 1.0
      %v2959 = vadd.f32 %v2951, 1.0
      %v2960 = vmul.f32 %v2928, %v2952
      %v2961 = vmul.f32 %v2929, %v2953
      %v2962 = vmul.f32 %v2930, %v2954
      %v2963 = vmul.f32 %v2931, %v2955
      %v2964 = vmul.f32 %v2932, %v2956
      %v2965 = vmul.f32 %v2933, %v2957
      %v2966 = vmul.f32 %v2934, %v2958
      %v2967 = vmul.f32 %v2935, %v2959
      %v2968 = vld [vmem:[%s12] sm:$0xff]
      %v2969 = vld [vmem:[%s12 + $0x8] sm:$0xff]
      %v2970 = vld [vmem:[%s12 + $0x10] sm:$0xff]
      %v2971 = vld [vmem:[%s12 + $0x18] sm:$0xff]
      %v2972 = vld [vmem:[%s12 + $0x20] sm:$0xff]
      %v2973 = vld [vmem:[%s12 + $0x28] sm:$0xff]
      %v2974 = vld [vmem:[%s12 + $0x30] sm:$0xff]
      %v2975 = vld [vmem:[%s12 + $0x38] sm:$0xff]
      %v2976 = vld [vmem:[%s12 + $0x40] sm:$0xff]
      %v2977 = vld [vmem:[%s12 + $0x48] sm:$0xff]
      %v2978 = vld [vmem:[%s12 + $0x50] sm:$0xff]
      %v2979 = vld [vmem:[%s12 + $0x58] sm:$0xff]
      %v2980 = vld [vmem:[%s12 + $0x60] sm:$0xff]
      %v2981 = vld [vmem:[%s12 + $0x68] sm:$0xff]
      %v2982 = vld [vmem:[%s12 + $0x70] sm:$0xff]
      %v2983 = vld [vmem:[%s12 + $0x78] sm:$0xff]
      %v2984 = vld [vmem:[%s13] sm:$0x1]
      %v2986 = vlaneseq
      %v2987 = vshrl.u32 %v2986, 7
      %v2988 = vsub.s32 0, %v2987
      %v2989 = vrot.slane %v2984, %v2988
      %2991 = vmatprep.subr.mxu0 0.0
      %2992 = vmatpush1.msra.mxu0 %v2968
      %2993 = vmatprep.subr.mxu0 0.0
      %2994 = vmatpush1.msra.mxu0 %v2969
      %2995 = vmatprep.subr.mxu0 0.0
      %2996 = vmatpush1.msra.mxu0 %v2970
      %2997 = vmatprep.subr.mxu0 0.0
      %2998 = vmatpush1.msra.mxu0 %v2971
      %2999 = vmatprep.subr.mxu0 0.0
      %3000 = vmatpush1.msra.mxu0 %v2972
      %3001 = vmatprep.subr.mxu0 0.0
      %3002 = vmatpush1.msra.mxu0 %v2973
      %3003 = vmatprep.subr.mxu0 0.0
      %3004 = vmatpush1.msra.mxu0 %v2974
      %3005 = vmatprep.subr.mxu0 0.0
      %3006 = vmatpush1.msra.mxu0 %v2975
      %3007 = vmatprep.subr.mxu0 0.0
      %3008 = vmatpush1.msra.mxu0 %v2976
      %3009 = vmatprep.subr.mxu0 0.0
      %3010 = vmatpush1.msra.mxu0 %v2977
      %3011 = vmatprep.subr.mxu0 0.0
      %3012 = vmatpush1.msra.mxu0 %v2978
      %3013 = vmatprep.subr.mxu0 0.0
      %3014 = vmatpush1.msra.mxu0 %v2979
      %3015 = vmatprep.subr.mxu0 0.0
      %3016 = vmatpush1.msra.mxu0 %v2980
      %3017 = vmatprep.subr.mxu0 0.0
      %3018 = vmatpush1.msra.mxu0 %v2981
      %3019 = vmatprep.subr.mxu0 0.0
      %3020 = vmatpush1.msra.mxu0 %v2982
      %3021 = vmatprep.subr.mxu0 0.0
      %3022 = vmatpush1.msra.mxu0 %v2983
      %3023 = vmatprep.subr.mxu0 0.0
      %3024 = vmatpush1.msra.mxu0 0.0
      %3025 = vmatprep.subr.mxu0 0.0
      %3026 = vmatpush1.msra.mxu0 0.0
      %3027 = vmatprep.subr.mxu0 0.0
      %3028 = vmatpush1.msra.mxu0 0.0
      %3029 = vmatprep.subr.mxu0 0.0
      %3030 = vmatpush1.msra.mxu0 0.0
      %3031 = vmatprep.subr.mxu0 0.0
      %3032 = vmatpush1.msra.mxu0 0.0
      %3033 = vmatprep.subr.mxu0 0.0
      %3034 = vmatpush1.msra.mxu0 0.0
      %3035 = vmatprep.subr.mxu0 0.0
      %3036 = vmatpush1.msra.mxu0 0.0
      %3037 = vmatprep.subr.mxu0 0.0
      %3038 = vmatpush1.msra.mxu0 0.0
      %3039 = vmatprep.subr.mxu0 0.0
      %3040 = vmatpush1.msra.mxu0 0.0
      %3041 = vmatprep.subr.mxu0 0.0
      %3042 = vmatpush1.msra.mxu0 0.0
      %3043 = vmatprep.subr.mxu0 0.0
      %3044 = vmatpush1.msra.mxu0 0.0
      %3045 = vmatprep.subr.mxu0 0.0
      %3046 = vmatpush1.msra.mxu0 0.0
      %3047 = vmatprep.subr.mxu0 0.0
      %3048 = vmatpush1.msra.mxu0 0.0
      %3049 = vmatprep.subr.mxu0 0.0
      %3050 = vmatpush1.msra.mxu0 0.0
      %3051 = vmatprep.subr.mxu0 0.0
      %3052 = vmatpush1.msra.mxu0 0.0
      %3053 = vmatprep.subr.mxu0 0.0
      %3054 = vmatpush1.msra.mxu0 0.0
      %3055 = vmatprep.mubr.f32.mxu0 0.0
      %3056 = vmatmul.mubr.f32.gmra.mrb[0].mxu0 %v2960
      %v3057 = vpop.f32.mrb[0].mxu0
      %v3058 = vadd.f32 %v2989, %v3057
      %v3059 = vpop.f32.mrb[0].mxu0
      %3060 = vmatprep.mubr.f32.mxu0 0.0
      %3061 = vmatmul.mubr.f32.gmra.mrb[0].mxu0 %v2961
      %v3062 = vpop.f32.mrb[0].mxu0
      %v3063 = vadd.f32 %v2989, %v3062
      %v3064 = vpop.f32.mrb[0].mxu0
      %3065 = vmatprep.mubr.f32.mxu0 0.0
      %3066 = vmatmul.mubr.f32.gmra.mrb[0].mxu0 %v2962
      %v3067 = vpop.f32.mrb[0].mxu0
      %v3068 = vadd.f32 %v2989, %v3067
      %v3069 = vpop.f32.mrb[0].mxu0
      %3070 = vmatprep.mubr.f32.mxu0 0.0
      %3071 = vmatmul.mubr.f32.gmra.mrb[0].mxu0 %v2963
      %v3072 = vpop.f32.mrb[0].mxu0
      %v3073 = vadd.f32 %v2989, %v3072
      %v3074 = vpop.f32.mrb[0].mxu0
      %3075 = vmatprep.mubr.f32.mxu0 0.0
      %3076 = vmatmul.mubr.f32.gmra.mrb[0].mxu0 %v2964
      %v3077 = vpop.f32.mrb[0].mxu0
      %v3078 = vadd.f32 %v2989, %v3077
      %v3079 = vpop.f32.mrb[0].mxu0
      %3080 = vmatprep.mubr.f32.mxu0 0.0
      %3081 = vmatmul.mubr.f32.gmra.mrb[0].mxu0 %v2965
      %v3082 = vpop.f32.mrb[0].mxu0
      %v3083 = vadd.f32 %v2989, %v3082
      %v3084 = vpop.f32.mrb[0].mxu0
      %3085 = vmatprep.mubr.f32.mxu0 0.0
      %3086 = vmatmul.mubr.f32.gmra.mrb[0].mxu0 %v2966
      %v3087 = vpop.f32.mrb[0].mxu0
      %v3088 = vadd.f32 %v2989, %v3087
      %v3089 = vpop.f32.mrb[0].mxu0
      %3090 = vmatprep.mubr.f32.mxu0 0.0
      %3091 = vmatmul.mubr.f32.gmra.mrb[0].mxu0 %v2967
      %v3092 = vpop.f32.mrb[0].mxu0
      %v3093 = vadd.f32 %v2989, %v3092
      %v3094 = vpop.f32.mrb[0].mxu0
      %3095 = vdwg.mxu0
      %v3096 = vadd.f32 %v2646, %v3058
      %v3097 = vadd.f32 %v2647, %v3063
      %v3098 = vadd.f32 %v2648, %v3068
      %v3099 = vadd.f32 %v2649, %v3073
      %v3100 = vadd.f32 %v2650, %v3078
      %v3101 = vadd.f32 %v2651, %v3083
      %v3102 = vadd.f32 %v2652, %v3088
      %v3103 = vadd.f32 %v2653, %v3093
      %3104 = vst.msk [vmem:[%s469] sm:$0xff] %vm479, %v3096
      %3105 = vst.msk [vmem:[%s469 + $0x8] sm:$0xff] %vm479, %v3097
      %3106 = vst.msk [vmem:[%s469 + $0x10] sm:$0xff] %vm479, %v3098
      %3107 = vst.msk [vmem:[%s469 + $0x18] sm:$0xff] %vm479, %v3099
      %3108 = vst.msk [vmem:[%s469 + $0x20] sm:$0xff] %vm479, %v3100
      %3109 = vst.msk [vmem:[%s469 + $0x28] sm:$0xff] %vm479, %v3101
      %3110 = vst.msk [vmem:[%s469 + $0x30] sm:$0xff] %vm479, %v3102
      %3111 = vst.msk [vmem:[%s469 + $0x38] sm:$0xff] %vm479, %v3103
      %s3112 = smul.u32 8, %s25
      %p3113 = scmp.lt.s32.totalorder %s3112, 15
      %s3114 = scalar_select %p3113, %s3112, 15
      %s3115 = smul.addr %s3114, 8
      %s3116 = scalar_lea.vmem %s14, %s3115
      // Predicated region
      $region77: #{tpu_custom_call.1} parent=75 // pred_check
        %p3117 = pneg %p342
      $region78: #{tpu_custom_call.1} parent=75 // pred_check_branch
        %3119 = sbr.rel (%p3117) target = $region80
      $region79: #{tpu_custom_call.1} parent=75 // pred_region
        %s3120 = smul.u32 8, %s25
      $region80: #{tpu_custom_call.1} parent=75 // pred_fallthru
        _
    $region76: #{tpu_custom_call.1} parent=5 // pred_fallthru
      _
    %p3121 = scmp.le.s32.totalorder 2, %s20
    // Predicated region
    $region81: #{tpu_custom_call.1} parent=5 // pred_check
      %p3122 = pneg %p3121
    $region82: #{tpu_custom_call.1} parent=5 // pred_check_branch
      %3124 = sbr.rel (%p3122) target = $region84
    $region83: #{tpu_custom_call.1} parent=5 // pred_region
      %s3125 = ssub.s32 %s20, 2
      // Predicated region
      $region85: #{tpu_custom_call.1} parent=83 // pred_check
        %p3126 = pneg %p348
      $region86: #{tpu_custom_call.1} parent=83 // pred_check_branch
        %3128 = sbr.rel (%p3126) target = $region88
      $region87: #{tpu_custom_call.1} parent=83 // pred_region
        %s3129 = smul.u32 8, %s26
        %p3130 = scmp.lt.s32.totalorder %s3129, 15
        %s3131 = scalar_select %p3130, %s3129, 15
        %s3132 = smul.addr %s3131, 8
        %s3133 = scalar_lea.vmem %s14, %s3132
      $region88: #{tpu_custom_call.1} parent=83 // pred_fallthru
        _
    $region84: #{tpu_custom_call.1} parent=5 // pred_fallthru
      _
  $region6: #{tpu_custom_call.1} parent=0 // loop_footer
    %s24 = sadd.s32 1, %s20
  $region7: #{tpu_custom_call.1} parent=0 // loop_footer_branch
    %19 = sbr.rel target = $region3
  $region8: #{tpu_custom_call.1} parent=0 // loop_exit
    _

</llo_original>
